<compile_context>
chip_gen: v6e
topology: v6e:2x2x1
jax: 0.10.0
libtpu: 0.0.40
codegen_flags: <defaults>
</compile_context>

<pallas_src>
import jax
import jax.numpy as jnp
from jax import lax
from jax.experimental import pallas as pl
from jax.experimental.pallas import tpu as pltpu

# ---------------- model hyper-parameters (small, deterministic) --------------
B = 2            # batch (graphs)
N = 8            # nodes per graph
F = 16           # input node-feature dim
D = 32           # hidden dim
H = 4            # attention heads
DH = D // H      # head dim
FFN = 64         # feed-forward dim
E = 12           # edges per graph
ED = 4           # edge-feature dim
P = 5            # max path length
MAX_DEG = 8      # max node degree (centrality table size)

# packed weight-slab row offsets (bf16 slab, all 16-row aligned)
R_QKV = 0                    # (D, 3D)
R_F1 = R_QKV + D             # (D, FFN)
R_IN = R_F1 + D              # (F, D)
R_O = R_IN + F               # (D, D)
R_F2 = R_O + D               # (FFN, D)
R_W_END = R_F2 + FFN         # 176 rows total
W_SLAB_COLS = 3 * D          # 96

# f32 vector-param slab rows
V_BQKV, V_BF1, V_BIN, V_BO, V_BF2, V_G1, V_B1, V_G2, V_B2, V_DEG = range(10)
V_ROWS = V_DEG + MAX_DEG     # deg_emb occupies rows V_DEG .. V_DEG+MAX_DEG

# in-kernel bias one-hot width: edge part (E * P * N) + spatial part ((P+1) * N)
GB_EDGE = E * P * N          # 480
GB_ALL = GB_EDGE + (P + 1) * N   # 528


# ============================ fused Pallas kernel ============================
def _graphormer_kernel(x_ref, deg_ref, ep_ref, np_ref, tb_ref, w_ref, v_ref,
                       o_ref, o_scr):
    """Whole Graphormer forward on a (B*N, D) slab, single invocation."""
    f32 = jnp.float32
    bf16 = jnp.bfloat16

    def layernorm(v, g, b):
        mu = jnp.mean(v, axis=-1, keepdims=True)
        var = jnp.mean((v - mu) ** 2, axis=-1, keepdims=True)
        return (v - mu) * lax.rsqrt(var + 1e-5) * g + b

    # ---- static views into the two packed parameter slabs (zero-cost) -------
    w_qkv = w_ref[R_QKV:R_QKV + D, 0:3 * D]      # bf16, Q cols pre-scaled
    w_f1 = w_ref[R_F1:R_F1 + D, 0:FFN]
    w_in = w_ref[R_IN:R_IN + F, 0:D]
    w_o = w_ref[R_O:R_O + D, 0:D]
    w_f2 = w_ref[R_F2:R_F2 + FFN, 0:D]
    b_qkv = v_ref[V_BQKV:V_BQKV + 1, 0:3 * D]    # f32 rows, Q part pre-scaled
    b_f1 = v_ref[V_BF1:V_BF1 + 1, 0:FFN]
    b_in = v_ref[V_BIN:V_BIN + 1, 0:D]
    b_o = v_ref[V_BO:V_BO + 1, 0:D]
    b_f2 = v_ref[V_BF2:V_BF2 + 1, 0:D]
    g1 = v_ref[V_G1:V_G1 + 1, 0:D]
    bt1 = v_ref[V_B1:V_B1 + 1, 0:D]
    g2 = v_ref[V_G2:V_G2 + 1, 0:D]
    bt2 = v_ref[V_B2:V_B2 + 1, 0:D]
    deg_e = v_ref[V_DEG:V_DEG + MAX_DEG, 0:D]

    # ---- module 1: node feature embedding + centrality encoding -------------
    # degree lookup as one-hot @ table (no XLA gather)
    dclip = jnp.clip(deg_ref[...], 0, MAX_DEG - 1)                   # (B*N,1)
    iota_deg = lax.broadcasted_iota(jnp.int32, (B * N, MAX_DEG), 1)
    deg_oh = (iota_deg == dclip).astype(f32)                         # (B*N,MAX_DEG)
    h = jnp.dot(x_ref[...].astype(bf16), w_in, preferred_element_type=f32)
    h = h + b_in + jnp.dot(deg_oh, deg_e, preferred_element_type=f32)  # (B*N,D)

    # ---- module 3a: pre-LN multi-head attention ------------------------------
    hn = layernorm(h, g1, bt1)
    qkv = jnp.dot(hn.astype(bf16), w_qkv, preferred_element_type=f32) + b_qkv

    for b in range(B):
        # --- attention bias built in-kernel (one-hot masks @ bias table) -----
        ep_b = ep_ref[b]                                   # (N, P*N) int32
        msk = (ep_b >= 0).astype(f32)
        cnt = msk[:, 0:N]
        for p in range(1, P):
            cnt = cnt + msk[:, p * N:(p + 1) * N]
        invd = 1.0 / jnp.maximum(cnt, 1.0)                 # (N, N)
        wgt = msk * jnp.concatenate([invd] * P, axis=1)    # (N, P*N)
        g_parts = [(ep_b == j).astype(f32) * wgt for j in range(E)]

        np_b = np_ref[b]                                   # (N, P*N) int32
        npv = (np_b >= 0).astype(jnp.int32)
        plen = npv[:, 0:N]
        for p in range(1, P):
            plen = plen + npv[:, p * N:(p + 1) * N]        # (N, N) path lengths
        sp_parts = [(plen == l).astype(f32) for l in range(P + 1)]

        g_all = jnp.concatenate(g_parts + sp_parts, axis=1).astype(bf16)  # (N,528)
        bias_b = jnp.dot(g_all, tb_ref[b], preferred_element_type=f32)    # (N,H*N)

        # --- per-head attention; Q already scaled by 1/sqrt(DH) ---------------
        rs = slice(b * N, (b + 1) * N)
        for hh in range(H):
            q = qkv[rs, hh * DH:(hh + 1) * DH]
            k = qkv[rs, D + hh * DH:D + (hh + 1) * DH]
            v = qkv[rs, 2 * D + hh * DH:2 * D + (hh + 1) * DH]
            s = jnp.einsum("qd,kd->qk", q, k, preferred_element_type=f32)
            s = s + bias_b[:, hh * N:(hh + 1) * N]
            mx = jnp.max(s, axis=-1, keepdims=True)
            pexp = jnp.exp(s - mx)
            pexp = pexp * pl.reciprocal(jnp.sum(pexp, axis=-1, keepdims=True),
                                        approx=True)
            # direct placement into the preallocated per-head slot (no concat)
            o_scr[rs, hh * DH:(hh + 1) * DH] = jnp.dot(
                pexp, v, preferred_element_type=f32)

    # fused out-projection: one (B*N,D)@(D,D) dot
    attn = jnp.dot(o_scr[...].astype(bf16), w_o, preferred_element_type=f32)
    h = h + attn + b_o

    # ---- module 3b: pre-LN feed-forward (ReLU) -------------------------------
    hn2 = layernorm(h, g2, bt2)
    f = jnp.dot(hn2.astype(bf16), w_f1, preferred_element_type=f32) + b_f1
    f = jnp.maximum(f, 0.0)
    f = jnp.dot(f.astype(bf16), w_f2, preferred_element_type=f32) + b_f2

    o_ref[...] = (h + f).astype(o_ref.dtype)


def fused_encoder(x2d, deg2d, ep_all, np_all, tb, wslab, vslab):
    """One pallas_call, no grid: every operand is a full VMEM-resident block."""
    return pl.pallas_call(
        _graphormer_kernel,
        out_shape=jax.ShapeDtypeStruct((B * N, D), jnp.float32),
        scratch_shapes=[pltpu.VMEM((B * N, D), jnp.float32)],
    )(x2d, deg2d, ep_all, np_all, tb, wslab, vslab)


# =========================== parameter initialisation ========================
def kaiming_normal(key, shape):
    # kaiming_normal_(nonlinearity='relu'): std = sqrt(2 / fan_in)
    fan_in = shape[0]
    return jax.random.normal(key, shape, jnp.float32) * jnp.sqrt(2.0 / fan_in)


def init_params(key):
    ks = jax.random.split(key, 12)
    p = {}
    # node encoder (nn.Linear -> kaiming, bias 0.01)
    p["w_in"] = kaiming_normal(ks[0], (F, D))
    p["b_in"] = jnp.full((D,), 0.01, jnp.float32)
    # centrality (degree) embedding
    p["deg_emb"] = jax.random.normal(ks[1], (MAX_DEG, D), jnp.float32) * 0.02
    # spatial encoding table: (path length 0..P) -> per-head bias
    p["spatial_table"] = jax.random.normal(ks[2], (P + 1, H), jnp.float32) * 0.02
    # edge encoding: per path-position, per edge-feature, per-head weight
    p["edge_weight"] = jax.random.normal(ks[3], (P, ED, H), jnp.float32) * 0.02
    # encoder layer (all nn.Linear -> kaiming, bias 0.01)
    p["w_qkv"] = kaiming_normal(ks[4], (D, 3 * D))
    p["b_qkv"] = jnp.full((3 * D,), 0.01, jnp.float32)
    p["w_o"] = kaiming_normal(ks[5], (D, D))
    p["b_o"] = jnp.full((D,), 0.01, jnp.float32)
    p["w_f1"] = kaiming_normal(ks[6], (D, FFN))
    p["b_f1"] = jnp.full((FFN,), 0.01, jnp.float32)
    p["w_f2"] = kaiming_normal(ks[7], (FFN, D))
    p["b_f2"] = jnp.full((D,), 0.01, jnp.float32)
    # layer norms
    p["ln1_g"] = jnp.ones((D,), jnp.float32)
    p["ln1_b"] = jnp.zeros((D,), jnp.float32)
    p["ln2_g"] = jnp.ones((D,), jnp.float32)
    p["ln2_b"] = jnp.zeros((D,), jnp.float32)
    return p


def prepare_params(p):
    """One-time layout prep (outside jit): two packed slabs + spatial table."""
    scale = 1.0 / (DH ** 0.5)
    # pre-scale Q weights/bias so the kernel never multiplies by `scale`
    w_qkv = p["w_qkv"].at[:, :D].multiply(scale)
    b_qkv = p["b_qkv"].at[:D].multiply(scale)

    # bf16 matmul-weight slab (one DMA)
    wslab = jnp.zeros((R_W_END, W_SLAB_COLS), jnp.float32)
    wslab = wslab.at[R_QKV:R_QKV + D, 0:3 * D].set(w_qkv)
    wslab = wslab.at[R_F1:R_F1 + D, 0:FFN].set(p["w_f1"])
    wslab = wslab.at[R_IN:R_IN + F, 0:D].set(p["w_in"])
    wslab = wslab.at[R_O:R_O + D, 0:D].set(p["w_o"])
    wslab = wslab.at[R_F2:R_F2 + FFN, 0:D].set(p["w_f2"])

    # f32 bias / LayerNorm / degree-table slab (one DMA)
    vslab = jnp.zeros((V_ROWS, W_SLAB_COLS), jnp.float32)
    vslab = vslab.at[V_BQKV, 0:3 * D].set(b_qkv)
    vslab = vslab.at[V_BF1, 0:FFN].set(p["b_f1"])
    vslab = vslab.at[V_BIN, 0:D].set(p["b_in"])
    vslab = vslab.at[V_BO, 0:D].set(p["b_o"])
    vslab = vslab.at[V_BF2, 0:D].set(p["b_f2"])
    vslab = vslab.at[V_G1, 0:D].set(p["ln1_g"])
    vslab = vslab.at[V_B1, 0:D].set(p["ln1_b"])
    vslab = vslab.at[V_G2, 0:D].set(p["ln2_g"])
    vslab = vslab.at[V_B2, 0:D].set(p["ln2_b"])
    vslab = vslab.at[V_DEG:V_DEG + MAX_DEG, 0:D].set(p["deg_emb"])

    # spatial-bias lookup rows, expanded block-diagonally so the kernel's
    # one-hot dot lands directly in the (row=b*N+n, lane=h*N+m) layout
    eye_n = jnp.eye(N, dtype=jnp.float32)
    t_sp = jnp.einsum("lh,mk->lmhk", p["spatial_table"],
                      eye_n).reshape((P + 1) * N, H * N)

    return {"wslab": wslab.astype(jnp.bfloat16),
            "vslab": vslab,
            "t_sp": t_sp,
            "edge_weight": p["edge_weight"]}


# ============================= forward pass ==================================
def graphormer_forward(params, x, degrees, edge_attr, node_paths, edge_paths):
    """Returns node embeddings of shape (B, N, D)."""
    # Runtime per-batch bias table (dense einsums only -- no gathers, no
    # (B,H,N,N) bias materialisation; all gather-like work is one-hot dots
    # inside the Pallas kernel).
    eye_n = jnp.eye(N, dtype=jnp.float32)
    mjp = jnp.einsum("bje,peh->bjph", edge_attr, params["edge_weight"])
    t_edge = jnp.einsum("bjph,mk->bjpmhk", mjp,
                        eye_n).reshape(B, GB_EDGE, H * N)
    t_sp = jnp.broadcast_to(params["t_sp"][None], (B, (P + 1) * N, H * N))
    tb = jnp.concatenate([t_edge, t_sp], axis=1).astype(jnp.bfloat16)

    # kernel-friendly integer path layouts (pure reshapes/transposes, tiny)
    x2d = x.reshape(B * N, F)
    deg2d = degrees.reshape(B * N, 1).astype(jnp.int32)
    ep_all = edge_paths.transpose(0, 1, 3, 2).reshape(B, N, P * N).astype(jnp.int32)
    np_all = node_paths.transpose(0, 1, 3, 2).reshape(B, N, P * N).astype(jnp.int32)

    # ---- the whole encoder layer: ONE fused Pallas kernel -------------------
    # TODO(synk): dropout layers (enable_dropout MC hook) are identity here.
    h = fused_encoder(x2d, deg2d, ep_all, np_all, tb,
                      params["wslab"], params["vslab"])
    return h.reshape(B, N, D)


# ================================== main =====================================
if __name__ == "__main__":
    root = jax.random.PRNGKey(0)
    k_par, k_x, k_deg, k_ea, k_np, k_ep = jax.random.split(root, 6)

    params = prepare_params(init_params(k_par))

    x = jax.random.normal(k_x, (B, N, F), jnp.float32)
    degrees = jax.random.randint(k_deg, (B, N), 0, MAX_DEG, jnp.int32)
    edge_attr = jax.random.normal(k_ea, (B, E, ED), jnp.float32)
    node_paths = jax.random.randint(k_np, (B, N, N, P), -1, N, jnp.int32)
    edge_paths = jax.random.randint(k_ep, (B, N, N, P), -1, E, jnp.int32)

    out = jax.jit(graphormer_forward)(params, x, degrees, edge_attr,
                                      node_paths, edge_paths)
    jax.block_until_ready(out)

    assert out.shape == (B, N, D)
    assert jnp.all(jnp.isfinite(out))
    print("KERNEL_OK")
</pallas_src>

<mosaic_0001>
module attributes {stable_mosaic.version = 11 : i64} {
  func.func @_graphormer_kernel(%arg0: memref<16x16xf32, #tpu.memory_space<vmem>>, %arg1: memref<16x1xi32, #tpu.memory_space<vmem>>, %arg2: memref<2x8x40xi32, #tpu.memory_space<vmem>>, %arg3: memref<2x8x40xi32, #tpu.memory_space<vmem>>, %arg4: memref<2x528x32xbf16, #tpu.memory_space<vmem>>, %arg5: memref<176x96xbf16, #tpu.memory_space<vmem>>, %arg6: memref<17x96xf32, #tpu.memory_space<vmem>>, %arg7: memref<16x32xf32, #tpu.memory_space<vmem>>, %arg8: memref<16x32xf32, #tpu.memory_space<vmem>>) attributes {dimension_semantics = [], scalar_prefetch = 0 : i64, scratch_operands = 1 : i64, tpu.core_type = #tpu.core_type<tc>} {
    %c0 = arith.constant 0 : index
    %c0_0 = arith.constant 0 : index
    %0 = vector.load %arg5[%c0, %c0_0] : memref<176x96xbf16, #tpu.memory_space<vmem>>, vector<32x96xbf16>
    %c32 = arith.constant 32 : index
    %c0_1 = arith.constant 0 : index
    %1 = vector.load %arg5[%c32, %c0_1] : memref<176x96xbf16, #tpu.memory_space<vmem>>, vector<32x64xbf16>
    %c64 = arith.constant 64 : index
    %c0_2 = arith.constant 0 : index
    %2 = vector.load %arg5[%c64, %c0_2] : memref<176x96xbf16, #tpu.memory_space<vmem>>, vector<16x32xbf16>
    %c80 = arith.constant 80 : index
    %c0_3 = arith.constant 0 : index
    %3 = vector.load %arg5[%c80, %c0_3] : memref<176x96xbf16, #tpu.memory_space<vmem>>, vector<32x32xbf16>
    %c112 = arith.constant 112 : index
    %c0_4 = arith.constant 0 : index
    %4 = vector.load %arg5[%c112, %c0_4] : memref<176x96xbf16, #tpu.memory_space<vmem>>, vector<64x32xbf16>
    %c0_5 = arith.constant 0 : index
    %c0_6 = arith.constant 0 : index
    %5 = vector.load %arg6[%c0_5, %c0_6] : memref<17x96xf32, #tpu.memory_space<vmem>>, vector<1x96xf32>
    %c1 = arith.constant 1 : index
    %c0_7 = arith.constant 0 : index
    %6 = vector.load %arg6[%c1, %c0_7] : memref<17x96xf32, #tpu.memory_space<vmem>>, vector<1x64xf32>
    %c2 = arith.constant 2 : index
    %c0_8 = arith.constant 0 : index
    %7 = vector.load %arg6[%c2, %c0_8] : memref<17x96xf32, #tpu.memory_space<vmem>>, vector<1x32xf32>
    %c3 = arith.constant 3 : index
    %c0_9 = arith.constant 0 : index
    %8 = vector.load %arg6[%c3, %c0_9] : memref<17x96xf32, #tpu.memory_space<vmem>>, vector<1x32xf32>
    %c4 = arith.constant 4 : index
    %c0_10 = arith.constant 0 : index
    %9 = vector.load %arg6[%c4, %c0_10] : memref<17x96xf32, #tpu.memory_space<vmem>>, vector<1x32xf32>
    %c5 = arith.constant 5 : index
    %c0_11 = arith.constant 0 : index
    %10 = vector.load %arg6[%c5, %c0_11] : memref<17x96xf32, #tpu.memory_space<vmem>>, vector<1x32xf32>
    %c6 = arith.constant 6 : index
    %c0_12 = arith.constant 0 : index
    %11 = vector.load %arg6[%c6, %c0_12] : memref<17x96xf32, #tpu.memory_space<vmem>>, vector<1x32xf32>
    %c7 = arith.constant 7 : index
    %c0_13 = arith.constant 0 : index
    %12 = vector.load %arg6[%c7, %c0_13] : memref<17x96xf32, #tpu.memory_space<vmem>>, vector<1x32xf32>
    %c8 = arith.constant 8 : index
    %c0_14 = arith.constant 0 : index
    %13 = vector.load %arg6[%c8, %c0_14] : memref<17x96xf32, #tpu.memory_space<vmem>>, vector<1x32xf32>
    %c9 = arith.constant 9 : index
    %c0_15 = arith.constant 0 : index
    %14 = vector.load %arg6[%c9, %c0_15] : memref<17x96xf32, #tpu.memory_space<vmem>>, vector<8x32xf32>
    %c0_16 = arith.constant 0 : index
    %c0_17 = arith.constant 0 : index
    %15 = vector.load %arg1[%c0_16, %c0_17] : memref<16x1xi32, #tpu.memory_space<vmem>>, vector<16x1xi32>
    %c0_i32 = arith.constant 0 : i32
    %c7_i32 = arith.constant 7 : i32
    %16 = vector.broadcast %c0_i32 : i32 to vector<16x1xi32>
    %17 = arith.maxsi %16, %15 : vector<16x1xi32>
    %18 = vector.broadcast %c7_i32 : i32 to vector<16x1xi32>
    %19 = arith.minsi %18, %17 : vector<16x1xi32>
    %20 = tpu.iota {dimensions = array<i32: 1>} : vector<16x8xi32>
    %21 = vector.broadcast %19 : vector<16x1xi32> to vector<16x8xi32>
    %22 = arith.cmpi eq, %20, %21 : vector<16x8xi32>
    %23 = arith.extui %22 : vector<16x8xi1> to vector<16x8xi32>
    %24 = arith.sitofp %23 : vector<16x8xi32> to vector<16x8xf32>
    %c0_18 = arith.constant 0 : index
    %c0_19 = arith.constant 0 : index
    %25 = vector.load %arg0[%c0_18, %c0_19] : memref<16x16xf32, #tpu.memory_space<vmem>>, vector<16x16xf32>
    %26 = arith.truncf %25 : vector<16x16xf32> to vector<16x16xbf16>
    %cst = arith.constant dense<0.000000e+00> : vector<16x32xf32>
    %27 = tpu.matmul %26, %2, %cst {dimension_numbers = #tpu.dot_dimension_numbers<[1], [0], [0], [1], [0, 0, 1, 1], [], []>} : vector<16x16xbf16>, vector<16x32xbf16>, vector<16x32xf32> -> vector<16x32xf32>
    %28 = vector.broadcast %7 : vector<1x32xf32> to vector<16x32xf32>
    %29 = arith.addf %27, %28 : vector<16x32xf32>
    %cst_20 = arith.constant dense<0.000000e+00> : vector<16x32xf32>
    %30 = tpu.matmul %24, %14, %cst_20 {dimension_numbers = #tpu.dot_dimension_numbers<[1], [0], [0], [1], [0, 0, 1, 1], [], []>} : vector<16x8xf32>, vector<8x32xf32>, vector<16x32xf32> -> vector<16x32xf32>
    %31 = arith.addf %29, %30 : vector<16x32xf32>
    %cst_21 = arith.constant dense<0.000000e+00> : vector<16xf32>
    %32 = vector.multi_reduction <add>, %31, %cst_21 [1] : vector<16x32xf32> to vector<16xf32>
    %33 = vector.shape_cast %32 : vector<16xf32> to vector<16x1xf32>
    %cst_22 = arith.constant 3.200000e+01 : f32
    %34 = vector.broadcast %cst_22 : f32 to vector<16x1xf32>
    %35 = arith.divf %33, %34 : vector<16x1xf32>
    %36 = vector.broadcast %35 : vector<16x1xf32> to vector<16x32xf32>
    %37 = arith.subf %31, %36 : vector<16x32xf32>
    %38 = arith.mulf %37, %37 : vector<16x32xf32>
    %cst_23 = arith.constant dense<0.000000e+00> : vector<16xf32>
    %39 = vector.multi_reduction <add>, %38, %cst_23 [1] : vector<16x32xf32> to vector<16xf32>
    %40 = vector.shape_cast %39 : vector<16xf32> to vector<16x1xf32>
    %cst_24 = arith.constant 3.200000e+01 : f32
    %41 = vector.broadcast %cst_24 : f32 to vector<16x1xf32>
    %42 = arith.divf %40, %41 : vector<16x1xf32>
    %43 = vector.broadcast %35 : vector<16x1xf32> to vector<16x32xf32>
    %44 = arith.subf %31, %43 : vector<16x32xf32>
    %cst_25 = arith.constant 9.99999974E-6 : f32
    %45 = vector.broadcast %cst_25 : f32 to vector<16x1xf32>
    %46 = arith.addf %42, %45 : vector<16x1xf32>
    %47 = math.rsqrt %46 : vector<16x1xf32>
    %48 = vector.broadcast %47 : vector<16x1xf32> to vector<16x32xf32>
    %49 = arith.mulf %44, %48 : vector<16x32xf32>
    %50 = vector.broadcast %10 : vector<1x32xf32> to vector<16x32xf32>
    %51 = arith.mulf %49, %50 : vector<16x32xf32>
    %52 = vector.broadcast %11 : vector<1x32xf32> to vector<16x32xf32>
    %53 = arith.addf %51, %52 : vector<16x32xf32>
    %54 = arith.truncf %53 : vector<16x32xf32> to vector<16x32xbf16>
    %cst_26 = arith.constant dense<0.000000e+00> : vector<16x96xf32>
    %55 = tpu.matmul %54, %0, %cst_26 {dimension_numbers = #tpu.dot_dimension_numbers<[1], [0], [0], [1], [0, 0, 1, 1], [], []>} : vector<16x32xbf16>, vector<32x96xbf16>, vector<16x96xf32> -> vector<16x96xf32>
    %56 = vector.broadcast %5 : vector<1x96xf32> to vector<16x96xf32>
    %57 = arith.addf %55, %56 : vector<16x96xf32>
    %c0_27 = arith.constant 0 : index
    %c0_28 = arith.constant 0 : index
    %c0_29 = arith.constant 0 : index
    %58 = vector.load %arg2[%c0_27, %c0_28, %c0_29] : memref<2x8x40xi32, #tpu.memory_space<vmem>>, vector<1x8x40xi32>
    %59 = vector.shape_cast %58 : vector<1x8x40xi32> to vector<8x40xi32>
    %c0_i32_30 = arith.constant 0 : i32
    %60 = vector.broadcast %c0_i32_30 : i32 to vector<8x40xi32>
    %61 = arith.cmpi sge, %59, %60 : vector<8x40xi32>
    %62 = arith.extui %61 : vector<8x40xi1> to vector<8x40xi32>
    %63 = arith.sitofp %62 : vector<8x40xi32> to vector<8x40xf32>
    %64 = vector.extract_strided_slice %63 {offsets = [0, 0], sizes = [8, 8], strides = [1, 1]} : vector<8x40xf32> to vector<8x8xf32>
    %65 = vector.extract_strided_slice %63 {offsets = [0, 8], sizes = [8, 8], strides = [1, 1]} : vector<8x40xf32> to vector<8x8xf32>
    %66 = arith.addf %64, %65 : vector<8x8xf32>
    %67 = vector.extract_strided_slice %63 {offsets = [0, 16], sizes = [8, 8], strides = [1, 1]} : vector<8x40xf32> to vector<8x8xf32>
    %68 = arith.addf %66, %67 : vector<8x8xf32>
    %69 = vector.extract_strided_slice %63 {offsets = [0, 24], sizes = [8, 8], strides = [1, 1]} : vector<8x40xf32> to vector<8x8xf32>
    %70 = arith.addf %68, %69 : vector<8x8xf32>
    %71 = vector.extract_strided_slice %63 {offsets = [0, 32], sizes = [8, 8], strides = [1, 1]} : vector<8x40xf32> to vector<8x8xf32>
    %72 = arith.addf %70, %71 : vector<8x8xf32>
    %cst_31 = arith.constant 1.000000e+00 : f32
    %73 = vector.broadcast %cst_31 : f32 to vector<8x8xf32>
    %74 = arith.maximumf %72, %73 : vector<8x8xf32>
    %cst_32 = arith.constant 1.000000e+00 : f32
    %75 = vector.broadcast %cst_32 : f32 to vector<8x8xf32>
    %76 = arith.divf %75, %74 : vector<8x8xf32>
    %77 = tpu.concatenate %76, %76, %76, %76, %76 in 1 : vector<8x8xf32>, vector<8x8xf32>, vector<8x8xf32>, vector<8x8xf32>, vector<8x8xf32> -> vector<8x40xf32>
    %78 = arith.mulf %63, %77 : vector<8x40xf32>
    %c0_i32_33 = arith.constant 0 : i32
    %79 = vector.broadcast %c0_i32_33 : i32 to vector<8x40xi32>
    %80 = arith.cmpi eq, %59, %79 : vector<8x40xi32>
    %81 = arith.extui %80 : vector<8x40xi1> to vector<8x40xi32>
    %82 = arith.sitofp %81 : vector<8x40xi32> to vector<8x40xf32>
    %83 = arith.mulf %82, %78 : vector<8x40xf32>
    %c1_i32 = arith.constant 1 : i32
    %84 = vector.broadcast %c1_i32 : i32 to vector<8x40xi32>
    %85 = arith.cmpi eq, %59, %84 : vector<8x40xi32>
    %86 = arith.extui %85 : vector<8x40xi1> to vector<8x40xi32>
    %87 = arith.sitofp %86 : vector<8x40xi32> to vector<8x40xf32>
    %88 = arith.mulf %87, %78 : vector<8x40xf32>
    %c2_i32 = arith.constant 2 : i32
    %89 = vector.broadcast %c2_i32 : i32 to vector<8x40xi32>
    %90 = arith.cmpi eq, %59, %89 : vector<8x40xi32>
    %91 = arith.extui %90 : vector<8x40xi1> to vector<8x40xi32>
    %92 = arith.sitofp %91 : vector<8x40xi32> to vector<8x40xf32>
    %93 = arith.mulf %92, %78 : vector<8x40xf32>
    %c3_i32 = arith.constant 3 : i32
    %94 = vector.broadcast %c3_i32 : i32 to vector<8x40xi32>
    %95 = arith.cmpi eq, %59, %94 : vector<8x40xi32>
    %96 = arith.extui %95 : vector<8x40xi1> to vector<8x40xi32>
    %97 = arith.sitofp %96 : vector<8x40xi32> to vector<8x40xf32>
    %98 = arith.mulf %97, %78 : vector<8x40xf32>
    %c4_i32 = arith.constant 4 : i32
    %99 = vector.broadcast %c4_i32 : i32 to vector<8x40xi32>
    %100 = arith.cmpi eq, %59, %99 : vector<8x40xi32>
    %101 = arith.extui %100 : vector<8x40xi1> to vector<8x40xi32>
    %102 = arith.sitofp %101 : vector<8x40xi32> to vector<8x40xf32>
    %103 = arith.mulf %102, %78 : vector<8x40xf32>
    %c5_i32 = arith.constant 5 : i32
    %104 = vector.broadcast %c5_i32 : i32 to vector<8x40xi32>
    %105 = arith.cmpi eq, %59, %104 : vector<8x40xi32>
    %106 = arith.extui %105 : vector<8x40xi1> to vector<8x40xi32>
    %107 = arith.sitofp %106 : vector<8x40xi32> to vector<8x40xf32>
    %108 = arith.mulf %107, %78 : vector<8x40xf32>
    %c6_i32 = arith.constant 6 : i32
    %109 = vector.broadcast %c6_i32 : i32 to vector<8x40xi32>
    %110 = arith.cmpi eq, %59, %109 : vector<8x40xi32>
    %111 = arith.extui %110 : vector<8x40xi1> to vector<8x40xi32>
    %112 = arith.sitofp %111 : vector<8x40xi32> to vector<8x40xf32>
    %113 = arith.mulf %112, %78 : vector<8x40xf32>
    %c7_i32_34 = arith.constant 7 : i32
    %114 = vector.broadcast %c7_i32_34 : i32 to vector<8x40xi32>
    %115 = arith.cmpi eq, %59, %114 : vector<8x40xi32>
    %116 = arith.extui %115 : vector<8x40xi1> to vector<8x40xi32>
    %117 = arith.sitofp %116 : vector<8x40xi32> to vector<8x40xf32>
    %118 = arith.mulf %117, %78 : vector<8x40xf32>
    %c8_i32 = arith.constant 8 : i32
    %119 = vector.broadcast %c8_i32 : i32 to vector<8x40xi32>
    %120 = arith.cmpi eq, %59, %119 : vector<8x40xi32>
    %121 = arith.extui %120 : vector<8x40xi1> to vector<8x40xi32>
    %122 = arith.sitofp %121 : vector<8x40xi32> to vector<8x40xf32>
    %123 = arith.mulf %122, %78 : vector<8x40xf32>
    %c9_i32 = arith.constant 9 : i32
    %124 = vector.broadcast %c9_i32 : i32 to vector<8x40xi32>
    %125 = arith.cmpi eq, %59, %124 : vector<8x40xi32>
    %126 = arith.extui %125 : vector<8x40xi1> to vector<8x40xi32>
    %127 = arith.sitofp %126 : vector<8x40xi32> to vector<8x40xf32>
    %128 = arith.mulf %127, %78 : vector<8x40xf32>
    %c10_i32 = arith.constant 10 : i32
    %129 = vector.broadcast %c10_i32 : i32 to vector<8x40xi32>
    %130 = arith.cmpi eq, %59, %129 : vector<8x40xi32>
    %131 = arith.extui %130 : vector<8x40xi1> to vector<8x40xi32>
    %132 = arith.sitofp %131 : vector<8x40xi32> to vector<8x40xf32>
    %133 = arith.mulf %132, %78 : vector<8x40xf32>
    %c11_i32 = arith.constant 11 : i32
    %134 = vector.broadcast %c11_i32 : i32 to vector<8x40xi32>
    %135 = arith.cmpi eq, %59, %134 : vector<8x40xi32>
    %136 = arith.extui %135 : vector<8x40xi1> to vector<8x40xi32>
    %137 = arith.sitofp %136 : vector<8x40xi32> to vector<8x40xf32>
    %138 = arith.mulf %137, %78 : vector<8x40xf32>
    %c0_35 = arith.constant 0 : index
    %c0_36 = arith.constant 0 : index
    %c0_37 = arith.constant 0 : index
    %139 = vector.load %arg3[%c0_35, %c0_36, %c0_37] : memref<2x8x40xi32, #tpu.memory_space<vmem>>, vector<1x8x40xi32>
    %140 = vector.shape_cast %139 : vector<1x8x40xi32> to vector<8x40xi32>
    %c0_i32_38 = arith.constant 0 : i32
    %141 = vector.broadcast %c0_i32_38 : i32 to vector<8x40xi32>
    %142 = arith.cmpi sge, %140, %141 : vector<8x40xi32>
    %143 = arith.extui %142 : vector<8x40xi1> to vector<8x40xi32>
    %144 = vector.extract_strided_slice %143 {offsets = [0, 0], sizes = [8, 8], strides = [1, 1]} : vector<8x40xi32> to vector<8x8xi32>
    %145 = vector.extract_strided_slice %143 {offsets = [0, 8], sizes = [8, 8], strides = [1, 1]} : vector<8x40xi32> to vector<8x8xi32>
    %146 = arith.addi %144, %145 : vector<8x8xi32>
    %147 = vector.extract_strided_slice %143 {offsets = [0, 16], sizes = [8, 8], strides = [1, 1]} : vector<8x40xi32> to vector<8x8xi32>
    %148 = arith.addi %146, %147 : vector<8x8xi32>
    %149 = vector.extract_strided_slice %143 {offsets = [0, 24], sizes = [8, 8], strides = [1, 1]} : vector<8x40xi32> to vector<8x8xi32>
    %150 = arith.addi %148, %149 : vector<8x8xi32>
    %151 = vector.extract_strided_slice %143 {offsets = [0, 32], sizes = [8, 8], strides = [1, 1]} : vector<8x40xi32> to vector<8x8xi32>
    %152 = arith.addi %150, %151 : vector<8x8xi32>
    %c0_i32_39 = arith.constant 0 : i32
    %153 = vector.broadcast %c0_i32_39 : i32 to vector<8x8xi32>
    %154 = arith.cmpi eq, %152, %153 : vector<8x8xi32>
    %155 = arith.extui %154 : vector<8x8xi1> to vector<8x8xi32>
    %156 = arith.sitofp %155 : vector<8x8xi32> to vector<8x8xf32>
    %c1_i32_40 = arith.constant 1 : i32
    %157 = vector.broadcast %c1_i32_40 : i32 to vector<8x8xi32>
    %158 = arith.cmpi eq, %152, %157 : vector<8x8xi32>
    %159 = arith.extui %158 : vector<8x8xi1> to vector<8x8xi32>
    %160 = arith.sitofp %159 : vector<8x8xi32> to vector<8x8xf32>
    %c2_i32_41 = arith.constant 2 : i32
    %161 = vector.broadcast %c2_i32_41 : i32 to vector<8x8xi32>
    %162 = arith.cmpi eq, %152, %161 : vector<8x8xi32>
    %163 = arith.extui %162 : vector<8x8xi1> to vector<8x8xi32>
    %164 = arith.sitofp %163 : vector<8x8xi32> to vector<8x8xf32>
    %c3_i32_42 = arith.constant 3 : i32
    %165 = vector.broadcast %c3_i32_42 : i32 to vector<8x8xi32>
    %166 = arith.cmpi eq, %152, %165 : vector<8x8xi32>
    %167 = arith.extui %166 : vector<8x8xi1> to vector<8x8xi32>
    %168 = arith.sitofp %167 : vector<8x8xi32> to vector<8x8xf32>
    %c4_i32_43 = arith.constant 4 : i32
    %169 = vector.broadcast %c4_i32_43 : i32 to vector<8x8xi32>
    %170 = arith.cmpi eq, %152, %169 : vector<8x8xi32>
    %171 = arith.extui %170 : vector<8x8xi1> to vector<8x8xi32>
    %172 = arith.sitofp %171 : vector<8x8xi32> to vector<8x8xf32>
    %c5_i32_44 = arith.constant 5 : i32
    %173 = vector.broadcast %c5_i32_44 : i32 to vector<8x8xi32>
    %174 = arith.cmpi eq, %152, %173 : vector<8x8xi32>
    %175 = arith.extui %174 : vector<8x8xi1> to vector<8x8xi32>
    %176 = arith.sitofp %175 : vector<8x8xi32> to vector<8x8xf32>
    %177 = tpu.concatenate %83, %88, %93, %98, %103, %108, %113, %118, %123, %128, %133, %138, %156, %160, %164, %168 in 1 : vector<8x40xf32>, vector<8x40xf32>, vector<8x40xf32>, vector<8x40xf32>, vector<8x40xf32>, vector<8x40xf32>, vector<8x40xf32>, vector<8x40xf32>, vector<8x40xf32>, vector<8x40xf32>, vector<8x40xf32>, vector<8x40xf32>, vector<8x8xf32>, vector<8x8xf32>, vector<8x8xf32>, vector<8x8xf32> -> vector<8x512xf32>
    %178 = tpu.concatenate %172, %176 in 1 : vector<8x8xf32>, vector<8x8xf32> -> vector<8x16xf32>
    %179 = tpu.concatenate %177, %178 in 1 : vector<8x512xf32>, vector<8x16xf32> -> vector<8x528xf32>
    %180 = arith.truncf %179 : vector<8x528xf32> to vector<8x528xbf16>
    %c0_45 = arith.constant 0 : index
    %c0_46 = arith.constant 0 : index
    %c0_47 = arith.constant 0 : index
    %181 = vector.load %arg4[%c0_45, %c0_46, %c0_47] : memref<2x528x32xbf16, #tpu.memory_space<vmem>>, vector<1x528x32xbf16>
    %182 = vector.shape_cast %181 : vector<1x528x32xbf16> to vector<528x32xbf16>
    %cst_48 = arith.constant dense<0.000000e+00> : vector<8x32xf32>
    %183 = tpu.matmul %180, %182, %cst_48 {dimension_numbers = #tpu.dot_dimension_numbers<[1], [0], [0], [1], [0, 0, 1, 1], [], []>} : vector<8x528xbf16>, vector<528x32xbf16>, vector<8x32xf32> -> vector<8x32xf32>
    %184 = vector.extract_strided_slice %57 {offsets = [0, 0], sizes = [8, 8], strides = [1, 1]} : vector<16x96xf32> to vector<8x8xf32>
    %185 = vector.extract_strided_slice %57 {offsets = [0, 32], sizes = [8, 8], strides = [1, 1]} : vector<16x96xf32> to vector<8x8xf32>
    %186 = vector.extract_strided_slice %57 {offsets = [0, 64], sizes = [8, 8], strides = [1, 1]} : vector<16x96xf32> to vector<8x8xf32>
    "tpu.trace_start"() <{level = 10 : i32, message = "qd,kd->qk"}> : () -> ()
    %cst_49 = arith.constant dense<0.000000e+00> : vector<8x8xf32>
    %187 = tpu.matmul %184, %185, %cst_49 {dimension_numbers = #tpu.dot_dimension_numbers<[1], [1], [0], [0], [0, 0, 1, 0], [], []>} : vector<8x8xf32>, vector<8x8xf32>, vector<8x8xf32> -> vector<8x8xf32>
    "tpu.trace_stop"() : () -> ()
    %188 = vector.extract_strided_slice %183 {offsets = [0, 0], sizes = [8, 8], strides = [1, 1]} : vector<8x32xf32> to vector<8x8xf32>
    %189 = arith.addf %187, %188 : vector<8x8xf32>
    %cst_50 = arith.constant dense<0xFF800000> : vector<8xf32>
    %190 = vector.multi_reduction <maximumf>, %189, %cst_50 [1] : vector<8x8xf32> to vector<8xf32>
    %191 = vector.shape_cast %190 : vector<8xf32> to vector<8x1xf32>
    %192 = vector.broadcast %191 : vector<8x1xf32> to vector<8x8xf32>
    %193 = arith.subf %189, %192 : vector<8x8xf32>
    %194 = math.exp %193 : vector<8x8xf32>
    %cst_51 = arith.constant dense<0.000000e+00> : vector<8xf32>
    %195 = vector.multi_reduction <add>, %194, %cst_51 [1] : vector<8x8xf32> to vector<8xf32>
    %196 = vector.shape_cast %195 : vector<8xf32> to vector<8x1xf32>
    %197 = tpu.reciprocal %196 {approx = true} : vector<8x1xf32> -> vector<8x1xf32>
    %198 = vector.broadcast %197 : vector<8x1xf32> to vector<8x8xf32>
    %199 = arith.mulf %194, %198 : vector<8x8xf32>
    %cst_52 = arith.constant dense<0.000000e+00> : vector<8x8xf32>
    %200 = tpu.matmul %199, %186, %cst_52 {dimension_numbers = #tpu.dot_dimension_numbers<[1], [0], [0], [1], [0, 0, 1, 1], [], []>} : vector<8x8xf32>, vector<8x8xf32>, vector<8x8xf32> -> vector<8x8xf32>
    %c0_53 = arith.constant 0 : index
    %c0_54 = arith.constant 0 : index
    %201 = vector.load %arg8[%c0_53, %c0_54] : memref<16x32xf32, #tpu.memory_space<vmem>>, vector<8x8xf32>
    tpu.vector_store %arg8[%c0_53, %c0_54], %200 {strides = array<i32>} : memref<16x32xf32, #tpu.memory_space<vmem>>, vector<8x8xf32>,
    %202 = vector.extract_strided_slice %57 {offsets = [0, 8], sizes = [8, 8], strides = [1, 1]} : vector<16x96xf32> to vector<8x8xf32>
    %203 = vector.extract_strided_slice %57 {offsets = [0, 40], sizes = [8, 8], strides = [1, 1]} : vector<16x96xf32> to vector<8x8xf32>
    %204 = vector.extract_strided_slice %57 {offsets = [0, 72], sizes = [8, 8], strides = [1, 1]} : vector<16x96xf32> to vector<8x8xf32>
    "tpu.trace_start"() <{level = 10 : i32, message = "qd,kd->qk"}> : () -> ()
    %cst_55 = arith.constant dense<0.000000e+00> : vector<8x8xf32>
    %205 = tpu.matmul %202, %203, %cst_55 {dimension_numbers = #tpu.dot_dimension_numbers<[1], [1], [0], [0], [0, 0, 1, 0], [], []>} : vector<8x8xf32>, vector<8x8xf32>, vector<8x8xf32> -> vector<8x8xf32>
    "tpu.trace_stop"() : () -> ()
    %206 = vector.extract_strided_slice %183 {offsets = [0, 8], sizes = [8, 8], strides = [1, 1]} : vector<8x32xf32> to vector<8x8xf32>
    %207 = arith.addf %205, %206 : vector<8x8xf32>
    %cst_56 = arith.constant dense<0xFF800000> : vector<8xf32>
    %208 = vector.multi_reduction <maximumf>, %207, %cst_56 [1] : vector<8x8xf32> to vector<8xf32>
    %209 = vector.shape_cast %208 : vector<8xf32> to vector<8x1xf32>
    %210 = vector.broadcast %209 : vector<8x1xf32> to vector<8x8xf32>
    %211 = arith.subf %207, %210 : vector<8x8xf32>
    %212 = math.exp %211 : vector<8x8xf32>
    %cst_57 = arith.constant dense<0.000000e+00> : vector<8xf32>
    %213 = vector.multi_reduction <add>, %212, %cst_57 [1] : vector<8x8xf32> to vector<8xf32>
    %214 = vector.shape_cast %213 : vector<8xf32> to vector<8x1xf32>
    %215 = tpu.reciprocal %214 {approx = true} : vector<8x1xf32> -> vector<8x1xf32>
    %216 = vector.broadcast %215 : vector<8x1xf32> to vector<8x8xf32>
    %217 = arith.mulf %212, %216 : vector<8x8xf32>
    %cst_58 = arith.constant dense<0.000000e+00> : vector<8x8xf32>
    %218 = tpu.matmul %217, %204, %cst_58 {dimension_numbers = #tpu.dot_dimension_numbers<[1], [0], [0], [1], [0, 0, 1, 1], [], []>} : vector<8x8xf32>, vector<8x8xf32>, vector<8x8xf32> -> vector<8x8xf32>
    %c0_59 = arith.constant 0 : index
    %c8_60 = arith.constant 8 : index
    %219 = vector.load %arg8[%c0_59, %c8_60] : memref<16x32xf32, #tpu.memory_space<vmem>>, vector<8x8xf32>
    tpu.vector_store %arg8[%c0_59, %c8_60], %218 {strides = array<i32>} : memref<16x32xf32, #tpu.memory_space<vmem>>, vector<8x8xf32>,
    %220 = vector.extract_strided_slice %57 {offsets = [0, 16], sizes = [8, 8], strides = [1, 1]} : vector<16x96xf32> to vector<8x8xf32>
    %221 = vector.extract_strided_slice %57 {offsets = [0, 48], sizes = [8, 8], strides = [1, 1]} : vector<16x96xf32> to vector<8x8xf32>
    %222 = vector.extract_strided_slice %57 {offsets = [0, 80], sizes = [8, 8], strides = [1, 1]} : vector<16x96xf32> to vector<8x8xf32>
    "tpu.trace_start"() <{level = 10 : i32, message = "qd,kd->qk"}> : () -> ()
    %cst_61 = arith.constant dense<0.000000e+00> : vector<8x8xf32>
    %223 = tpu.matmul %220, %221, %cst_61 {dimension_numbers = #tpu.dot_dimension_numbers<[1], [1], [0], [0], [0, 0, 1, 0], [], []>} : vector<8x8xf32>, vector<8x8xf32>, vector<8x8xf32> -> vector<8x8xf32>
    "tpu.trace_stop"() : () -> ()
    %224 = vector.extract_strided_slice %183 {offsets = [0, 16], sizes = [8, 8], strides = [1, 1]} : vector<8x32xf32> to vector<8x8xf32>
    %225 = arith.addf %223, %224 : vector<8x8xf32>
    %cst_62 = arith.constant dense<0xFF800000> : vector<8xf32>
    %226 = vector.multi_reduction <maximumf>, %225, %cst_62 [1] : vector<8x8xf32> to vector<8xf32>
    %227 = vector.shape_cast %226 : vector<8xf32> to vector<8x1xf32>
    %228 = vector.broadcast %227 : vector<8x1xf32> to vector<8x8xf32>
    %229 = arith.subf %225, %228 : vector<8x8xf32>
    %230 = math.exp %229 : vector<8x8xf32>
    %cst_63 = arith.constant dense<0.000000e+00> : vector<8xf32>
    %231 = vector.multi_reduction <add>, %230, %cst_63 [1] : vector<8x8xf32> to vector<8xf32>
    %232 = vector.shape_cast %231 : vector<8xf32> to vector<8x1xf32>
    %233 = tpu.reciprocal %232 {approx = true} : vector<8x1xf32> -> vector<8x1xf32>
    %234 = vector.broadcast %233 : vector<8x1xf32> to vector<8x8xf32>
    %235 = arith.mulf %230, %234 : vector<8x8xf32>
    %cst_64 = arith.constant dense<0.000000e+00> : vector<8x8xf32>
    %236 = tpu.matmul %235, %222, %cst_64 {dimension_numbers = #tpu.dot_dimension_numbers<[1], [0], [0], [1], [0, 0, 1, 1], [], []>} : vector<8x8xf32>, vector<8x8xf32>, vector<8x8xf32> -> vector<8x8xf32>
    %c0_65 = arith.constant 0 : index
    %c16 = arith.constant 16 : index
    %237 = vector.load %arg8[%c0_65, %c16] : memref<16x32xf32, #tpu.memory_space<vmem>>, vector<8x8xf32>
    tpu.vector_store %arg8[%c0_65, %c16], %236 {strides = array<i32>} : memref<16x32xf32, #tpu.memory_space<vmem>>, vector<8x8xf32>,
    %238 = vector.extract_strided_slice %57 {offsets = [0, 24], sizes = [8, 8], strides = [1, 1]} : vector<16x96xf32> to vector<8x8xf32>
    %239 = vector.extract_strided_slice %57 {offsets = [0, 56], sizes = [8, 8], strides = [1, 1]} : vector<16x96xf32> to vector<8x8xf32>
    %240 = vector.extract_strided_slice %57 {offsets = [0, 88], sizes = [8, 8], strides = [1, 1]} : vector<16x96xf32> to vector<8x8xf32>
    "tpu.trace_start"() <{level = 10 : i32, message = "qd,kd->qk"}> : () -> ()
    %cst_66 = arith.constant dense<0.000000e+00> : vector<8x8xf32>
    %241 = tpu.matmul %238, %239, %cst_66 {dimension_numbers = #tpu.dot_dimension_numbers<[1], [1], [0], [0], [0, 0, 1, 0], [], []>} : vector<8x8xf32>, vector<8x8xf32>, vector<8x8xf32> -> vector<8x8xf32>
    "tpu.trace_stop"() : () -> ()
    %242 = vector.extract_strided_slice %183 {offsets = [0, 24], sizes = [8, 8], strides = [1, 1]} : vector<8x32xf32> to vector<8x8xf32>
    %243 = arith.addf %241, %242 : vector<8x8xf32>
    %cst_67 = arith.constant dense<0xFF800000> : vector<8xf32>
    %244 = vector.multi_reduction <maximumf>, %243, %cst_67 [1] : vector<8x8xf32> to vector<8xf32>
    %245 = vector.shape_cast %244 : vector<8xf32> to vector<8x1xf32>
    %246 = vector.broadcast %245 : vector<8x1xf32> to vector<8x8xf32>
    %247 = arith.subf %243, %246 : vector<8x8xf32>
    %248 = math.exp %247 : vector<8x8xf32>
    %cst_68 = arith.constant dense<0.000000e+00> : vector<8xf32>
    %249 = vector.multi_reduction <add>, %248, %cst_68 [1] : vector<8x8xf32> to vector<8xf32>
    %250 = vector.shape_cast %249 : vector<8xf32> to vector<8x1xf32>
    %251 = tpu.reciprocal %250 {approx = true} : vector<8x1xf32> -> vector<8x1xf32>
    %252 = vector.broadcast %251 : vector<8x1xf32> to vector<8x8xf32>
    %253 = arith.mulf %248, %252 : vector<8x8xf32>
    %cst_69 = arith.constant dense<0.000000e+00> : vector<8x8xf32>
    %254 = tpu.matmul %253, %240, %cst_69 {dimension_numbers = #tpu.dot_dimension_numbers<[1], [0], [0], [1], [0, 0, 1, 1], [], []>} : vector<8x8xf32>, vector<8x8xf32>, vector<8x8xf32> -> vector<8x8xf32>
    %c0_70 = arith.constant 0 : index
    %c24 = arith.constant 24 : index
    %255 = vector.load %arg8[%c0_70, %c24] : memref<16x32xf32, #tpu.memory_space<vmem>>, vector<8x8xf32>
    tpu.vector_store %arg8[%c0_70, %c24], %254 {strides = array<i32>} : memref<16x32xf32, #tpu.memory_space<vmem>>, vector<8x8xf32>,
    %c1_71 = arith.constant 1 : index
    %c0_72 = arith.constant 0 : index
    %c0_73 = arith.constant 0 : index
    %256 = vector.load %arg2[%c1_71, %c0_72, %c0_73] : memref<2x8x40xi32, #tpu.memory_space<vmem>>, vector<1x8x40xi32>
    %257 = vector.shape_cast %256 : vector<1x8x40xi32> to vector<8x40xi32>
    %c0_i32_74 = arith.constant 0 : i32
    %258 = vector.broadcast %c0_i32_74 : i32 to vector<8x40xi32>
    %259 = arith.cmpi sge, %257, %258 : vector<8x40xi32>
    %260 = arith.extui %259 : vector<8x40xi1> to vector<8x40xi32>
    %261 = arith.sitofp %260 : vector<8x40xi32> to vector<8x40xf32>
    %262 = vector.extract_strided_slice %261 {offsets = [0, 0], sizes = [8, 8], strides = [1, 1]} : vector<8x40xf32> to vector<8x8xf32>
    %263 = vector.extract_strided_slice %261 {offsets = [0, 8], sizes = [8, 8], strides = [1, 1]} : vector<8x40xf32> to vector<8x8xf32>
    %264 = arith.addf %262, %263 : vector<8x8xf32>
    %265 = vector.extract_strided_slice %261 {offsets = [0, 16], sizes = [8, 8], strides = [1, 1]} : vector<8x40xf32> to vector<8x8xf32>
    %266 = arith.addf %264, %265 : vector<8x8xf32>
    %267 = vector.extract_strided_slice %261 {offsets = [0, 24], sizes = [8, 8], strides = [1, 1]} : vector<8x40xf32> to vector<8x8xf32>
    %268 = arith.addf %266, %267 : vector<8x8xf32>
    %269 = vector.extract_strided_slice %261 {offsets = [0, 32], sizes = [8, 8], strides = [1, 1]} : vector<8x40xf32> to vector<8x8xf32>
    %270 = arith.addf %268, %269 : vector<8x8xf32>
    %cst_75 = arith.constant 1.000000e+00 : f32
    %271 = vector.broadcast %cst_75 : f32 to vector<8x8xf32>
    %272 = arith.maximumf %270, %271 : vector<8x8xf32>
    %cst_76 = arith.constant 1.000000e+00 : f32
    %273 = vector.broadcast %cst_76 : f32 to vector<8x8xf32>
    %274 = arith.divf %273, %272 : vector<8x8xf32>
    %275 = tpu.concatenate %274, %274, %274, %274, %274 in 1 : vector<8x8xf32>, vector<8x8xf32>, vector<8x8xf32>, vector<8x8xf32>, vector<8x8xf32> -> vector<8x40xf32>
    %276 = arith.mulf %261, %275 : vector<8x40xf32>
    %c0_i32_77 = arith.constant 0 : i32
    %277 = vector.broadcast %c0_i32_77 : i32 to vector<8x40xi32>
    %278 = arith.cmpi eq, %257, %277 : vector<8x40xi32>
    %279 = arith.extui %278 : vector<8x40xi1> to vector<8x40xi32>
    %280 = arith.sitofp %279 : vector<8x40xi32> to vector<8x40xf32>
    %281 = arith.mulf %280, %276 : vector<8x40xf32>
    %c1_i32_78 = arith.constant 1 : i32
    %282 = vector.broadcast %c1_i32_78 : i32 to vector<8x40xi32>
    %283 = arith.cmpi eq, %257, %282 : vector<8x40xi32>
    %284 = arith.extui %283 : vector<8x40xi1> to vector<8x40xi32>
    %285 = arith.sitofp %284 : vector<8x40xi32> to vector<8x40xf32>
    %286 = arith.mulf %285, %276 : vector<8x40xf32>
    %c2_i32_79 = arith.constant 2 : i32
    %287 = vector.broadcast %c2_i32_79 : i32 to vector<8x40xi32>
    %288 = arith.cmpi eq, %257, %287 : vector<8x40xi32>
    %289 = arith.extui %288 : vector<8x40xi1> to vector<8x40xi32>
    %290 = arith.sitofp %289 : vector<8x40xi32> to vector<8x40xf32>
    %291 = arith.mulf %290, %276 : vector<8x40xf32>
    %c3_i32_80 = arith.constant 3 : i32
    %292 = vector.broadcast %c3_i32_80 : i32 to vector<8x40xi32>
    %293 = arith.cmpi eq, %257, %292 : vector<8x40xi32>
    %294 = arith.extui %293 : vector<8x40xi1> to vector<8x40xi32>
    %295 = arith.sitofp %294 : vector<8x40xi32> to vector<8x40xf32>
    %296 = arith.mulf %295, %276 : vector<8x40xf32>
    %c4_i32_81 = arith.constant 4 : i32
    %297 = vector.broadcast %c4_i32_81 : i32 to vector<8x40xi32>
    %298 = arith.cmpi eq, %257, %297 : vector<8x40xi32>
    %299 = arith.extui %298 : vector<8x40xi1> to vector<8x40xi32>
    %300 = arith.sitofp %299 : vector<8x40xi32> to vector<8x40xf32>
    %301 = arith.mulf %300, %276 : vector<8x40xf32>
    %c5_i32_82 = arith.constant 5 : i32
    %302 = vector.broadcast %c5_i32_82 : i32 to vector<8x40xi32>
    %303 = arith.cmpi eq, %257, %302 : vector<8x40xi32>
    %304 = arith.extui %303 : vector<8x40xi1> to vector<8x40xi32>
    %305 = arith.sitofp %304 : vector<8x40xi32> to vector<8x40xf32>
    %306 = arith.mulf %305, %276 : vector<8x40xf32>
    %c6_i32_83 = arith.constant 6 : i32
    %307 = vector.broadcast %c6_i32_83 : i32 to vector<8x40xi32>
    %308 = arith.cmpi eq, %257, %307 : vector<8x40xi32>
    %309 = arith.extui %308 : vector<8x40xi1> to vector<8x40xi32>
    %310 = arith.sitofp %309 : vector<8x40xi32> to vector<8x40xf32>
    %311 = arith.mulf %310, %276 : vector<8x40xf32>
    %c7_i32_84 = arith.constant 7 : i32
    %312 = vector.broadcast %c7_i32_84 : i32 to vector<8x40xi32>
    %313 = arith.cmpi eq, %257, %312 : vector<8x40xi32>
    %314 = arith.extui %313 : vector<8x40xi1> to vector<8x40xi32>
    %315 = arith.sitofp %314 : vector<8x40xi32> to vector<8x40xf32>
    %316 = arith.mulf %315, %276 : vector<8x40xf32>
    %c8_i32_85 = arith.constant 8 : i32
    %317 = vector.broadcast %c8_i32_85 : i32 to vector<8x40xi32>
    %318 = arith.cmpi eq, %257, %317 : vector<8x40xi32>
    %319 = arith.extui %318 : vector<8x40xi1> to vector<8x40xi32>
    %320 = arith.sitofp %319 : vector<8x40xi32> to vector<8x40xf32>
    %321 = arith.mulf %320, %276 : vector<8x40xf32>
    %c9_i32_86 = arith.constant 9 : i32
    %322 = vector.broadcast %c9_i32_86 : i32 to vector<8x40xi32>
    %323 = arith.cmpi eq, %257, %322 : vector<8x40xi32>
    %324 = arith.extui %323 : vector<8x40xi1> to vector<8x40xi32>
    %325 = arith.sitofp %324 : vector<8x40xi32> to vector<8x40xf32>
    %326 = arith.mulf %325, %276 : vector<8x40xf32>
    %c10_i32_87 = arith.constant 10 : i32
    %327 = vector.broadcast %c10_i32_87 : i32 to vector<8x40xi32>
    %328 = arith.cmpi eq, %257, %327 : vector<8x40xi32>
    %329 = arith.extui %328 : vector<8x40xi1> to vector<8x40xi32>
    %330 = arith.sitofp %329 : vector<8x40xi32> to vector<8x40xf32>
    %331 = arith.mulf %330, %276 : vector<8x40xf32>
    %c11_i32_88 = arith.constant 11 : i32
    %332 = vector.broadcast %c11_i32_88 : i32 to vector<8x40xi32>
    %333 = arith.cmpi eq, %257, %332 : vector<8x40xi32>
    %334 = arith.extui %333 : vector<8x40xi1> to vector<8x40xi32>
    %335 = arith.sitofp %334 : vector<8x40xi32> to vector<8x40xf32>
    %336 = arith.mulf %335, %276 : vector<8x40xf32>
    %c1_89 = arith.constant 1 : index
    %c0_90 = arith.constant 0 : index
    %c0_91 = arith.constant 0 : index
    %337 = vector.load %arg3[%c1_89, %c0_90, %c0_91] : memref<2x8x40xi32, #tpu.memory_space<vmem>>, vector<1x8x40xi32>
    %338 = vector.shape_cast %337 : vector<1x8x40xi32> to vector<8x40xi32>
    %c0_i32_92 = arith.constant 0 : i32
    %339 = vector.broadcast %c0_i32_92 : i32 to vector<8x40xi32>
    %340 = arith.cmpi sge, %338, %339 : vector<8x40xi32>
    %341 = arith.extui %340 : vector<8x40xi1> to vector<8x40xi32>
    %342 = vector.extract_strided_slice %341 {offsets = [0, 0], sizes = [8, 8], strides = [1, 1]} : vector<8x40xi32> to vector<8x8xi32>
    %343 = vector.extract_strided_slice %341 {offsets = [0, 8], sizes = [8, 8], strides = [1, 1]} : vector<8x40xi32> to vector<8x8xi32>
    %344 = arith.addi %342, %343 : vector<8x8xi32>
    %345 = vector.extract_strided_slice %341 {offsets = [0, 16], sizes = [8, 8], strides = [1, 1]} : vector<8x40xi32> to vector<8x8xi32>
    %346 = arith.addi %344, %345 : vector<8x8xi32>
    %347 = vector.extract_strided_slice %341 {offsets = [0, 24], sizes = [8, 8], strides = [1, 1]} : vector<8x40xi32> to vector<8x8xi32>
    %348 = arith.addi %346, %347 : vector<8x8xi32>
    %349 = vector.extract_strided_slice %341 {offsets = [0, 32], sizes = [8, 8], strides = [1, 1]} : vector<8x40xi32> to vector<8x8xi32>
    %350 = arith.addi %348, %349 : vector<8x8xi32>
    %c0_i32_93 = arith.constant 0 : i32
    %351 = vector.broadcast %c0_i32_93 : i32 to vector<8x8xi32>
    %352 = arith.cmpi eq, %350, %351 : vector<8x8xi32>
    %353 = arith.extui %352 : vector<8x8xi1> to vector<8x8xi32>
    %354 = arith.sitofp %353 : vector<8x8xi32> to vector<8x8xf32>
    %c1_i32_94 = arith.constant 1 : i32
    %355 = vector.broadcast %c1_i32_94 : i32 to vector<8x8xi32>
    %356 = arith.cmpi eq, %350, %355 : vector<8x8xi32>
    %357 = arith.extui %356 : vector<8x8xi1> to vector<8x8xi32>
    %358 = arith.sitofp %357 : vector<8x8xi32> to vector<8x8xf32>
    %c2_i32_95 = arith.constant 2 : i32
    %359 = vector.broadcast %c2_i32_95 : i32 to vector<8x8xi32>
    %360 = arith.cmpi eq, %350, %359 : vector<8x8xi32>
    %361 = arith.extui %360 : vector<8x8xi1> to vector<8x8xi32>
    %362 = arith.sitofp %361 : vector<8x8xi32> to vector<8x8xf32>
    %c3_i32_96 = arith.constant 3 : i32
    %363 = vector.broadcast %c3_i32_96 : i32 to vector<8x8xi32>
    %364 = arith.cmpi eq, %350, %363 : vector<8x8xi32>
    %365 = arith.extui %364 : vector<8x8xi1> to vector<8x8xi32>
    %366 = arith.sitofp %365 : vector<8x8xi32> to vector<8x8xf32>
    %c4_i32_97 = arith.constant 4 : i32
    %367 = vector.broadcast %c4_i32_97 : i32 to vector<8x8xi32>
    %368 = arith.cmpi eq, %350, %367 : vector<8x8xi32>
    %369 = arith.extui %368 : vector<8x8xi1> to vector<8x8xi32>
    %370 = arith.sitofp %369 : vector<8x8xi32> to vector<8x8xf32>
    %c5_i32_98 = arith.constant 5 : i32
    %371 = vector.broadcast %c5_i32_98 : i32 to vector<8x8xi32>
    %372 = arith.cmpi eq, %350, %371 : vector<8x8xi32>
    %373 = arith.extui %372 : vector<8x8xi1> to vector<8x8xi32>
    %374 = arith.sitofp %373 : vector<8x8xi32> to vector<8x8xf32>
    %375 = tpu.concatenate %281, %286, %291, %296, %301, %306, %311, %316, %321, %326, %331, %336, %354, %358, %362, %366 in 1 : vector<8x40xf32>, vector<8x40xf32>, vector<8x40xf32>, vector<8x40xf32>, vector<8x40xf32>, vector<8x40xf32>, vector<8x40xf32>, vector<8x40xf32>, vector<8x40xf32>, vector<8x40xf32>, vector<8x40xf32>, vector<8x40xf32>, vector<8x8xf32>, vector<8x8xf32>, vector<8x8xf32>, vector<8x8xf32> -> vector<8x512xf32>
    %376 = tpu.concatenate %370, %374 in 1 : vector<8x8xf32>, vector<8x8xf32> -> vector<8x16xf32>
    %377 = tpu.concatenate %375, %376 in 1 : vector<8x512xf32>, vector<8x16xf32> -> vector<8x528xf32>
    %378 = arith.truncf %377 : vector<8x528xf32> to vector<8x528xbf16>
    %c1_99 = arith.constant 1 : index
    %c0_100 = arith.constant 0 : index
    %c0_101 = arith.constant 0 : index
    %379 = vector.load %arg4[%c1_99, %c0_100, %c0_101] : memref<2x528x32xbf16, #tpu.memory_space<vmem>>, vector<1x528x32xbf16>
    %380 = vector.shape_cast %379 : vector<1x528x32xbf16> to vector<528x32xbf16>
    %cst_102 = arith.constant dense<0.000000e+00> : vector<8x32xf32>
    %381 = tpu.matmul %378, %380, %cst_102 {dimension_numbers = #tpu.dot_dimension_numbers<[1], [0], [0], [1], [0, 0, 1, 1], [], []>} : vector<8x528xbf16>, vector<528x32xbf16>, vector<8x32xf32> -> vector<8x32xf32>
    %382 = vector.extract_strided_slice %57 {offsets = [8, 0], sizes = [8, 8], strides = [1, 1]} : vector<16x96xf32> to vector<8x8xf32>
    %383 = vector.extract_strided_slice %57 {offsets = [8, 32], sizes = [8, 8], strides = [1, 1]} : vector<16x96xf32> to vector<8x8xf32>
    %384 = vector.extract_strided_slice %57 {offsets = [8, 64], sizes = [8, 8], strides = [1, 1]} : vector<16x96xf32> to vector<8x8xf32>
    "tpu.trace_start"() <{level = 10 : i32, message = "qd,kd->qk"}> : () -> ()
    %cst_103 = arith.constant dense<0.000000e+00> : vector<8x8xf32>
    %385 = tpu.matmul %382, %383, %cst_103 {dimension_numbers = #tpu.dot_dimension_numbers<[1], [1], [0], [0], [0, 0, 1, 0], [], []>} : vector<8x8xf32>, vector<8x8xf32>, vector<8x8xf32> -> vector<8x8xf32>
    "tpu.trace_stop"() : () -> ()
    %386 = vector.extract_strided_slice %381 {offsets = [0, 0], sizes = [8, 8], strides = [1, 1]} : vector<8x32xf32> to vector<8x8xf32>
    %387 = arith.addf %385, %386 : vector<8x8xf32>
    %cst_104 = arith.constant dense<0xFF800000> : vector<8xf32>
    %388 = vector.multi_reduction <maximumf>, %387, %cst_104 [1] : vector<8x8xf32> to vector<8xf32>
    %389 = vector.shape_cast %388 : vector<8xf32> to vector<8x1xf32>
    %390 = vector.broadcast %389 : vector<8x1xf32> to vector<8x8xf32>
    %391 = arith.subf %387, %390 : vector<8x8xf32>
    %392 = math.exp %391 : vector<8x8xf32>
    %cst_105 = arith.constant dense<0.000000e+00> : vector<8xf32>
    %393 = vector.multi_reduction <add>, %392, %cst_105 [1] : vector<8x8xf32> to vector<8xf32>
    %394 = vector.shape_cast %393 : vector<8xf32> to vector<8x1xf32>
    %395 = tpu.reciprocal %394 {approx = true} : vector<8x1xf32> -> vector<8x1xf32>
    %396 = vector.broadcast %395 : vector<8x1xf32> to vector<8x8xf32>
    %397 = arith.mulf %392, %396 : vector<8x8xf32>
    %cst_106 = arith.constant dense<0.000000e+00> : vector<8x8xf32>
    %398 = tpu.matmul %397, %384, %cst_106 {dimension_numbers = #tpu.dot_dimension_numbers<[1], [0], [0], [1], [0, 0, 1, 1], [], []>} : vector<8x8xf32>, vector<8x8xf32>, vector<8x8xf32> -> vector<8x8xf32>
    %c8_107 = arith.constant 8 : index
    %c0_108 = arith.constant 0 : index
    %399 = vector.load %arg8[%c8_107, %c0_108] : memref<16x32xf32, #tpu.memory_space<vmem>>, vector<8x8xf32>
    tpu.vector_store %arg8[%c8_107, %c0_108], %398 {strides = array<i32>} : memref<16x32xf32, #tpu.memory_space<vmem>>, vector<8x8xf32>,
    %400 = vector.extract_strided_slice %57 {offsets = [8, 8], sizes = [8, 8], strides = [1, 1]} : vector<16x96xf32> to vector<8x8xf32>
    %401 = vector.extract_strided_slice %57 {offsets = [8, 40], sizes = [8, 8], strides = [1, 1]} : vector<16x96xf32> to vector<8x8xf32>
    %402 = vector.extract_strided_slice %57 {offsets = [8, 72], sizes = [8, 8], strides = [1, 1]} : vector<16x96xf32> to vector<8x8xf32>
    "tpu.trace_start"() <{level = 10 : i32, message = "qd,kd->qk"}> : () -> ()
    %cst_109 = arith.constant dense<0.000000e+00> : vector<8x8xf32>
    %403 = tpu.matmul %400, %401, %cst_109 {dimension_numbers = #tpu.dot_dimension_numbers<[1], [1], [0], [0], [0, 0, 1, 0], [], []>} : vector<8x8xf32>, vector<8x8xf32>, vector<8x8xf32> -> vector<8x8xf32>
    "tpu.trace_stop"() : () -> ()
    %404 = vector.extract_strided_slice %381 {offsets = [0, 8], sizes = [8, 8], strides = [1, 1]} : vector<8x32xf32> to vector<8x8xf32>
    %405 = arith.addf %403, %404 : vector<8x8xf32>
    %cst_110 = arith.constant dense<0xFF800000> : vector<8xf32>
    %406 = vector.multi_reduction <maximumf>, %405, %cst_110 [1] : vector<8x8xf32> to vector<8xf32>
    %407 = vector.shape_cast %406 : vector<8xf32> to vector<8x1xf32>
    %408 = vector.broadcast %407 : vector<8x1xf32> to vector<8x8xf32>
    %409 = arith.subf %405, %408 : vector<8x8xf32>
    %410 = math.exp %409 : vector<8x8xf32>
    %cst_111 = arith.constant dense<0.000000e+00> : vector<8xf32>
    %411 = vector.multi_reduction <add>, %410, %cst_111 [1] : vector<8x8xf32> to vector<8xf32>
    %412 = vector.shape_cast %411 : vector<8xf32> to vector<8x1xf32>
    %413 = tpu.reciprocal %412 {approx = true} : vector<8x1xf32> -> vector<8x1xf32>
    %414 = vector.broadcast %413 : vector<8x1xf32> to vector<8x8xf32>
    %415 = arith.mulf %410, %414 : vector<8x8xf32>
    %cst_112 = arith.constant dense<0.000000e+00> : vector<8x8xf32>
    %416 = tpu.matmul %415, %402, %cst_112 {dimension_numbers = #tpu.dot_dimension_numbers<[1], [0], [0], [1], [0, 0, 1, 1], [], []>} : vector<8x8xf32>, vector<8x8xf32>, vector<8x8xf32> -> vector<8x8xf32>
    %c8_113 = arith.constant 8 : index
    %c8_114 = arith.constant 8 : index
    %417 = vector.load %arg8[%c8_113, %c8_114] : memref<16x32xf32, #tpu.memory_space<vmem>>, vector<8x8xf32>
    tpu.vector_store %arg8[%c8_113, %c8_114], %416 {strides = array<i32>} : memref<16x32xf32, #tpu.memory_space<vmem>>, vector<8x8xf32>,
    %418 = vector.extract_strided_slice %57 {offsets = [8, 16], sizes = [8, 8], strides = [1, 1]} : vector<16x96xf32> to vector<8x8xf32>
    %419 = vector.extract_strided_slice %57 {offsets = [8, 48], sizes = [8, 8], strides = [1, 1]} : vector<16x96xf32> to vector<8x8xf32>
    %420 = vector.extract_strided_slice %57 {offsets = [8, 80], sizes = [8, 8], strides = [1, 1]} : vector<16x96xf32> to vector<8x8xf32>
    "tpu.trace_start"() <{level = 10 : i32, message = "qd,kd->qk"}> : () -> ()
    %cst_115 = arith.constant dense<0.000000e+00> : vector<8x8xf32>
    %421 = tpu.matmul %418, %419, %cst_115 {dimension_numbers = #tpu.dot_dimension_numbers<[1], [1], [0], [0], [0, 0, 1, 0], [], []>} : vector<8x8xf32>, vector<8x8xf32>, vector<8x8xf32> -> vector<8x8xf32>
    "tpu.trace_stop"() : () -> ()
    %422 = vector.extract_strided_slice %381 {offsets = [0, 16], sizes = [8, 8], strides = [1, 1]} : vector<8x32xf32> to vector<8x8xf32>
    %423 = arith.addf %421, %422 : vector<8x8xf32>
    %cst_116 = arith.constant dense<0xFF800000> : vector<8xf32>
    %424 = vector.multi_reduction <maximumf>, %423, %cst_116 [1] : vector<8x8xf32> to vector<8xf32>
    %425 = vector.shape_cast %424 : vector<8xf32> to vector<8x1xf32>
    %426 = vector.broadcast %425 : vector<8x1xf32> to vector<8x8xf32>
    %427 = arith.subf %423, %426 : vector<8x8xf32>
    %428 = math.exp %427 : vector<8x8xf32>
    %cst_117 = arith.constant dense<0.000000e+00> : vector<8xf32>
    %429 = vector.multi_reduction <add>, %428, %cst_117 [1] : vector<8x8xf32> to vector<8xf32>
    %430 = vector.shape_cast %429 : vector<8xf32> to vector<8x1xf32>
    %431 = tpu.reciprocal %430 {approx = true} : vector<8x1xf32> -> vector<8x1xf32>
    %432 = vector.broadcast %431 : vector<8x1xf32> to vector<8x8xf32>
    %433 = arith.mulf %428, %432 : vector<8x8xf32>
    %cst_118 = arith.constant dense<0.000000e+00> : vector<8x8xf32>
    %434 = tpu.matmul %433, %420, %cst_118 {dimension_numbers = #tpu.dot_dimension_numbers<[1], [0], [0], [1], [0, 0, 1, 1], [], []>} : vector<8x8xf32>, vector<8x8xf32>, vector<8x8xf32> -> vector<8x8xf32>
    %c8_119 = arith.constant 8 : index
    %c16_120 = arith.constant 16 : index
    %435 = vector.load %arg8[%c8_119, %c16_120] : memref<16x32xf32, #tpu.memory_space<vmem>>, vector<8x8xf32>
    tpu.vector_store %arg8[%c8_119, %c16_120], %434 {strides = array<i32>} : memref<16x32xf32, #tpu.memory_space<vmem>>, vector<8x8xf32>,
    %436 = vector.extract_strided_slice %57 {offsets = [8, 24], sizes = [8, 8], strides = [1, 1]} : vector<16x96xf32> to vector<8x8xf32>
    %437 = vector.extract_strided_slice %57 {offsets = [8, 56], sizes = [8, 8], strides = [1, 1]} : vector<16x96xf32> to vector<8x8xf32>
    %438 = vector.extract_strided_slice %57 {offsets = [8, 88], sizes = [8, 8], strides = [1, 1]} : vector<16x96xf32> to vector<8x8xf32>
    "tpu.trace_start"() <{level = 10 : i32, message = "qd,kd->qk"}> : () -> ()
    %cst_121 = arith.constant dense<0.000000e+00> : vector<8x8xf32>
    %439 = tpu.matmul %436, %437, %cst_121 {dimension_numbers = #tpu.dot_dimension_numbers<[1], [1], [0], [0], [0, 0, 1, 0], [], []>} : vector<8x8xf32>, vector<8x8xf32>, vector<8x8xf32> -> vector<8x8xf32>
    "tpu.trace_stop"() : () -> ()
    %440 = vector.extract_strided_slice %381 {offsets = [0, 24], sizes = [8, 8], strides = [1, 1]} : vector<8x32xf32> to vector<8x8xf32>
    %441 = arith.addf %439, %440 : vector<8x8xf32>
    %cst_122 = arith.constant dense<0xFF800000> : vector<8xf32>
    %442 = vector.multi_reduction <maximumf>, %441, %cst_122 [1] : vector<8x8xf32> to vector<8xf32>
    %443 = vector.shape_cast %442 : vector<8xf32> to vector<8x1xf32>
    %444 = vector.broadcast %443 : vector<8x1xf32> to vector<8x8xf32>
    %445 = arith.subf %441, %444 : vector<8x8xf32>
    %446 = math.exp %445 : vector<8x8xf32>
    %cst_123 = arith.constant dense<0.000000e+00> : vector<8xf32>
    %447 = vector.multi_reduction <add>, %446, %cst_123 [1] : vector<8x8xf32> to vector<8xf32>
    %448 = vector.shape_cast %447 : vector<8xf32> to vector<8x1xf32>
    %449 = tpu.reciprocal %448 {approx = true} : vector<8x1xf32> -> vector<8x1xf32>
    %450 = vector.broadcast %449 : vector<8x1xf32> to vector<8x8xf32>
    %451 = arith.mulf %446, %450 : vector<8x8xf32>
    %cst_124 = arith.constant dense<0.000000e+00> : vector<8x8xf32>
    %452 = tpu.matmul %451, %438, %cst_124 {dimension_numbers = #tpu.dot_dimension_numbers<[1], [0], [0], [1], [0, 0, 1, 1], [], []>} : vector<8x8xf32>, vector<8x8xf32>, vector<8x8xf32> -> vector<8x8xf32>
    %c8_125 = arith.constant 8 : index
    %c24_126 = arith.constant 24 : index
    %453 = vector.load %arg8[%c8_125, %c24_126] : memref<16x32xf32, #tpu.memory_space<vmem>>, vector<8x8xf32>
    tpu.vector_store %arg8[%c8_125, %c24_126], %452 {strides = array<i32>} : memref<16x32xf32, #tpu.memory_space<vmem>>, vector<8x8xf32>,
    %c0_127 = arith.constant 0 : index
    %c0_128 = arith.constant 0 : index
    %454 = vector.load %arg8[%c0_127, %c0_128] : memref<16x32xf32, #tpu.memory_space<vmem>>, vector<16x32xf32>
    %455 = arith.truncf %454 : vector<16x32xf32> to vector<16x32xbf16>
    %cst_129 = arith.constant dense<0.000000e+00> : vector<16x32xf32>
    %456 = tpu.matmul %455, %3, %cst_129 {dimension_numbers = #tpu.dot_dimension_numbers<[1], [0], [0], [1], [0, 0, 1, 1], [], []>} : vector<16x32xbf16>, vector<32x32xbf16>, vector<16x32xf32> -> vector<16x32xf32>
    %457 = arith.addf %31, %456 : vector<16x32xf32>
    %458 = vector.broadcast %8 : vector<1x32xf32> to vector<16x32xf32>
    %459 = arith.addf %457, %458 : vector<16x32xf32>
    %cst_130 = arith.constant dense<0.000000e+00> : vector<16xf32>
    %460 = vector.multi_reduction <add>, %459, %cst_130 [1] : vector<16x32xf32> to vector<16xf32>
    %461 = vector.shape_cast %460 : vector<16xf32> to vector<16x1xf32>
    %cst_131 = arith.constant 3.200000e+01 : f32
    %462 = vector.broadcast %cst_131 : f32 to vector<16x1xf32>
    %463 = arith.divf %461, %462 : vector<16x1xf32>
    %464 = vector.broadcast %463 : vector<16x1xf32> to vector<16x32xf32>
    %465 = arith.subf %459, %464 : vector<16x32xf32>
    %466 = arith.mulf %465, %465 : vector<16x32xf32>
    %cst_132 = arith.constant dense<0.000000e+00> : vector<16xf32>
    %467 = vector.multi_reduction <add>, %466, %cst_132 [1] : vector<16x32xf32> to vector<16xf32>
    %468 = vector.shape_cast %467 : vector<16xf32> to vector<16x1xf32>
    %cst_133 = arith.constant 3.200000e+01 : f32
    %469 = vector.broadcast %cst_133 : f32 to vector<16x1xf32>
    %470 = arith.divf %468, %469 : vector<16x1xf32>
    %471 = vector.broadcast %463 : vector<16x1xf32> to vector<16x32xf32>
    %472 = arith.subf %459, %471 : vector<16x32xf32>
    %cst_134 = arith.constant 9.99999974E-6 : f32
    %473 = vector.broadcast %cst_134 : f32 to vector<16x1xf32>
    %474 = arith.addf %470, %473 : vector<16x1xf32>
    %475 = math.rsqrt %474 : vector<16x1xf32>
    %476 = vector.broadcast %475 : vector<16x1xf32> to vector<16x32xf32>
    %477 = arith.mulf %472, %476 : vector<16x32xf32>
    %478 = vector.broadcast %12 : vector<1x32xf32> to vector<16x32xf32>
    %479 = arith.mulf %477, %478 : vector<16x32xf32>
    %480 = vector.broadcast %13 : vector<1x32xf32> to vector<16x32xf32>
    %481 = arith.addf %479, %480 : vector<16x32xf32>
    %482 = arith.truncf %481 : vector<16x32xf32> to vector<16x32xbf16>
    %cst_135 = arith.constant dense<0.000000e+00> : vector<16x64xf32>
    %483 = tpu.matmul %482, %1, %cst_135 {dimension_numbers = #tpu.dot_dimension_numbers<[1], [0], [0], [1], [0, 0, 1, 1], [], []>} : vector<16x32xbf16>, vector<32x64xbf16>, vector<16x64xf32> -> vector<16x64xf32>
    %484 = vector.broadcast %6 : vector<1x64xf32> to vector<16x64xf32>
    %485 = arith.addf %483, %484 : vector<16x64xf32>
    %cst_136 = arith.constant 0.000000e+00 : f32
    %486 = vector.broadcast %cst_136 : f32 to vector<16x64xf32>
    %487 = arith.maximumf %485, %486 : vector<16x64xf32>
    %488 = arith.truncf %487 : vector<16x64xf32> to vector<16x64xbf16>
    %cst_137 = arith.constant dense<0.000000e+00> : vector<16x32xf32>
    %489 = tpu.matmul %488, %4, %cst_137 {dimension_numbers = #tpu.dot_dimension_numbers<[1], [0], [0], [1], [0, 0, 1, 1], [], []>} : vector<16x64xbf16>, vector<64x32xbf16>, vector<16x32xf32> -> vector<16x32xf32>
    %490 = vector.broadcast %9 : vector<1x32xf32> to vector<16x32xf32>
    %491 = arith.addf %489, %490 : vector<16x32xf32>
    %492 = arith.addf %459, %491 : vector<16x32xf32>
    %c0_138 = arith.constant 0 : index
    %c0_139 = arith.constant 0 : index
    %493 = vector.load %arg7[%c0_138, %c0_139] : memref<16x32xf32, #tpu.memory_space<vmem>>, vector<16x32xf32>
    tpu.vector_store %arg7[%c0_138, %c0_139], %492 {strides = array<i32>} : memref<16x32xf32, #tpu.memory_space<vmem>>, vector<16x32xf32>,
    return
  }
}

</mosaic_0001>

<llo_original>
// kernel: graphormer_forward.1
$region0: #{graphormer_forward.1}
  #allocation0 [shape = 'u32[]', space=smem, size = 0x4, offset = 0x4, fixed_abs, tag = 'smem constant byte address 0x4 - core index']
  #allocation1 [shape = 'u32[144,128]{1,0:T(1,128)}', space=vmem, size = 0x12000, scoped, tag = 'internal scratch']
  #allocation2 [shape = 'f32[16,32]{1,0:T(8,128)}', space=vmem, size = 0x2000, scoped, tag = 'scratch operand']
  %s0 = inlined_call_operand.vmem [shape: f32[16,16], index: 0, kind: input, shape index: {}]
  %s1 = inlined_call_operand.vmem [shape: s32[16,1], index: 1, kind: input, shape index: {}]
  %s2 = inlined_call_operand.vmem [shape: s32[2,8,40], index: 2, kind: input, shape index: {}]
  %s3 = inlined_call_operand.vmem [shape: s32[2,8,40], index: 3, kind: input, shape index: {}]
  %s4 = inlined_call_operand.vmem [shape: bf16[2,528,32], index: 4, kind: input, shape index: {}]
  %s5 = inlined_call_operand.vmem [shape: bf16[176,96], index: 5, kind: input, shape index: {}]
  %s6 = inlined_call_operand.vmem [shape: f32[17,96], index: 6, kind: input, shape index: {}]
  %s7 = inlined_call_operand.hbm [shape: f32[16,32], index: 7, kind: output, shape index: {}]
  %s8 = sld [smem:[#allocation0]]
  $region38: #{graphormer_forward.1} parent=0
    _
  %s10 = ssub.s32 1, %s8
  %s11 = scalar_select 0, %s10, %s8
  $region1: #{graphormer_forward.1} parent=0
    #allocation3 [shape = 'u8[8192]{0}', space=vmem, size = 0x2000, scoped, tag = 'output window, operand 0, single buffered']
    #allocation4 [shape = 's32[1]{0}', space=sflag, size = 0x4, scoped, tag = 'scoped memory for graphormer_forward.1']
    %12 = vsyncpa [#allocation4], 0
    // Predicated region
    $region2: #{graphormer_forward.1} parent=1 // pred_check
      _
    $region3: #{graphormer_forward.1} parent=1 // pred_check_branch
      %14 = sbr.rel (0) target = $region5
    $region4: #{graphormer_forward.1} parent=1 // pred_region
      _
    $region5: #{graphormer_forward.1} parent=1 // pred_fallthru
      _
    // Predicated region
    $region6: #{graphormer_forward.1} parent=1 // pred_check
      _
    $region7: #{graphormer_forward.1} parent=1 // pred_check_branch
      %16 = sbr.rel (0) target = $region9
    $region8: #{graphormer_forward.1} parent=1 // pred_region
      _
    $region9: #{graphormer_forward.1} parent=1 // pred_fallthru
      _
    // Predicated region
    $region10: #{graphormer_forward.1} parent=1 // pred_check
      _
    $region11: #{graphormer_forward.1} parent=1 // pred_check_branch
      %18 = sbr.rel (0) target = $region13
    $region12: #{graphormer_forward.1} parent=1 // pred_region
      _
    $region13: #{graphormer_forward.1} parent=1 // pred_fallthru
      _
    // Predicated region
    $region14: #{graphormer_forward.1} parent=1 // pred_check
      _
    $region15: #{graphormer_forward.1} parent=1 // pred_check_branch
      %20 = sbr.rel (0) target = $region17
    $region16: #{graphormer_forward.1} parent=1 // pred_region
      _
    $region17: #{graphormer_forward.1} parent=1 // pred_fallthru
      _
    // Predicated region
    $region18: #{graphormer_forward.1} parent=1 // pred_check
      _
    $region19: #{graphormer_forward.1} parent=1 // pred_check_branch
      %22 = sbr.rel (0) target = $region21
    $region20: #{graphormer_forward.1} parent=1 // pred_region
      _
    $region21: #{graphormer_forward.1} parent=1 // pred_fallthru
      _
    // Predicated region
    $region22: #{graphormer_forward.1} parent=1 // pred_check
      _
    $region23: #{graphormer_forward.1} parent=1 // pred_check_branch
      %24 = sbr.rel (0) target = $region25
    $region24: #{graphormer_forward.1} parent=1 // pred_region
      _
    $region25: #{graphormer_forward.1} parent=1 // pred_fallthru
      _
    // Predicated region
    $region26: #{graphormer_forward.1} parent=1 // pred_check
      _
    $region27: #{graphormer_forward.1} parent=1 // pred_check_branch
      %26 = sbr.rel (0) target = $region29
    $region28: #{graphormer_forward.1} parent=1 // pred_region
      _
    $region29: #{graphormer_forward.1} parent=1 // pred_fallthru
      _
    %v28 = vld [vmem:[%s5] sm:$0xf]
    %v29 = vld [vmem:[%s5 + $0x4] sm:$0xf]
    %v30 = vld [vmem:[%s5 + $0x8] sm:$0xf]
    %v31 = vld [vmem:[%s5 + $0xc] sm:$0xf]
    %v32 = vld [vmem:[%s5 + $0x10] sm:$0xf]
    %v33 = vld [vmem:[%s5 + $0x14] sm:$0xf]
    %v34 = vld [vmem:[%s5 + $0x18] sm:$0xf]
    %v35 = vld [vmem:[%s5 + $0x1c] sm:$0xf]
    %v36 = vld [vmem:[%s5 + $0x20] sm:$0xf]
    %v37 = vld [vmem:[%s5 + $0x24] sm:$0xf]
    %v38 = vld [vmem:[%s5 + $0x28] sm:$0xf]
    %v39 = vld [vmem:[%s5 + $0x2c] sm:$0xf]
    %v40 = vld [vmem:[%s5 + $0x30] sm:$0xf]
    %v41 = vld [vmem:[%s5 + $0x34] sm:$0xf]
    %v42 = vld [vmem:[%s5 + $0x38] sm:$0xf]
    %v43 = vld [vmem:[%s5 + $0x3c] sm:$0xf]
    %v44 = vld [vmem:[%s5 + $0x40] sm:$0xf]
    %v45 = vld [vmem:[%s5 + $0x44] sm:$0xf]
    %v46 = vld [vmem:[%s5 + $0x48] sm:$0xf]
    %v47 = vld [vmem:[%s5 + $0x4c] sm:$0xf]
    %v48 = vld [vmem:[%s5 + $0x50] sm:$0xf]
    %v49 = vld [vmem:[%s5 + $0x54] sm:$0xf]
    %v50 = vld [vmem:[%s6] sm:$0x1]
    %v51 = vld [vmem:[%s6 + $0x1] sm:$0x1]
    %v52 = vld [vmem:[%s6 + $0x2] sm:$0x1]
    %v53 = vld [vmem:[%s6 + $0x3] sm:$0x1]
    %v54 = vld [vmem:[%s6 + $0x4] sm:$0x1]
    %v55 = vld [vmem:[%s6 + $0x5] sm:$0x1]
    %v56 = vld [vmem:[%s6 + $0x6] sm:$0x1]
    %v57 = vld [vmem:[%s6 + $0x7] sm:$0x1]
    %v58 = vld [vmem:[%s6 + $0x8] sm:$0x1]
    %v59 = vld [vmem:[%s6 + $0x9] sm:$0xff]
    %v60 = vld [vmem:[%s1] sm:$0xff]
    %v61 = vld [vmem:[%s1 + $0x8] sm:$0xff]
    %vm62 = vcmp.gt.s32.totalorder %v60, 0
    %v63 = vsel %vm62, %v60, 0
    %vm64 = vcmp.gt.s32.totalorder %v61, 0
    %v65 = vsel %vm64, %v61, 0
    %vm66 = vcmp.lt.s32.totalorder %v63, 7
    %v67 = vsel %vm66, %v63, 7
    %vm68 = vcmp.lt.s32.totalorder %v65, 7
    %v69 = vsel %vm68, %v65, 7
    %v70 = vlaneseq
    %v71 = vand.u32 %v70, 127
    %72 = vset.pattern.permute.xlu0 0
    %73 = vperm.xlu0 %72, %v67
    %v74 = vpop.permute.xlu0 %73
    %75 = vset.pattern.permute.xlu0 0
    %76 = vperm.xlu0 %75, %v69
    %v77 = vpop.permute.xlu0 %76
    %vm78 = vcmp.eq.s32.totalorder %v71, %v74
    %vm79 = vcmp.eq.s32.totalorder %v71, %v77
    %v80 = vsel %vm78, 1, 0
    %v81 = vsel %vm79, 1, 0
    %v82 = vcvt.s32.f32 %v80
    %v83 = vcvt.s32.f32 %v81
    %v84 = vld [vmem:[%s0] sm:$0xff]
    %v85 = vld [vmem:[%s0 + $0x8] sm:$0xff]
    %v86 = vpack.c.bf16 %v85, %v84
    %v87 = vlaneseq
    %v88 = vshrl.u32 %v87, 7
    %v89 = vsub.s32 0, %v88
    %v90 = vrot.slane %v52, %v89
    %v93 = vunpack.c.l.b16 %v36
    %v94 = vunpack.c.l.b16 %v37
    %v95 = vpack.c.b16 %v94, %v93
    %vm97 = vcmask 130048
    %v99 = vsel %vm97, %v86, 0
    %101 = vmatprep.subr.bf16.mxu0 0
    %102 = vmatpush1.bf16.msra.mxu0 0
    %103 = vmatprep.subr.bf16.mxu0 0
    %104 = vmatpush1.bf16.msra.mxu0 0
    %105 = vmatprep.subr.bf16.mxu0 0
    %106 = vmatpush1.bf16.msra.mxu0 0
    %107 = vmatprep.subr.bf16.mxu0 0
    %108 = vmatpush1.bf16.msra.mxu0 0
    %109 = vmatprep.subr.bf16.mxu0 0
    %110 = vmatpush1.bf16.msra.mxu0 0
    %111 = vmatprep.subr.bf16.mxu0 0
    %112 = vmatpush1.bf16.msra.mxu0 0
    %113 = vmatprep.subr.bf16.mxu0 0
    %114 = vmatpush1.bf16.msra.mxu0 0
    %115 = vmatprep.subr.bf16.mxu0 0
    %116 = vmatpush1.bf16.msra.mxu0 %v95
    %117 = vmatprep.subr.bf16.mxu0 0
    %118 = vmatpush2.bf16.msra.mxu0 0
    %119 = vmatprep.subr.bf16.mxu0 0
    %120 = vmatpush2.bf16.msra.mxu0 0
    %121 = vmatprep.subr.bf16.mxu0 0
    %122 = vmatpush2.bf16.msra.mxu0 0
    %123 = vmatprep.subr.bf16.mxu0 0
    %124 = vmatpush2.bf16.msra.mxu0 0
    %125 = vmatprep.subr.bf16.mxu0 0
    %126 = vmatpush2.bf16.msra.mxu0 0
    %127 = vmatprep.subr.bf16.mxu0 0
    %128 = vmatpush2.bf16.msra.mxu0 0
    %129 = vmatprep.subr.bf16.mxu0 0
    %130 = vmatpush2.bf16.msra.mxu0 0
    %131 = vmatprep.subr.bf16.mxu0 0
    %132 = vmatpush2.bf16.msra.mxu0 0
    %133 = vmatprep.mubr.bf16.mxu0 0
    %134 = vmatmul.mubr.bf16.gmra.mxu0 %v99
    %v135 = vpop.f32.mrf.mxu0
    %v136 = vadd.f32 %v90, %v135
    %v137 = vpop.f32.mrf.mxu0
    %v138 = vpop.f32.mrf.mxu0
    %v139 = vadd.f32 %v90, %v138
    %v140 = vpop.f32.mrf.mxu0
    %141 = vdwg.mxu0
    %vm142 = vcmask 64512
    %v144 = vsel %vm142, %v82, 0
    %v147 = vsel %vm142, %v83, 0
    %149 = vmatprep.subr.mxu0 0.0
    %150 = vmatpush1.msra.mxu0 0.0
    %151 = vmatprep.subr.mxu0 0.0
    %152 = vmatpush1.msra.mxu0 0.0
    %153 = vmatprep.subr.mxu0 0.0
    %154 = vmatpush1.msra.mxu0 0.0
    %155 = vmatprep.subr.mxu0 0.0
    %156 = vmatpush1.msra.mxu0 0.0
    %157 = vmatprep.subr.mxu0 0.0
    %158 = vmatpush1.msra.mxu0 0.0
    %159 = vmatprep.subr.mxu0 0.0
    %160 = vmatpush1.msra.mxu0 0.0
    %161 = vmatprep.subr.mxu0 0.0
    %162 = vmatpush1.msra.mxu0 0.0
    %163 = vmatprep.subr.mxu0 0.0
    %164 = vmatpush1.msra.mxu0 0.0
    %165 = vmatprep.subr.mxu0 0.0
    %166 = vmatpush1.msra.mxu0 0.0
    %167 = vmatprep.subr.mxu0 0.0
    %168 = vmatpush1.msra.mxu0 0.0
    %169 = vmatprep.subr.mxu0 0.0
    %170 = vmatpush1.msra.mxu0 0.0
    %171 = vmatprep.subr.mxu0 0.0
    %172 = vmatpush1.msra.mxu0 0.0
    %173 = vmatprep.subr.mxu0 0.0
    %174 = vmatpush1.msra.mxu0 0.0
    %175 = vmatprep.subr.mxu0 0.0
    %176 = vmatpush1.msra.mxu0 0.0
    %177 = vmatprep.subr.mxu0 0.0
    %178 = vmatpush1.msra.mxu0 0.0
    %179 = vmatprep.subr.mxu0 0.0
    %180 = vmatpush1.msra.mxu0 %v59
    %181 = vmatprep.subr.mxu0 0.0
    %182 = vmatpush2.msra.mxu0 0.0
    %183 = vmatprep.subr.mxu0 0.0
    %184 = vmatpush2.msra.mxu0 0.0
    %185 = vmatprep.subr.mxu0 0.0
    %186 = vmatpush2.msra.mxu0 0.0
    %187 = vmatprep.subr.mxu0 0.0
    %188 = vmatpush2.msra.mxu0 0.0
    %189 = vmatprep.subr.mxu0 0.0
    %190 = vmatpush2.msra.mxu0 0.0
    %191 = vmatprep.subr.mxu0 0.0
    %192 = vmatpush2.msra.mxu0 0.0
    %193 = vmatprep.subr.mxu0 0.0
    %194 = vmatpush2.msra.mxu0 0.0
    %195 = vmatprep.subr.mxu0 0.0
    %196 = vmatpush2.msra.mxu0 0.0
    %197 = vmatprep.subr.mxu0 0.0
    %198 = vmatpush2.msra.mxu0 0.0
    %199 = vmatprep.subr.mxu0 0.0
    %200 = vmatpush2.msra.mxu0 0.0
    %201 = vmatprep.subr.mxu0 0.0
    %202 = vmatpush2.msra.mxu0 0.0
    %203 = vmatprep.subr.mxu0 0.0
    %204 = vmatpush2.msra.mxu0 0.0
    %205 = vmatprep.subr.mxu0 0.0
    %206 = vmatpush2.msra.mxu0 0.0
    %207 = vmatprep.subr.mxu0 0.0
    %208 = vmatpush2.msra.mxu0 0.0
    %209 = vmatprep.subr.mxu0 0.0
    %210 = vmatpush2.msra.mxu0 0.0
    %211 = vmatprep.subr.mxu0 0.0
    %212 = vmatpush2.msra.mxu0 0.0
    %213 = vmatprep.mubr.f32.mxu0 0.0
    %214 = vmatmul.mubr.f32.gmra.mxu0 %v144
    %v215 = vpop.f32.mrf.mxu0
    %v216 = vadd.f32 0.0, %v215
    %v217 = vpop.f32.mrf.mxu0
    %218 = vmatprep.mubr.f32.mxu0 0.0
    %219 = vmatmul.mubr.f32.gmra.mxu0 %v147
    %v220 = vpop.f32.mrf.mxu0
    %v221 = vadd.f32 0.0, %v220
    %v222 = vpop.f32.mrf.mxu0
    %223 = vdwg.mxu0
    %v224 = vadd.f32 %v136, %v216
    %v225 = vadd.f32 %v139, %v221
    %vm226 = vcmask 261120
    %v227 = vsel %vm226, %v224, 0.0
    %228 = vadd.xlane.f32.xlu0 %v227
    %v229 = vpop.xlane.xlu0 %228
    %v230 = vsel %vm226, %v225, 0.0
    %231 = vadd.xlane.f32.xlu0 %v230
    %v232 = vpop.xlane.xlu0 %231
    %v233 = vrcp.pop 32.0
    %v234 = vmul.f32 %v229, %v233
    %v235 = vmul.f32 %v232, %v233
    %v236 = vsub.f32 %v224, %v234
    %v237 = vsub.f32 %v225, %v235
    %v238 = vmul.f32 %v236, %v236
    %v239 = vmul.f32 %v237, %v237
    %v240 = vsel %vm226, %v238, 0.0
    %241 = vadd.xlane.f32.xlu0 %v240
    %v242 = vpop.xlane.xlu0 %241
    %v243 = vsel %vm226, %v239, 0.0
    %244 = vadd.xlane.f32.xlu0 %v243
    %v245 = vpop.xlane.xlu0 %244
    %v246 = vmul.f32 %v242, %v233
    %v247 = vmul.f32 %v245, %v233
    %v248 = vadd.f32 %v246, 1e-05
    %v249 = vadd.f32 %v247, 1e-05
    %v250 = vrsqrt.pop %v248
    %v251 = vrsqrt.pop %v249
    %v252 = vmul.f32 %v236, %v250
    %v253 = vmul.f32 %v237, %v251
    %v254 = vlaneseq
    %v255 = vshrl.u32 %v254, 7
    %v256 = vsub.s32 0, %v255
    %v257 = vrot.slane %v55, %v256
    %v258 = vmul.f32 %v252, %v257
    %v259 = vmul.f32 %v253, %v257
    %v260 = vlaneseq
    %v261 = vshrl.u32 %v260, 7
    %v262 = vsub.s32 0, %v261
    %v263 = vrot.slane %v56, %v262
    %v264 = vadd.f32 %v258, %v263
    %v265 = vadd.f32 %v259, %v263
    %v266 = vpack.c.bf16 %v265, %v264
    %v267 = vlaneseq
    %v268 = vshrl.u32 %v267, 7
    %v269 = vsub.s32 0, %v268
    %v270 = vrot.slane %v50, %v269
    %v275 = vunpack.c.l.b16 %v28
    %v276 = vunpack.c.l.b16 %v29
    %v277 = vunpack.c.l.b16 %v30
    %v278 = vunpack.c.l.b16 %v31
    %v279 = vpack.c.b16 %v276, %v275
    %v280 = vpack.c.b16 %v278, %v277
    %v284 = vsel %vm226, %v266, 0
    %286 = vmatprep.subr.bf16.mxu0 0
    %287 = vmatpush1.bf16.msra.mxu0 0
    %288 = vmatprep.subr.bf16.mxu0 0
    %289 = vmatpush1.bf16.msra.mxu0 0
    %290 = vmatprep.subr.bf16.mxu0 0
    %291 = vmatpush1.bf16.msra.mxu0 0
    %292 = vmatprep.subr.bf16.mxu0 0
    %293 = vmatpush1.bf16.msra.mxu0 0
    %294 = vmatprep.subr.bf16.mxu0 0
    %295 = vmatpush1.bf16.msra.mxu0 0
    %296 = vmatprep.subr.bf16.mxu0 0
    %297 = vmatpush1.bf16.msra.mxu0 0
    %298 = vmatprep.subr.bf16.mxu0 0
    %299 = vmatpush1.bf16.msra.mxu0 %v280
    %300 = vmatprep.subr.bf16.mxu0 0
    %301 = vmatpush1.bf16.msra.mxu0 %v279
    %302 = vmatprep.subr.bf16.mxu0 0
    %303 = vmatpush2.bf16.msra.mxu0 0
    %304 = vmatprep.subr.bf16.mxu0 0
    %305 = vmatpush2.bf16.msra.mxu0 0
    %306 = vmatprep.subr.bf16.mxu0 0
    %307 = vmatpush2.bf16.msra.mxu0 0
    %308 = vmatprep.subr.bf16.mxu0 0
    %309 = vmatpush2.bf16.msra.mxu0 0
    %310 = vmatprep.subr.bf16.mxu0 0
    %311 = vmatpush2.bf16.msra.mxu0 0
    %312 = vmatprep.subr.bf16.mxu0 0
    %313 = vmatpush2.bf16.msra.mxu0 0
    %314 = vmatprep.subr.bf16.mxu0 0
    %315 = vmatpush2.bf16.msra.mxu0 0
    %316 = vmatprep.subr.bf16.mxu0 0
    %317 = vmatpush2.bf16.msra.mxu0 0
    %318 = vmatprep.mubr.bf16.mxu0 0
    %319 = vmatmul.mubr.bf16.gmra.mxu0 %v284
    %v320 = vpop.f32.mrf.mxu0
    %v321 = vadd.f32 %v270, %v320
    %v322 = vpop.f32.mrf.mxu0
    %v323 = vpop.f32.mrf.mxu0
    %v324 = vadd.f32 %v270, %v323
    %v325 = vpop.f32.mrf.mxu0
    %326 = vdwg.mxu0
    %v327 = vld [vmem:[%s2] sm:$0xff]
    %vm328 = vcmp.ge.s32.totalorder %v327, 0
    %v329 = vsel %vm328, 1, 0
    %v330 = vcvt.s32.f32 %v329
    %332 = vrot.lane.b32.xlu0 %v330, 120
    %v333 = vpop.permute.xlu0 %332
    %v335 = vadd.f32 %v330, %v333
    %336 = vrot.lane.b32.xlu0 %v330, 112
    %v337 = vpop.permute.xlu0 %336
    %v339 = vadd.f32 %v335, %v337
    %340 = vrot.lane.b32.xlu0 %v330, 104
    %v341 = vpop.permute.xlu0 %340
    %v343 = vadd.f32 %v339, %v341
    %344 = vrot.lane.b32.xlu0 %v330, 96
    %v345 = vpop.permute.xlu0 %344
    %v347 = vadd.f32 %v343, %v345
    %v348 = vmax.f32 %v347, 1.0
    %v349 = vrcp.pop %v348
    %v350 = vmul.f32 1.0, %v349
    %352 = vrot.lane.b32.xlu0 %v350, 8
    %v353 = vpop.permute.xlu0 %352
    %355 = vrot.lane.b32.xlu0 %v350, 16
    %v356 = vpop.permute.xlu0 %355
    %358 = vrot.lane.b32.xlu0 %v350, 24
    %v359 = vpop.permute.xlu0 %358
    %361 = vrot.lane.b32.xlu0 %v350, 32
    %v362 = vpop.permute.xlu0 %361
    %v364 = vsel %vm142, %v350, %v353
    %v365 = vsel %vm97, %v364, %v356
    %vm366 = vcmask 195584
    %v367 = vsel %vm366, %v365, %v359
    %v368 = vsel %vm226, %v367, %v362
    %v369 = vmul.f32 %v330, %v368
    %vm370 = vcmp.eq.s32.totalorder %v327, 0
    %v371 = vsel %vm370, 1, 0
    %v372 = vcvt.s32.f32 %v371
    %v373 = vmul.f32 %v372, %v369
    %vm374 = vcmp.eq.s32.totalorder %v327, 1
    %v375 = vsel %vm374, 1, 0
    %v376 = vcvt.s32.f32 %v375
    %v377 = vmul.f32 %v376, %v369
    %vm378 = vcmp.eq.s32.totalorder %v327, 2
    %v379 = vsel %vm378, 1, 0
    %v380 = vcvt.s32.f32 %v379
    %v381 = vmul.f32 %v380, %v369
    %vm382 = vcmp.eq.s32.totalorder %v327, 3
    %v383 = vsel %vm382, 1, 0
    %v384 = vcvt.s32.f32 %v383
    %v385 = vmul.f32 %v384, %v369
    %vm386 = vcmp.eq.s32.totalorder %v327, 4
    %v387 = vsel %vm386, 1, 0
    %v388 = vcvt.s32.f32 %v387
    %v389 = vmul.f32 %v388, %v369
    %vm390 = vcmp.eq.s32.totalorder %v327, 5
    %v391 = vsel %vm390, 1, 0
    %v392 = vcvt.s32.f32 %v391
    %v393 = vmul.f32 %v392, %v369
    %vm394 = vcmp.eq.s32.totalorder %v327, 6
    %v395 = vsel %vm394, 1, 0
    %v396 = vcvt.s32.f32 %v395
    %v397 = vmul.f32 %v396, %v369
    %vm398 = vcmp.eq.s32.totalorder %v327, 7
    %v399 = vsel %vm398, 1, 0
    %v400 = vcvt.s32.f32 %v399
    %v401 = vmul.f32 %v400, %v369
    %vm402 = vcmp.eq.s32.totalorder %v327, 8
    %v403 = vsel %vm402, 1, 0
    %v404 = vcvt.s32.f32 %v403
    %v405 = vmul.f32 %v404, %v369
    %vm406 = vcmp.eq.s32.totalorder %v327, 9
    %v407 = vsel %vm406, 1, 0
    %v408 = vcvt.s32.f32 %v407
    %v409 = vmul.f32 %v408, %v369
    %vm410 = vcmp.eq.s32.totalorder %v327, 10
    %v411 = vsel %vm410, 1, 0
    %v412 = vcvt.s32.f32 %v411
    %v413 = vmul.f32 %v412, %v369
    %vm414 = vcmp.eq.s32.totalorder %v327, 11
    %v415 = vsel %vm414, 1, 0
    %v416 = vcvt.s32.f32 %v415
    %v417 = vmul.f32 %v416, %v369
    %v418 = vld [vmem:[%s3] sm:$0xff]
    %vm419 = vcmp.ge.s32.totalorder %v418, 0
    %v420 = vsel %vm419, 1, 0
    %421 = vrot.lane.b32.xlu0 %v420, 120
    %v422 = vpop.permute.xlu0 %421
    %v423 = vadd.s32 %v420, %v422
    %424 = vrot.lane.b32.xlu0 %v420, 112
    %v425 = vpop.permute.xlu0 %424
    %v426 = vadd.s32 %v423, %v425
    %427 = vrot.lane.b32.xlu0 %v420, 104
    %v428 = vpop.permute.xlu0 %427
    %v429 = vadd.s32 %v426, %v428
    %430 = vrot.lane.b32.xlu0 %v420, 96
    %v431 = vpop.permute.xlu0 %430
    %v432 = vadd.s32 %v429, %v431
    %vm433 = vcmp.eq.s32.totalorder %v432, 0
    %v434 = vsel %vm433, 1, 0
    %v435 = vcvt.s32.f32 %v434
    %vm436 = vcmp.eq.s32.totalorder %v432, 1
    %v437 = vsel %vm436, 1, 0
    %v438 = vcvt.s32.f32 %v437
    %vm439 = vcmp.eq.s32.totalorder %v432, 2
    %v440 = vsel %vm439, 1, 0
    %v441 = vcvt.s32.f32 %v440
    %vm442 = vcmp.eq.s32.totalorder %v432, 3
    %v443 = vsel %vm442, 1, 0
    %v444 = vcvt.s32.f32 %v443
    %vm445 = vcmp.eq.s32.totalorder %v432, 4
    %v446 = vsel %vm445, 1, 0
    %v447 = vcvt.s32.f32 %v446
    %vm448 = vcmp.eq.s32.totalorder %v432, 5
    %v449 = vsel %vm448, 1, 0
    %v450 = vcvt.s32.f32 %v449
    %452 = vrot.lane.b32.xlu0 %v377, 40
    %v453 = vpop.permute.xlu0 %452
    %456 = vrot.lane.b32.xlu0 %v381, 80
    %v457 = vpop.permute.xlu0 %456
    %460 = vrot.lane.b32.xlu0 %v385, 120
    %v461 = vpop.permute.xlu0 %460
    %464 = vrot.lane.b32.xlu0 %v389, 32
    %v465 = vpop.permute.xlu0 %464
    %468 = vrot.lane.b32.xlu0 %v393, 72
    %v469 = vpop.permute.xlu0 %468
    %472 = vrot.lane.b32.xlu0 %v397, 112
    %v473 = vpop.permute.xlu0 %472
    %476 = vrot.lane.b32.xlu0 %v401, 24
    %v477 = vpop.permute.xlu0 %476
    %480 = vrot.lane.b32.xlu0 %v405, 64
    %v481 = vpop.permute.xlu0 %480
    %484 = vrot.lane.b32.xlu0 %v409, 104
    %v485 = vpop.permute.xlu0 %484
    %488 = vrot.lane.b32.xlu0 %v413, 16
    %v489 = vpop.permute.xlu0 %488
    %492 = vrot.lane.b32.xlu0 %v417, 56
    %v493 = vpop.permute.xlu0 %492
    %496 = vrot.lane.b32.xlu0 %v435, 96
    %v497 = vpop.permute.xlu0 %496
    %500 = vrot.lane.b32.xlu0 %v438, 104
    %v501 = vpop.permute.xlu0 %500
    %504 = vrot.lane.b32.xlu0 %v441, 112
    %v505 = vpop.permute.xlu0 %504
    %508 = vrot.lane.b32.xlu0 %v444, 120
    %v509 = vpop.permute.xlu0 %508
    %vm511 = vcmask 326656
    %v512 = vsel %vm511, %v373, %v453
    %vm513 = vcmask 654336
    %v514 = vsel %vm513, %v512, %v457
    %vm515 = vcmask 982016
    %v516 = vsel %vm515, %v514, %v461
    %v517 = vsel %vm226, %v461, %v465
    %vm518 = vcmask 588800
    %v519 = vsel %vm518, %v517, %v469
    %vm520 = vcmask 916480
    %v521 = vsel %vm520, %v519, %v473
    %v522 = vsel %vm366, %v473, %v477
    %vm523 = vcmask 523264
    %v524 = vsel %vm523, %v522, %v481
    %vm525 = vcmask 850944
    %v526 = vsel %vm525, %v524, %v485
    %v527 = vsel %vm97, %v485, %v489
    %vm528 = vcmask 457728
    %v529 = vsel %vm528, %v527, %v493
    %vm530 = vcmask 785408
    %v531 = vsel %vm530, %v529, %v497
    %v532 = vsel %vm525, %v531, %v501
    %v533 = vsel %vm520, %v532, %v505
    %v534 = vsel %vm515, %v533, %v509
    %536 = vrot.lane.b32.xlu0 %v450, 8
    %v537 = vpop.permute.xlu0 %536
    %v539 = vsel %vm142, %v447, %v537
    %v540 = vpack.c.bf16 %v516, %v516
    %v541 = vpack.c.bf16 %v521, %v521
    %v542 = vpack.c.bf16 %v526, %v526
    %v543 = vpack.c.bf16 %v534, %v534
    %v544 = vpack.c.bf16 %v539, %v539
    %v545 = vld [vmem:[%s4] sm:$0xf]
    %v546 = vld [vmem:[%s4 + $0x4] sm:$0xf]
    %v547 = vld [vmem:[%s4 + $0x8] sm:$0xf]
    %v548 = vld [vmem:[%s4 + $0xc] sm:$0xf]
    %v549 = vld [vmem:[%s4 + $0x10] sm:$0xf]
    %v550 = vld [vmem:[%s4 + $0x14] sm:$0xf]
    %v551 = vld [vmem:[%s4 + $0x18] sm:$0xf]
    %v552 = vld [vmem:[%s4 + $0x1c] sm:$0xf]
    %v553 = vld [vmem:[%s4 + $0x20] sm:$0xf]
    %v554 = vld [vmem:[%s4 + $0x24] sm:$0xf]
    %v555 = vld [vmem:[%s4 + $0x28] sm:$0xf]
    %v556 = vld [vmem:[%s4 + $0x2c] sm:$0xf]
    %v557 = vld [vmem:[%s4 + $0x30] sm:$0xf]
    %v558 = vld [vmem:[%s4 + $0x34] sm:$0xf]
    %v559 = vld [vmem:[%s4 + $0x38] sm:$0xf]
    %v560 = vld [vmem:[%s4 + $0x3c] sm:$0xf]
    %v561 = vld [vmem:[%s4 + $0x40] sm:$0xf]
    %v562 = vld [vmem:[%s4 + $0x44] sm:$0xf]
    %v563 = vld [vmem:[%s4 + $0x48] sm:$0xf]
    %v564 = vld [vmem:[%s4 + $0x4c] sm:$0xf]
    %v565 = vld [vmem:[%s4 + $0x50] sm:$0xf]
    %v566 = vld [vmem:[%s4 + $0x54] sm:$0xf]
    %v567 = vld [vmem:[%s4 + $0x58] sm:$0xf]
    %v568 = vld [vmem:[%s4 + $0x5c] sm:$0xf]
    %v569 = vld [vmem:[%s4 + $0x60] sm:$0xf]
    %v570 = vld [vmem:[%s4 + $0x64] sm:$0xf]
    %v571 = vld [vmem:[%s4 + $0x68] sm:$0xf]
    %v572 = vld [vmem:[%s4 + $0x6c] sm:$0xf]
    %v573 = vld [vmem:[%s4 + $0x70] sm:$0xf]
    %v574 = vld [vmem:[%s4 + $0x74] sm:$0xf]
    %v575 = vld [vmem:[%s4 + $0x78] sm:$0xf]
    %v576 = vld [vmem:[%s4 + $0x7c] sm:$0xf]
    %v577 = vld [vmem:[%s4 + $0x80] sm:$0xf]
    %v578 = vld [vmem:[%s4 + $0x84] sm:$0xf]
    %v579 = vld [vmem:[%s4 + $0x88] sm:$0xf]
    %v580 = vld [vmem:[%s4 + $0x8c] sm:$0xf]
    %v581 = vld [vmem:[%s4 + $0x90] sm:$0xf]
    %v582 = vld [vmem:[%s4 + $0x94] sm:$0xf]
    %v583 = vld [vmem:[%s4 + $0x98] sm:$0xf]
    %v584 = vld [vmem:[%s4 + $0x9c] sm:$0xf]
    %v585 = vld [vmem:[%s4 + $0xa0] sm:$0xf]
    %v586 = vld [vmem:[%s4 + $0xa4] sm:$0xf]
    %v587 = vld [vmem:[%s4 + $0xa8] sm:$0xf]
    %v588 = vld [vmem:[%s4 + $0xac] sm:$0xf]
    %v589 = vld [vmem:[%s4 + $0xb0] sm:$0xf]
    %v590 = vld [vmem:[%s4 + $0xb4] sm:$0xf]
    %v591 = vld [vmem:[%s4 + $0xb8] sm:$0xf]
    %v592 = vld [vmem:[%s4 + $0xbc] sm:$0xf]
    %v593 = vld [vmem:[%s4 + $0xc0] sm:$0xf]
    %v594 = vld [vmem:[%s4 + $0xc4] sm:$0xf]
    %v595 = vld [vmem:[%s4 + $0xc8] sm:$0xf]
    %v596 = vld [vmem:[%s4 + $0xcc] sm:$0xf]
    %v597 = vld [vmem:[%s4 + $0xd0] sm:$0xf]
    %v598 = vld [vmem:[%s4 + $0xd4] sm:$0xf]
    %v599 = vld [vmem:[%s4 + $0xd8] sm:$0xf]
    %v600 = vld [vmem:[%s4 + $0xdc] sm:$0xf]
    %v601 = vld [vmem:[%s4 + $0xe0] sm:$0xf]
    %v602 = vld [vmem:[%s4 + $0xe4] sm:$0xf]
    %v603 = vld [vmem:[%s4 + $0xe8] sm:$0xf]
    %v604 = vld [vmem:[%s4 + $0xec] sm:$0xf]
    %v605 = vld [vmem:[%s4 + $0xf0] sm:$0xf]
    %v606 = vld [vmem:[%s4 + $0xf4] sm:$0xf]
    %v607 = vld [vmem:[%s4 + $0xf8] sm:$0xf]
    %v608 = vld [vmem:[%s4 + $0xfc] sm:$0xf]
    %v609 = vld [vmem:[%s4 + $0x100] sm:$0xf]
    %v610 = vld [vmem:[%s4 + $0x104] sm:$0xf]
    %v677 = vunpack.c.l.b16 %v545
    %v678 = vunpack.c.l.b16 %v546
    %v679 = vunpack.c.l.b16 %v547
    %v680 = vunpack.c.l.b16 %v548
    %v681 = vunpack.c.l.b16 %v549
    %v682 = vunpack.c.l.b16 %v550
    %v683 = vunpack.c.l.b16 %v551
    %v684 = vunpack.c.l.b16 %v552
    %v685 = vunpack.c.l.b16 %v553
    %v686 = vunpack.c.l.b16 %v554
    %v687 = vunpack.c.l.b16 %v555
    %v688 = vunpack.c.l.b16 %v556
    %v689 = vunpack.c.l.b16 %v557
    %v690 = vunpack.c.l.b16 %v558
    %v691 = vunpack.c.l.b16 %v559
    %v692 = vunpack.c.l.b16 %v560
    %v693 = vunpack.c.l.b16 %v561
    %v694 = vunpack.c.l.b16 %v562
    %v695 = vunpack.c.l.b16 %v563
    %v696 = vunpack.c.l.b16 %v564
    %v697 = vunpack.c.l.b16 %v565
    %v698 = vunpack.c.l.b16 %v566
    %v699 = vunpack.c.l.b16 %v567
    %v700 = vunpack.c.l.b16 %v568
    %v701 = vunpack.c.l.b16 %v569
    %v702 = vunpack.c.l.b16 %v570
    %v703 = vunpack.c.l.b16 %v571
    %v704 = vunpack.c.l.b16 %v572
    %v705 = vunpack.c.l.b16 %v573
    %v706 = vunpack.c.l.b16 %v574
    %v707 = vunpack.c.l.b16 %v575
    %v708 = vunpack.c.l.b16 %v576
    %v709 = vunpack.c.l.b16 %v577
    %v710 = vunpack.c.l.b16 %v578
    %v711 = vunpack.c.l.b16 %v579
    %v712 = vunpack.c.l.b16 %v580
    %v713 = vunpack.c.l.b16 %v581
    %v714 = vunpack.c.l.b16 %v582
    %v715 = vunpack.c.l.b16 %v583
    %v716 = vunpack.c.l.b16 %v584
    %v717 = vunpack.c.l.b16 %v585
    %v718 = vunpack.c.l.b16 %v586
    %v719 = vunpack.c.l.b16 %v587
    %v720 = vunpack.c.l.b16 %v588
    %v721 = vunpack.c.l.b16 %v589
    %v722 = vunpack.c.l.b16 %v590
    %v723 = vunpack.c.l.b16 %v591
    %v724 = vunpack.c.l.b16 %v592
    %v725 = vunpack.c.l.b16 %v593
    %v726 = vunpack.c.l.b16 %v594
    %v727 = vunpack.c.l.b16 %v595
    %v728 = vunpack.c.l.b16 %v596
    %v729 = vunpack.c.l.b16 %v597
    %v730 = vunpack.c.l.b16 %v598
    %v731 = vunpack.c.l.b16 %v599
    %v732 = vunpack.c.l.b16 %v600
    %v733 = vunpack.c.l.b16 %v601
    %v734 = vunpack.c.l.b16 %v602
    %v735 = vunpack.c.l.b16 %v603
    %v736 = vunpack.c.l.b16 %v604
    %v737 = vunpack.c.l.b16 %v605
    %v738 = vunpack.c.l.b16 %v606
    %v739 = vunpack.c.l.b16 %v607
    %v740 = vunpack.c.l.b16 %v608
    %v741 = vunpack.c.l.b16 %v609
    %v742 = vunpack.c.l.b16 %v610
    %v743 = vpack.c.b16 %v678, %v677
    %v744 = vpack.c.b16 %v680, %v679
    %v745 = vpack.c.b16 %v682, %v681
    %v746 = vpack.c.b16 %v684, %v683
    %v747 = vpack.c.b16 %v686, %v685
    %v748 = vpack.c.b16 %v688, %v687
    %v749 = vpack.c.b16 %v690, %v689
    %v750 = vpack.c.b16 %v692, %v691
    %v751 = vpack.c.b16 %v694, %v693
    %v752 = vpack.c.b16 %v696, %v695
    %v753 = vpack.c.b16 %v698, %v697
    %v754 = vpack.c.b16 %v700, %v699
    %v755 = vpack.c.b16 %v702, %v701
    %v756 = vpack.c.b16 %v704, %v703
    %v757 = vpack.c.b16 %v706, %v705
    %v758 = vpack.c.b16 %v708, %v707
    %v759 = vpack.c.b16 %v710, %v709
    %v760 = vpack.c.b16 %v712, %v711
    %v761 = vpack.c.b16 %v714, %v713
    %v762 = vpack.c.b16 %v716, %v715
    %v763 = vpack.c.b16 %v718, %v717
    %v764 = vpack.c.b16 %v720, %v719
    %v765 = vpack.c.b16 %v722, %v721
    %v766 = vpack.c.b16 %v724, %v723
    %v767 = vpack.c.b16 %v726, %v725
    %v768 = vpack.c.b16 %v728, %v727
    %v769 = vpack.c.b16 %v730, %v729
    %v770 = vpack.c.b16 %v732, %v731
    %v771 = vpack.c.b16 %v734, %v733
    %v772 = vpack.c.b16 %v736, %v735
    %v773 = vpack.c.b16 %v738, %v737
    %v774 = vpack.c.b16 %v740, %v739
    %v775 = vpack.c.b16 %v742, %v741
    %v810 = vsel %vm97, %v544, 0
    %812 = vmatprep.subr.bf16.mxu0 0
    %813 = vmatpush1.bf16.msra.mxu0 %v750
    %814 = vmatprep.subr.bf16.mxu0 0
    %815 = vmatpush1.bf16.msra.mxu0 %v749
    %816 = vmatprep.subr.bf16.mxu0 0
    %817 = vmatpush1.bf16.msra.mxu0 %v748
    %818 = vmatprep.subr.bf16.mxu0 0
    %819 = vmatpush1.bf16.msra.mxu0 %v747
    %820 = vmatprep.subr.bf16.mxu0 0
    %821 = vmatpush1.bf16.msra.mxu0 %v746
    %822 = vmatprep.subr.bf16.mxu0 0
    %823 = vmatpush1.bf16.msra.mxu0 %v745
    %824 = vmatprep.subr.bf16.mxu0 0
    %825 = vmatpush1.bf16.msra.mxu0 %v744
    %826 = vmatprep.subr.bf16.mxu0 0
    %827 = vmatpush1.bf16.msra.mxu0 %v743
    %828 = vmatprep.subr.bf16.mxu0 0
    %829 = vmatpush2.bf16.msra.mxu0 %v758
    %830 = vmatprep.subr.bf16.mxu0 0
    %831 = vmatpush2.bf16.msra.mxu0 %v757
    %832 = vmatprep.subr.bf16.mxu0 0
    %833 = vmatpush2.bf16.msra.mxu0 %v756
    %834 = vmatprep.subr.bf16.mxu0 0
    %835 = vmatpush2.bf16.msra.mxu0 %v755
    %836 = vmatprep.subr.bf16.mxu0 0
    %837 = vmatpush2.bf16.msra.mxu0 %v754
    %838 = vmatprep.subr.bf16.mxu0 0
    %839 = vmatpush2.bf16.msra.mxu0 %v753
    %840 = vmatprep.subr.bf16.mxu0 0
    %841 = vmatpush2.bf16.msra.mxu0 %v752
    %842 = vmatprep.subr.bf16.mxu0 0
    %843 = vmatpush2.bf16.msra.mxu0 %v751
    %844 = vmatprep.mubr.bf16.mxu0 %v541
    %845 = vmatmul.mubr.bf16.gmra.mxu0 %v540
    %v846 = vpop.f32.mrf.mxu0
    %v847 = vadd.f32 0.0, %v846
    %v848 = vpop.f32.mrf.mxu0
    %v849 = vpop.f32.mrf.mxu0
    %v850 = vpop.f32.mrf.mxu0
    %851 = vdwg.mxu0
    %852 = vmatprep.subr.bf16.mxu0 0
    %853 = vmatpush1.bf16.msra.mxu0 %v766
    %854 = vmatprep.subr.bf16.mxu0 0
    %855 = vmatpush1.bf16.msra.mxu0 %v765
    %856 = vmatprep.subr.bf16.mxu0 0
    %857 = vmatpush1.bf16.msra.mxu0 %v764
    %858 = vmatprep.subr.bf16.mxu0 0
    %859 = vmatpush1.bf16.msra.mxu0 %v763
    %860 = vmatprep.subr.bf16.mxu0 0
    %861 = vmatpush1.bf16.msra.mxu0 %v762
    %862 = vmatprep.subr.bf16.mxu0 0
    %863 = vmatpush1.bf16.msra.mxu0 %v761
    %864 = vmatprep.subr.bf16.mxu0 0
    %865 = vmatpush1.bf16.msra.mxu0 %v760
    %866 = vmatprep.subr.bf16.mxu0 0
    %867 = vmatpush1.bf16.msra.mxu0 %v759
    %868 = vmatprep.subr.bf16.mxu0 0
    %869 = vmatpush2.bf16.msra.mxu0 %v774
    %870 = vmatprep.subr.bf16.mxu0 0
    %871 = vmatpush2.bf16.msra.mxu0 %v773
    %872 = vmatprep.subr.bf16.mxu0 0
    %873 = vmatpush2.bf16.msra.mxu0 %v772
    %874 = vmatprep.subr.bf16.mxu0 0
    %875 = vmatpush2.bf16.msra.mxu0 %v771
    %876 = vmatprep.subr.bf16.mxu0 0
    %877 = vmatpush2.bf16.msra.mxu0 %v770
    %878 = vmatprep.subr.bf16.mxu0 0
    %879 = vmatpush2.bf16.msra.mxu0 %v769
    %880 = vmatprep.subr.bf16.mxu0 0
    %881 = vmatpush2.bf16.msra.mxu0 %v768
    %882 = vmatprep.subr.bf16.mxu0 0
    %883 = vmatpush2.bf16.msra.mxu0 %v767
    %884 = vmatprep.mubr.bf16.mxu0 %v543
    %885 = vmatmul.mubr.bf16.gmra.mxu0 %v542
    %v886 = vpop.f32.mrf.mxu0
    %v887 = vadd.f32 %v847, %v886
    %v888 = vpop.f32.mrf.mxu0
    %v889 = vpop.f32.mrf.mxu0
    %v890 = vpop.f32.mrf.mxu0
    %891 = vdwg.mxu0
    %892 = vmatprep.subr.bf16.mxu0 0
    %893 = vmatpush1.bf16.msra.mxu0 0
    %894 = vmatprep.subr.bf16.mxu0 0
    %895 = vmatpush1.bf16.msra.mxu0 0
    %896 = vmatprep.subr.bf16.mxu0 0
    %897 = vmatpush1.bf16.msra.mxu0 0
    %898 = vmatprep.subr.bf16.mxu0 0
    %899 = vmatpush1.bf16.msra.mxu0 0
    %900 = vmatprep.subr.bf16.mxu0 0
    %901 = vmatpush1.bf16.msra.mxu0 0
    %902 = vmatprep.subr.bf16.mxu0 0
    %903 = vmatpush1.bf16.msra.mxu0 0
    %904 = vmatprep.subr.bf16.mxu0 0
    %905 = vmatpush1.bf16.msra.mxu0 0
    %906 = vmatprep.subr.bf16.mxu0 0
    %907 = vmatpush1.bf16.msra.mxu0 %v775
    %908 = vmatprep.subr.bf16.mxu0 0
    %909 = vmatpush2.bf16.msra.mxu0 0
    %910 = vmatprep.subr.bf16.mxu0 0
    %911 = vmatpush2.bf16.msra.mxu0 0
    %912 = vmatprep.subr.bf16.mxu0 0
    %913 = vmatpush2.bf16.msra.mxu0 0
    %914 = vmatprep.subr.bf16.mxu0 0
    %915 = vmatpush2.bf16.msra.mxu0 0
    %916 = vmatprep.subr.bf16.mxu0 0
    %917 = vmatpush2.bf16.msra.mxu0 0
    %918 = vmatprep.subr.bf16.mxu0 0
    %919 = vmatpush2.bf16.msra.mxu0 0
    %920 = vmatprep.subr.bf16.mxu0 0
    %921 = vmatpush2.bf16.msra.mxu0 0
    %922 = vmatprep.subr.bf16.mxu0 0
    %923 = vmatpush2.bf16.msra.mxu0 0
    %924 = vmatprep.mubr.bf16.mxu0 0
    %925 = vmatmul.mubr.bf16.gmra.mxu0 %v810
    %v926 = vpop.f32.mrf.mxu0
    %v927 = vadd.f32 %v887, %v926
    %v928 = vpop.f32.mrf.mxu0
    %v929 = vpop.f32.mrf.mxu0
    %v930 = vpop.f32.mrf.mxu0
    %931 = vdwg.mxu0
    %933 = vrot.lane.b32.xlu0 %v321, 96
    %v934 = vpop.permute.xlu0 %933
    %v935 = vsel %vm142, %v321, 0
    %v937 = vsel %vm142, %v934, 0
    %939 = vmatprep.subr.mxu0 0.0
    %940 = vmatpush1.xpose.msra.mxu0 0.0
    %941 = vmatprep.subr.mxu0 0.0
    %942 = vmatpush1.xpose.msra.mxu0 0.0
    %943 = vmatprep.subr.mxu0 0.0
    %944 = vmatpush1.xpose.msra.mxu0 0.0
    %945 = vmatprep.subr.mxu0 0.0
    %946 = vmatpush1.xpose.msra.mxu0 0.0
    %947 = vmatprep.subr.mxu0 0.0
    %948 = vmatpush1.xpose.msra.mxu0 0.0
    %949 = vmatprep.subr.mxu0 0.0
    %950 = vmatpush1.xpose.msra.mxu0 0.0
    %951 = vmatprep.subr.mxu0 0.0
    %952 = vmatpush1.xpose.msra.mxu0 0.0
    %953 = vmatprep.subr.mxu0 0.0
    %954 = vmatpush1.xpose.msra.mxu0 0.0
    %955 = vmatprep.subr.mxu0 0.0
    %956 = vmatpush1.xpose.msra.mxu0 0.0
    %957 = vmatprep.subr.mxu0 0.0
    %958 = vmatpush1.xpose.msra.mxu0 0.0
    %959 = vmatprep.subr.mxu0 0.0
    %960 = vmatpush1.xpose.msra.mxu0 0.0
    %961 = vmatprep.subr.mxu0 0.0
    %962 = vmatpush1.xpose.msra.mxu0 0.0
    %963 = vmatprep.subr.mxu0 0.0
    %964 = vmatpush1.xpose.msra.mxu0 0.0
    %965 = vmatprep.subr.mxu0 0.0
    %966 = vmatpush1.xpose.msra.mxu0 0.0
    %967 = vmatprep.subr.mxu0 0.0
    %968 = vmatpush1.xpose.msra.mxu0 0.0
    %969 = vmatprep.subr.mxu0 0.0
    %970 = vmatpush1.xpose.msra.mxu0 %v937
    %971 = vmatprep.subr.mxu0 0.0
    %972 = vmatpush2.xpose.msra.mxu0 0.0
    %973 = vmatprep.subr.mxu0 0.0
    %974 = vmatpush2.xpose.msra.mxu0 0.0
    %975 = vmatprep.subr.mxu0 0.0
    %976 = vmatpush2.xpose.msra.mxu0 0.0
    %977 = vmatprep.subr.mxu0 0.0
    %978 = vmatpush2.xpose.msra.mxu0 0.0
    %979 = vmatprep.subr.mxu0 0.0
    %980 = vmatpush2.xpose.msra.mxu0 0.0
    %981 = vmatprep.subr.mxu0 0.0
    %982 = vmatpush2.xpose.msra.mxu0 0.0
    %983 = vmatprep.subr.mxu0 0.0
    %984 = vmatpush2.xpose.msra.mxu0 0.0
    %985 = vmatprep.subr.mxu0 0.0
    %986 = vmatpush2.xpose.msra.mxu0 0.0
    %987 = vmatprep.subr.mxu0 0.0
    %988 = vmatpush2.xpose.msra.mxu0 0.0
    %989 = vmatprep.subr.mxu0 0.0
    %990 = vmatpush2.xpose.msra.mxu0 0.0
    %991 = vmatprep.subr.mxu0 0.0
    %992 = vmatpush2.xpose.msra.mxu0 0.0
    %993 = vmatprep.subr.mxu0 0.0
    %994 = vmatpush2.xpose.msra.mxu0 0.0
    %995 = vmatprep.subr.mxu0 0.0
    %996 = vmatpush2.xpose.msra.mxu0 0.0
    %997 = vmatprep.subr.mxu0 0.0
    %998 = vmatpush2.xpose.msra.mxu0 0.0
    %999 = vmatprep.subr.mxu0 0.0
    %1000 = vmatpush2.xpose.msra.mxu0 0.0
    %1001 = vmatprep.subr.mxu0 0.0
    %1002 = vmatpush2.xpose.msra.mxu0 0.0
    %1003 = vmatprep.mubr.f32.mxu0 0.0
    %1004 = vmatmul.mubr.f32.gmra.mxu0 %v935
    %v1005 = vpop.f32.mrf.mxu0
    %v1006 = vadd.f32 %v927, %v1005
    %v1007 = vpop.f32.mrf.mxu0
    %1008 = vdwg.mxu0
    %v1009 = vsel %vm142, %v1006, -inf
    %1010 = vmax.xlane.f32.xlu0 %v1009
    %v1011 = vpop.xlane.xlu0 %1010
    %v1012 = vsub.f32 %v1006, %v1011
    %v1013 = vmul.f32 %v1012, 1.442695
    %v1014 = vpow.pop %v1013
    %v1015 = vsel %vm142, %v1014, 0.0
    %1016 = vadd.xlane.f32.xlu0 %v1015
    %v1017 = vpop.xlane.xlu0 %1016
    %v1018 = vrcp.pop %v1017
    %v1019 = vmul.f32 %v1014, %v1018
    %1020 = vrot.lane.b32.xlu0 %v321, 64
    %v1021 = vpop.permute.xlu0 %1020
    %v1024 = vsel %vm142, %v1019, 0
    %1026 = vmatprep.subr.mxu0 0.0
    %1027 = vmatpush1.msra.mxu0 0.0
    %1028 = vmatprep.subr.mxu0 0.0
    %1029 = vmatpush1.msra.mxu0 0.0
    %1030 = vmatprep.subr.mxu0 0.0
    %1031 = vmatpush1.msra.mxu0 0.0
    %1032 = vmatprep.subr.mxu0 0.0
    %1033 = vmatpush1.msra.mxu0 0.0
    %1034 = vmatprep.subr.mxu0 0.0
    %1035 = vmatpush1.msra.mxu0 0.0
    %1036 = vmatprep.subr.mxu0 0.0
    %1037 = vmatpush1.msra.mxu0 0.0
    %1038 = vmatprep.subr.mxu0 0.0
    %1039 = vmatpush1.msra.mxu0 0.0
    %1040 = vmatprep.subr.mxu0 0.0
    %1041 = vmatpush1.msra.mxu0 0.0
    %1042 = vmatprep.subr.mxu0 0.0
    %1043 = vmatpush1.msra.mxu0 0.0
    %1044 = vmatprep.subr.mxu0 0.0
    %1045 = vmatpush1.msra.mxu0 0.0
    %1046 = vmatprep.subr.mxu0 0.0
    %1047 = vmatpush1.msra.mxu0 0.0
    %1048 = vmatprep.subr.mxu0 0.0
    %1049 = vmatpush1.msra.mxu0 0.0
    %1050 = vmatprep.subr.mxu0 0.0
    %1051 = vmatpush1.msra.mxu0 0.0
    %1052 = vmatprep.subr.mxu0 0.0
    %1053 = vmatpush1.msra.mxu0 0.0
    %1054 = vmatprep.subr.mxu0 0.0
    %1055 = vmatpush1.msra.mxu0 0.0
    %1056 = vmatprep.subr.mxu0 0.0
    %1057 = vmatpush1.msra.mxu0 %v1021
    %1058 = vmatprep.subr.mxu0 0.0
    %1059 = vmatpush2.msra.mxu0 0.0
    %1060 = vmatprep.subr.mxu0 0.0
    %1061 = vmatpush2.msra.mxu0 0.0
    %1062 = vmatprep.subr.mxu0 0.0
    %1063 = vmatpush2.msra.mxu0 0.0
    %1064 = vmatprep.subr.mxu0 0.0
    %1065 = vmatpush2.msra.mxu0 0.0
    %1066 = vmatprep.subr.mxu0 0.0
    %1067 = vmatpush2.msra.mxu0 0.0
    %1068 = vmatprep.subr.mxu0 0.0
    %1069 = vmatpush2.msra.mxu0 0.0
    %1070 = vmatprep.subr.mxu0 0.0
    %1071 = vmatpush2.msra.mxu0 0.0
    %1072 = vmatprep.subr.mxu0 0.0
    %1073 = vmatpush2.msra.mxu0 0.0
    %1074 = vmatprep.subr.mxu0 0.0
    %1075 = vmatpush2.msra.mxu0 0.0
    %1076 = vmatprep.subr.mxu0 0.0
    %1077 = vmatpush2.msra.mxu0 0.0
    %1078 = vmatprep.subr.mxu0 0.0
    %1079 = vmatpush2.msra.mxu0 0.0
    %1080 = vmatprep.subr.mxu0 0.0
    %1081 = vmatpush2.msra.mxu0 0.0
    %1082 = vmatprep.subr.mxu0 0.0
    %1083 = vmatpush2.msra.mxu0 0.0
    %1084 = vmatprep.subr.mxu0 0.0
    %1085 = vmatpush2.msra.mxu0 0.0
    %1086 = vmatprep.subr.mxu0 0.0
    %1087 = vmatpush2.msra.mxu0 0.0
    %1088 = vmatprep.subr.mxu0 0.0
    %1089 = vmatpush2.msra.mxu0 0.0
    %1090 = vmatprep.mubr.f32.mxu0 0.0
    %1091 = vmatmul.mubr.f32.gmra.mxu0 %v1024
    %v1092 = vpop.f32.mrf.mxu0
    %v1093 = vadd.f32 0.0, %v1092
    %v1094 = vpop.f32.mrf.mxu0
    %1095 = vdwg.mxu0
    %1096 = vst.msk [vmem:[#allocation2] sm:$0xff] %vm142, %v1093
    %1097 = vrot.lane.b32.xlu0 %v321, 120
    %v1098 = vpop.permute.xlu0 %1097
    %1099 = vrot.lane.b32.xlu0 %v321, 88
    %v1100 = vpop.permute.xlu0 %1099
    %1102 = vrot.lane.b32.xlu0 %v927, 120
    %v1103 = vpop.permute.xlu0 %1102
    %v1105 = vsel %vm142, %v1098, 0
    %v1107 = vsel %vm142, %v1100, 0
    %1109 = vmatprep.subr.mxu0 0.0
    %1110 = vmatpush1.xpose.msra.mxu0 0.0
    %1111 = vmatprep.subr.mxu0 0.0
    %1112 = vmatpush1.xpose.msra.mxu0 0.0
    %1113 = vmatprep.subr.mxu0 0.0
    %1114 = vmatpush1.xpose.msra.mxu0 0.0
    %1115 = vmatprep.subr.mxu0 0.0
    %1116 = vmatpush1.xpose.msra.mxu0 0.0
    %1117 = vmatprep.subr.mxu0 0.0
    %1118 = vmatpush1.xpose.msra.mxu0 0.0
    %1119 = vmatprep.subr.mxu0 0.0
    %1120 = vmatpush1.xpose.msra.mxu0 0.0
    %1121 = vmatprep.subr.mxu0 0.0
    %1122 = vmatpush1.xpose.msra.mxu0 0.0
    %1123 = vmatprep.subr.mxu0 0.0
    %1124 = vmatpush1.xpose.msra.mxu0 0.0
    %1125 = vmatprep.subr.mxu0 0.0
    %1126 = vmatpush1.xpose.msra.mxu0 0.0
    %1127 = vmatprep.subr.mxu0 0.0
    %1128 = vmatpush1.xpose.msra.mxu0 0.0
    %1129 = vmatprep.subr.mxu0 0.0
    %1130 = vmatpush1.xpose.msra.mxu0 0.0
    %1131 = vmatprep.subr.mxu0 0.0
    %1132 = vmatpush1.xpose.msra.mxu0 0.0
    %1133 = vmatprep.subr.mxu0 0.0
    %1134 = vmatpush1.xpose.msra.mxu0 0.0
    %1135 = vmatprep.subr.mxu0 0.0
    %1136 = vmatpush1.xpose.msra.mxu0 0.0
    %1137 = vmatprep.subr.mxu0 0.0
    %1138 = vmatpush1.xpose.msra.mxu0 0.0
    %1139 = vmatprep.subr.mxu0 0.0
    %1140 = vmatpush1.xpose.msra.mxu0 %v1107
    %1141 = vmatprep.subr.mxu0 0.0
    %1142 = vmatpush2.xpose.msra.mxu0 0.0
    %1143 = vmatprep.subr.mxu0 0.0
    %1144 = vmatpush2.xpose.msra.mxu0 0.0
    %1145 = vmatprep.subr.mxu0 0.0
    %1146 = vmatpush2.xpose.msra.mxu0 0.0
    %1147 = vmatprep.subr.mxu0 0.0
    %1148 = vmatpush2.xpose.msra.mxu0 0.0
    %1149 = vmatprep.subr.mxu0 0.0
    %1150 = vmatpush2.xpose.msra.mxu0 0.0
    %1151 = vmatprep.subr.mxu0 0.0
    %1152 = vmatpush2.xpose.msra.mxu0 0.0
    %1153 = vmatprep.subr.mxu0 0.0
    %1154 = vmatpush2.xpose.msra.mxu0 0.0
    %1155 = vmatprep.subr.mxu0 0.0
    %1156 = vmatpush2.xpose.msra.mxu0 0.0
    %1157 = vmatprep.subr.mxu0 0.0
    %1158 = vmatpush2.xpose.msra.mxu0 0.0
    %1159 = vmatprep.subr.mxu0 0.0
    %1160 = vmatpush2.xpose.msra.mxu0 0.0
    %1161 = vmatprep.subr.mxu0 0.0
    %1162 = vmatpush2.xpose.msra.mxu0 0.0
    %1163 = vmatprep.subr.mxu0 0.0
    %1164 = vmatpush2.xpose.msra.mxu0 0.0
    %1165 = vmatprep.subr.mxu0 0.0
    %1166 = vmatpush2.xpose.msra.mxu0 0.0
    %1167 = vmatprep.subr.mxu0 0.0
    %1168 = vmatpush2.xpose.msra.mxu0 0.0
    %1169 = vmatprep.subr.mxu0 0.0
    %1170 = vmatpush2.xpose.msra.mxu0 0.0
    %1171 = vmatprep.subr.mxu0 0.0
    %1172 = vmatpush2.xpose.msra.mxu0 0.0
    %1173 = vmatprep.mubr.f32.mxu0 0.0
    %1174 = vmatmul.mubr.f32.gmra.mxu0 %v1105
    %v1175 = vpop.f32.mrf.mxu0
    %v1176 = vadd.f32 %v1103, %v1175
    %v1177 = vpop.f32.mrf.mxu0
    %1178 = vdwg.mxu0
    %v1179 = vsel %vm142, %v1176, -inf
    %1180 = vmax.xlane.f32.xlu0 %v1179
    %v1181 = vpop.xlane.xlu0 %1180
    %v1182 = vsub.f32 %v1176, %v1181
    %v1183 = vmul.f32 %v1182, 1.442695
    %v1184 = vpow.pop %v1183
    %v1185 = vsel %vm142, %v1184, 0.0
    %1186 = vadd.xlane.f32.xlu0 %v1185
    %v1187 = vpop.xlane.xlu0 %1186
    %v1188 = vrcp.pop %v1187
    %v1189 = vmul.f32 %v1184, %v1188
    %1190 = vrot.lane.b32.xlu0 %v321, 56
    %v1191 = vpop.permute.xlu0 %1190
    %v1194 = vsel %vm142, %v1189, 0
    %1196 = vmatprep.subr.mxu0 0.0
    %1197 = vmatpush1.msra.mxu0 0.0
    %1198 = vmatprep.subr.mxu0 0.0
    %1199 = vmatpush1.msra.mxu0 0.0
    %1200 = vmatprep.subr.mxu0 0.0
    %1201 = vmatpush1.msra.mxu0 0.0
    %1202 = vmatprep.subr.mxu0 0.0
    %1203 = vmatpush1.msra.mxu0 0.0
    %1204 = vmatprep.subr.mxu0 0.0
    %1205 = vmatpush1.msra.mxu0 0.0
    %1206 = vmatprep.subr.mxu0 0.0
    %1207 = vmatpush1.msra.mxu0 0.0
    %1208 = vmatprep.subr.mxu0 0.0
    %1209 = vmatpush1.msra.mxu0 0.0
    %1210 = vmatprep.subr.mxu0 0.0
    %1211 = vmatpush1.msra.mxu0 0.0
    %1212 = vmatprep.subr.mxu0 0.0
    %1213 = vmatpush1.msra.mxu0 0.0
    %1214 = vmatprep.subr.mxu0 0.0
    %1215 = vmatpush1.msra.mxu0 0.0
    %1216 = vmatprep.subr.mxu0 0.0
    %1217 = vmatpush1.msra.mxu0 0.0
    %1218 = vmatprep.subr.mxu0 0.0
    %1219 = vmatpush1.msra.mxu0 0.0
    %1220 = vmatprep.subr.mxu0 0.0
    %1221 = vmatpush1.msra.mxu0 0.0
    %1222 = vmatprep.subr.mxu0 0.0
    %1223 = vmatpush1.msra.mxu0 0.0
    %1224 = vmatprep.subr.mxu0 0.0
    %1225 = vmatpush1.msra.mxu0 0.0
    %1226 = vmatprep.subr.mxu0 0.0
    %1227 = vmatpush1.msra.mxu0 %v1191
    %1228 = vmatprep.subr.mxu0 0.0
    %1229 = vmatpush2.msra.mxu0 0.0
    %1230 = vmatprep.subr.mxu0 0.0
    %1231 = vmatpush2.msra.mxu0 0.0
    %1232 = vmatprep.subr.mxu0 0.0
    %1233 = vmatpush2.msra.mxu0 0.0
    %1234 = vmatprep.subr.mxu0 0.0
    %1235 = vmatpush2.msra.mxu0 0.0
    %1236 = vmatprep.subr.mxu0 0.0
    %1237 = vmatpush2.msra.mxu0 0.0
    %1238 = vmatprep.subr.mxu0 0.0
    %1239 = vmatpush2.msra.mxu0 0.0
    %1240 = vmatprep.subr.mxu0 0.0
    %1241 = vmatpush2.msra.mxu0 0.0
    %1242 = vmatprep.subr.mxu0 0.0
    %1243 = vmatpush2.msra.mxu0 0.0
    %1244 = vmatprep.subr.mxu0 0.0
    %1245 = vmatpush2.msra.mxu0 0.0
    %1246 = vmatprep.subr.mxu0 0.0
    %1247 = vmatpush2.msra.mxu0 0.0
    %1248 = vmatprep.subr.mxu0 0.0
    %1249 = vmatpush2.msra.mxu0 0.0
    %1250 = vmatprep.subr.mxu0 0.0
    %1251 = vmatpush2.msra.mxu0 0.0
    %1252 = vmatprep.subr.mxu0 0.0
    %1253 = vmatpush2.msra.mxu0 0.0
    %1254 = vmatprep.subr.mxu0 0.0
    %1255 = vmatpush2.msra.mxu0 0.0
    %1256 = vmatprep.subr.mxu0 0.0
    %1257 = vmatpush2.msra.mxu0 0.0
    %1258 = vmatprep.subr.mxu0 0.0
    %1259 = vmatpush2.msra.mxu0 0.0
    %1260 = vmatprep.mubr.f32.mxu0 0.0
    %1261 = vmatmul.mubr.f32.gmra.mxu0 %v1194
    %v1262 = vpop.f32.mrf.mxu0
    %v1263 = vadd.f32 0.0, %v1262
    %v1264 = vpop.f32.mrf.mxu0
    %1265 = vdwg.mxu0
    %1267 = vrot.lane.b32.xlu0 %v1263, 8
    %v1268 = vpop.permute.xlu0 %1267
    %vm1270 = vcmask 130112
    %1271 = vst.msk [vmem:[#allocation2] sm:$0xff] %vm1270, %v1268
    %1272 = vrot.lane.b32.xlu0 %v321, 112
    %v1273 = vpop.permute.xlu0 %1272
    %1274 = vrot.lane.b32.xlu0 %v321, 80
    %v1275 = vpop.permute.xlu0 %1274
    %1276 = vrot.lane.b32.xlu0 %v927, 112
    %v1277 = vpop.permute.xlu0 %1276
    %v1279 = vsel %vm142, %v1273, 0
    %v1281 = vsel %vm142, %v1275, 0
    %1283 = vmatprep.subr.mxu0 0.0
    %1284 = vmatpush1.xpose.msra.mxu0 0.0
    %1285 = vmatprep.subr.mxu0 0.0
    %1286 = vmatpush1.xpose.msra.mxu0 0.0
    %1287 = vmatprep.subr.mxu0 0.0
    %1288 = vmatpush1.xpose.msra.mxu0 0.0
    %1289 = vmatprep.subr.mxu0 0.0
    %1290 = vmatpush1.xpose.msra.mxu0 0.0
    %1291 = vmatprep.subr.mxu0 0.0
    %1292 = vmatpush1.xpose.msra.mxu0 0.0
    %1293 = vmatprep.subr.mxu0 0.0
    %1294 = vmatpush1.xpose.msra.mxu0 0.0
    %1295 = vmatprep.subr.mxu0 0.0
    %1296 = vmatpush1.xpose.msra.mxu0 0.0
    %1297 = vmatprep.subr.mxu0 0.0
    %1298 = vmatpush1.xpose.msra.mxu0 0.0
    %1299 = vmatprep.subr.mxu0 0.0
    %1300 = vmatpush1.xpose.msra.mxu0 0.0
    %1301 = vmatprep.subr.mxu0 0.0
    %1302 = vmatpush1.xpose.msra.mxu0 0.0
    %1303 = vmatprep.subr.mxu0 0.0
    %1304 = vmatpush1.xpose.msra.mxu0 0.0
    %1305 = vmatprep.subr.mxu0 0.0
    %1306 = vmatpush1.xpose.msra.mxu0 0.0
    %1307 = vmatprep.subr.mxu0 0.0
    %1308 = vmatpush1.xpose.msra.mxu0 0.0
    %1309 = vmatprep.subr.mxu0 0.0
    %1310 = vmatpush1.xpose.msra.mxu0 0.0
    %1311 = vmatprep.subr.mxu0 0.0
    %1312 = vmatpush1.xpose.msra.mxu0 0.0
    %1313 = vmatprep.subr.mxu0 0.0
    %1314 = vmatpush1.xpose.msra.mxu0 %v1281
    %1315 = vmatprep.subr.mxu0 0.0
    %1316 = vmatpush2.xpose.msra.mxu0 0.0
    %1317 = vmatprep.subr.mxu0 0.0
    %1318 = vmatpush2.xpose.msra.mxu0 0.0
    %1319 = vmatprep.subr.mxu0 0.0
    %1320 = vmatpush2.xpose.msra.mxu0 0.0
    %1321 = vmatprep.subr.mxu0 0.0
    %1322 = vmatpush2.xpose.msra.mxu0 0.0
    %1323 = vmatprep.subr.mxu0 0.0
    %1324 = vmatpush2.xpose.msra.mxu0 0.0
    %1325 = vmatprep.subr.mxu0 0.0
    %1326 = vmatpush2.xpose.msra.mxu0 0.0
    %1327 = vmatprep.subr.mxu0 0.0
    %1328 = vmatpush2.xpose.msra.mxu0 0.0
    %1329 = vmatprep.subr.mxu0 0.0
    %1330 = vmatpush2.xpose.msra.mxu0 0.0
    %1331 = vmatprep.subr.mxu0 0.0
    %1332 = vmatpush2.xpose.msra.mxu0 0.0
    %1333 = vmatprep.subr.mxu0 0.0
    %1334 = vmatpush2.xpose.msra.mxu0 0.0
    %1335 = vmatprep.subr.mxu0 0.0
    %1336 = vmatpush2.xpose.msra.mxu0 0.0
    %1337 = vmatprep.subr.mxu0 0.0
    %1338 = vmatpush2.xpose.msra.mxu0 0.0
    %1339 = vmatprep.subr.mxu0 0.0
    %1340 = vmatpush2.xpose.msra.mxu0 0.0
    %1341 = vmatprep.subr.mxu0 0.0
    %1342 = vmatpush2.xpose.msra.mxu0 0.0
    %1343 = vmatprep.subr.mxu0 0.0
    %1344 = vmatpush2.xpose.msra.mxu0 0.0
    %1345 = vmatprep.subr.mxu0 0.0
    %1346 = vmatpush2.xpose.msra.mxu0 0.0
    %1347 = vmatprep.mubr.f32.mxu0 0.0
    %1348 = vmatmul.mubr.f32.gmra.mxu0 %v1279
    %v1349 = vpop.f32.mrf.mxu0
    %v1350 = vadd.f32 %v1277, %v1349
    %v1351 = vpop.f32.mrf.mxu0
    %1352 = vdwg.mxu0
    %v1353 = vsel %vm142, %v1350, -inf
    %1354 = vmax.xlane.f32.xlu0 %v1353
    %v1355 = vpop.xlane.xlu0 %1354
    %v1356 = vsub.f32 %v1350, %v1355
    %v1357 = vmul.f32 %v1356, 1.442695
    %v1358 = vpow.pop %v1357
    %v1359 = vsel %vm142, %v1358, 0.0
    %1360 = vadd.xlane.f32.xlu0 %v1359
    %v1361 = vpop.xlane.xlu0 %1360
    %v1362 = vrcp.pop %v1361
    %v1363 = vmul.f32 %v1358, %v1362
    %1364 = vrot.lane.b32.xlu0 %v321, 48
    %v1365 = vpop.permute.xlu0 %1364
    %v1368 = vsel %vm142, %v1363, 0
    %1370 = vmatprep.subr.mxu0 0.0
    %1371 = vmatpush1.msra.mxu0 0.0
    %1372 = vmatprep.subr.mxu0 0.0
    %1373 = vmatpush1.msra.mxu0 0.0
    %1374 = vmatprep.subr.mxu0 0.0
    %1375 = vmatpush1.msra.mxu0 0.0
    %1376 = vmatprep.subr.mxu0 0.0
    %1377 = vmatpush1.msra.mxu0 0.0
    %1378 = vmatprep.subr.mxu0 0.0
    %1379 = vmatpush1.msra.mxu0 0.0
    %1380 = vmatprep.subr.mxu0 0.0
    %1381 = vmatpush1.msra.mxu0 0.0
    %1382 = vmatprep.subr.mxu0 0.0
    %1383 = vmatpush1.msra.mxu0 0.0
    %1384 = vmatprep.subr.mxu0 0.0
    %1385 = vmatpush1.msra.mxu0 0.0
    %1386 = vmatprep.subr.mxu0 0.0
    %1387 = vmatpush1.msra.mxu0 0.0
    %1388 = vmatprep.subr.mxu0 0.0
    %1389 = vmatpush1.msra.mxu0 0.0
    %1390 = vmatprep.subr.mxu0 0.0
    %1391 = vmatpush1.msra.mxu0 0.0
    %1392 = vmatprep.subr.mxu0 0.0
    %1393 = vmatpush1.msra.mxu0 0.0
    %1394 = vmatprep.subr.mxu0 0.0
    %1395 = vmatpush1.msra.mxu0 0.0
    %1396 = vmatprep.subr.mxu0 0.0
    %1397 = vmatpush1.msra.mxu0 0.0
    %1398 = vmatprep.subr.mxu0 0.0
    %1399 = vmatpush1.msra.mxu0 0.0
    %1400 = vmatprep.subr.mxu0 0.0
    %1401 = vmatpush1.msra.mxu0 %v1365
    %1402 = vmatprep.subr.mxu0 0.0
    %1403 = vmatpush2.msra.mxu0 0.0
    %1404 = vmatprep.subr.mxu0 0.0
    %1405 = vmatpush2.msra.mxu0 0.0
    %1406 = vmatprep.subr.mxu0 0.0
    %1407 = vmatpush2.msra.mxu0 0.0
    %1408 = vmatprep.subr.mxu0 0.0
    %1409 = vmatpush2.msra.mxu0 0.0
    %1410 = vmatprep.subr.mxu0 0.0
    %1411 = vmatpush2.msra.mxu0 0.0
    %1412 = vmatprep.subr.mxu0 0.0
    %1413 = vmatpush2.msra.mxu0 0.0
    %1414 = vmatprep.subr.mxu0 0.0
    %1415 = vmatpush2.msra.mxu0 0.0
    %1416 = vmatprep.subr.mxu0 0.0
    %1417 = vmatpush2.msra.mxu0 0.0
    %1418 = vmatprep.subr.mxu0 0.0
    %1419 = vmatpush2.msra.mxu0 0.0
    %1420 = vmatprep.subr.mxu0 0.0
    %1421 = vmatpush2.msra.mxu0 0.0
    %1422 = vmatprep.subr.mxu0 0.0
    %1423 = vmatpush2.msra.mxu0 0.0
    %1424 = vmatprep.subr.mxu0 0.0
    %1425 = vmatpush2.msra.mxu0 0.0
    %1426 = vmatprep.subr.mxu0 0.0
    %1427 = vmatpush2.msra.mxu0 0.0
    %1428 = vmatprep.subr.mxu0 0.0
    %1429 = vmatpush2.msra.mxu0 0.0
    %1430 = vmatprep.subr.mxu0 0.0
    %1431 = vmatpush2.msra.mxu0 0.0
    %1432 = vmatprep.subr.mxu0 0.0
    %1433 = vmatpush2.msra.mxu0 0.0
    %1434 = vmatprep.mubr.f32.mxu0 0.0
    %1435 = vmatmul.mubr.f32.gmra.mxu0 %v1368
    %v1436 = vpop.f32.mrf.mxu0
    %v1437 = vadd.f32 0.0, %v1436
    %v1438 = vpop.f32.mrf.mxu0
    %1439 = vdwg.mxu0
    %1441 = vrot.lane.b32.xlu0 %v1437, 16
    %v1442 = vpop.permute.xlu0 %1441
    %vm1444 = vcmask 195712
    %1445 = vst.msk [vmem:[#allocation2] sm:$0xff] %vm1444, %v1442
    %1446 = vrot.lane.b32.xlu0 %v321, 104
    %v1447 = vpop.permute.xlu0 %1446
    %1448 = vrot.lane.b32.xlu0 %v321, 72
    %v1449 = vpop.permute.xlu0 %1448
    %1450 = vrot.lane.b32.xlu0 %v927, 104
    %v1451 = vpop.permute.xlu0 %1450
    %v1453 = vsel %vm142, %v1447, 0
    %v1455 = vsel %vm142, %v1449, 0
    %1457 = vmatprep.subr.mxu0 0.0
    %1458 = vmatpush1.xpose.msra.mxu0 0.0
    %1459 = vmatprep.subr.mxu0 0.0
    %1460 = vmatpush1.xpose.msra.mxu0 0.0
    %1461 = vmatprep.subr.mxu0 0.0
    %1462 = vmatpush1.xpose.msra.mxu0 0.0
    %1463 = vmatprep.subr.mxu0 0.0
    %1464 = vmatpush1.xpose.msra.mxu0 0.0
    %1465 = vmatprep.subr.mxu0 0.0
    %1466 = vmatpush1.xpose.msra.mxu0 0.0
    %1467 = vmatprep.subr.mxu0 0.0
    %1468 = vmatpush1.xpose.msra.mxu0 0.0
    %1469 = vmatprep.subr.mxu0 0.0
    %1470 = vmatpush1.xpose.msra.mxu0 0.0
    %1471 = vmatprep.subr.mxu0 0.0
    %1472 = vmatpush1.xpose.msra.mxu0 0.0
    %1473 = vmatprep.subr.mxu0 0.0
    %1474 = vmatpush1.xpose.msra.mxu0 0.0
    %1475 = vmatprep.subr.mxu0 0.0
    %1476 = vmatpush1.xpose.msra.mxu0 0.0
    %1477 = vmatprep.subr.mxu0 0.0
    %1478 = vmatpush1.xpose.msra.mxu0 0.0
    %1479 = vmatprep.subr.mxu0 0.0
    %1480 = vmatpush1.xpose.msra.mxu0 0.0
    %1481 = vmatprep.subr.mxu0 0.0
    %1482 = vmatpush1.xpose.msra.mxu0 0.0
    %1483 = vmatprep.subr.mxu0 0.0
    %1484 = vmatpush1.xpose.msra.mxu0 0.0
    %1485 = vmatprep.subr.mxu0 0.0
    %1486 = vmatpush1.xpose.msra.mxu0 0.0
    %1487 = vmatprep.subr.mxu0 0.0
    %1488 = vmatpush1.xpose.msra.mxu0 %v1455
    %1489 = vmatprep.subr.mxu0 0.0
    %1490 = vmatpush2.xpose.msra.mxu0 0.0
    %1491 = vmatprep.subr.mxu0 0.0
    %1492 = vmatpush2.xpose.msra.mxu0 0.0
    %1493 = vmatprep.subr.mxu0 0.0
    %1494 = vmatpush2.xpose.msra.mxu0 0.0
    %1495 = vmatprep.subr.mxu0 0.0
    %1496 = vmatpush2.xpose.msra.mxu0 0.0
    %1497 = vmatprep.subr.mxu0 0.0
    %1498 = vmatpush2.xpose.msra.mxu0 0.0
    %1499 = vmatprep.subr.mxu0 0.0
    %1500 = vmatpush2.xpose.msra.mxu0 0.0
    %1501 = vmatprep.subr.mxu0 0.0
    %1502 = vmatpush2.xpose.msra.mxu0 0.0
    %1503 = vmatprep.subr.mxu0 0.0
    %1504 = vmatpush2.xpose.msra.mxu0 0.0
    %1505 = vmatprep.subr.mxu0 0.0
    %1506 = vmatpush2.xpose.msra.mxu0 0.0
    %1507 = vmatprep.subr.mxu0 0.0
    %1508 = vmatpush2.xpose.msra.mxu0 0.0
    %1509 = vmatprep.subr.mxu0 0.0
    %1510 = vmatpush2.xpose.msra.mxu0 0.0
    %1511 = vmatprep.subr.mxu0 0.0
    %1512 = vmatpush2.xpose.msra.mxu0 0.0
    %1513 = vmatprep.subr.mxu0 0.0
    %1514 = vmatpush2.xpose.msra.mxu0 0.0
    %1515 = vmatprep.subr.mxu0 0.0
    %1516 = vmatpush2.xpose.msra.mxu0 0.0
    %1517 = vmatprep.subr.mxu0 0.0
    %1518 = vmatpush2.xpose.msra.mxu0 0.0
    %1519 = vmatprep.subr.mxu0 0.0
    %1520 = vmatpush2.xpose.msra.mxu0 0.0
    %1521 = vmatprep.mubr.f32.mxu0 0.0
    %1522 = vmatmul.mubr.f32.gmra.mxu0 %v1453
    %v1523 = vpop.f32.mrf.mxu0
    %v1524 = vadd.f32 %v1451, %v1523
    %v1525 = vpop.f32.mrf.mxu0
    %1526 = vdwg.mxu0
    %v1527 = vsel %vm142, %v1524, -inf
    %1528 = vmax.xlane.f32.xlu0 %v1527
    %v1529 = vpop.xlane.xlu0 %1528
    %v1530 = vsub.f32 %v1524, %v1529
    %v1531 = vmul.f32 %v1530, 1.442695
    %v1532 = vpow.pop %v1531
    %v1533 = vsel %vm142, %v1532, 0.0
    %1534 = vadd.xlane.f32.xlu0 %v1533
    %v1535 = vpop.xlane.xlu0 %1534
    %v1536 = vrcp.pop %v1535
    %v1537 = vmul.f32 %v1532, %v1536
    %1538 = vrot.lane.b32.xlu0 %v321, 40
    %v1539 = vpop.permute.xlu0 %1538
    %v1542 = vsel %vm142, %v1537, 0
    %1544 = vmatprep.subr.mxu0 0.0
    %1545 = vmatpush1.msra.mxu0 0.0
    %1546 = vmatprep.subr.mxu0 0.0
    %1547 = vmatpush1.msra.mxu0 0.0
    %1548 = vmatprep.subr.mxu0 0.0
    %1549 = vmatpush1.msra.mxu0 0.0
    %1550 = vmatprep.subr.mxu0 0.0
    %1551 = vmatpush1.msra.mxu0 0.0
    %1552 = vmatprep.subr.mxu0 0.0
    %1553 = vmatpush1.msra.mxu0 0.0
    %1554 = vmatprep.subr.mxu0 0.0
    %1555 = vmatpush1.msra.mxu0 0.0
    %1556 = vmatprep.subr.mxu0 0.0
    %1557 = vmatpush1.msra.mxu0 0.0
    %1558 = vmatprep.subr.mxu0 0.0
    %1559 = vmatpush1.msra.mxu0 0.0
    %1560 = vmatprep.subr.mxu0 0.0
    %1561 = vmatpush1.msra.mxu0 0.0
    %1562 = vmatprep.subr.mxu0 0.0
    %1563 = vmatpush1.msra.mxu0 0.0
    %1564 = vmatprep.subr.mxu0 0.0
    %1565 = vmatpush1.msra.mxu0 0.0
    %1566 = vmatprep.subr.mxu0 0.0
    %1567 = vmatpush1.msra.mxu0 0.0
    %1568 = vmatprep.subr.mxu0 0.0
    %1569 = vmatpush1.msra.mxu0 0.0
    %1570 = vmatprep.subr.mxu0 0.0
    %1571 = vmatpush1.msra.mxu0 0.0
    %1572 = vmatprep.subr.mxu0 0.0
    %1573 = vmatpush1.msra.mxu0 0.0
    %1574 = vmatprep.subr.mxu0 0.0
    %1575 = vmatpush1.msra.mxu0 %v1539
    %1576 = vmatprep.subr.mxu0 0.0
    %1577 = vmatpush2.msra.mxu0 0.0
    %1578 = vmatprep.subr.mxu0 0.0
    %1579 = vmatpush2.msra.mxu0 0.0
    %1580 = vmatprep.subr.mxu0 0.0
    %1581 = vmatpush2.msra.mxu0 0.0
    %1582 = vmatprep.subr.mxu0 0.0
    %1583 = vmatpush2.msra.mxu0 0.0
    %1584 = vmatprep.subr.mxu0 0.0
    %1585 = vmatpush2.msra.mxu0 0.0
    %1586 = vmatprep.subr.mxu0 0.0
    %1587 = vmatpush2.msra.mxu0 0.0
    %1588 = vmatprep.subr.mxu0 0.0
    %1589 = vmatpush2.msra.mxu0 0.0
    %1590 = vmatprep.subr.mxu0 0.0
    %1591 = vmatpush2.msra.mxu0 0.0
    %1592 = vmatprep.subr.mxu0 0.0
    %1593 = vmatpush2.msra.mxu0 0.0
    %1594 = vmatprep.subr.mxu0 0.0
    %1595 = vmatpush2.msra.mxu0 0.0
    %1596 = vmatprep.subr.mxu0 0.0
    %1597 = vmatpush2.msra.mxu0 0.0
    %1598 = vmatprep.subr.mxu0 0.0
    %1599 = vmatpush2.msra.mxu0 0.0
    %1600 = vmatprep.subr.mxu0 0.0
    %1601 = vmatpush2.msra.mxu0 0.0
    %1602 = vmatprep.subr.mxu0 0.0
    %1603 = vmatpush2.msra.mxu0 0.0
    %1604 = vmatprep.subr.mxu0 0.0
    %1605 = vmatpush2.msra.mxu0 0.0
    %1606 = vmatprep.subr.mxu0 0.0
    %1607 = vmatpush2.msra.mxu0 0.0
    %1608 = vmatprep.mubr.f32.mxu0 0.0
    %1609 = vmatmul.mubr.f32.gmra.mxu0 %v1542
    %v1610 = vpop.f32.mrf.mxu0
    %v1611 = vadd.f32 0.0, %v1610
    %v1612 = vpop.f32.mrf.mxu0
    %1613 = vdwg.mxu0
    %1615 = vrot.lane.b32.xlu0 %v1611, 24
    %v1616 = vpop.permute.xlu0 %1615
    %vm1618 = vcmask 261312
    %1619 = vst.msk [vmem:[#allocation2] sm:$0xff] %vm1618, %v1616
    %s1620 = scalar_lea.vmem %s2, 8
    %v1621 = vld [vmem:[%s1620] sm:$0xff]
    %vm1622 = vcmp.ge.s32.totalorder %v1621, 0
    %v1623 = vsel %vm1622, 1, 0
    %v1624 = vcvt.s32.f32 %v1623
    %1626 = vrot.lane.b32.xlu0 %v1624, 120
    %v1627 = vpop.permute.xlu0 %1626
    %v1629 = vadd.f32 %v1624, %v1627
    %1630 = vrot.lane.b32.xlu0 %v1624, 112
    %v1631 = vpop.permute.xlu0 %1630
    %v1633 = vadd.f32 %v1629, %v1631
    %1634 = vrot.lane.b32.xlu0 %v1624, 104
    %v1635 = vpop.permute.xlu0 %1634
    %v1637 = vadd.f32 %v1633, %v1635
    %1638 = vrot.lane.b32.xlu0 %v1624, 96
    %v1639 = vpop.permute.xlu0 %1638
    %v1641 = vadd.f32 %v1637, %v1639
    %v1642 = vmax.f32 %v1641, 1.0
    %v1643 = vrcp.pop %v1642
    %v1644 = vmul.f32 1.0, %v1643
    %1646 = vrot.lane.b32.xlu0 %v1644, 8
    %v1647 = vpop.permute.xlu0 %1646
    %1649 = vrot.lane.b32.xlu0 %v1644, 16
    %v1650 = vpop.permute.xlu0 %1649
    %1652 = vrot.lane.b32.xlu0 %v1644, 24
    %v1653 = vpop.permute.xlu0 %1652
    %1655 = vrot.lane.b32.xlu0 %v1644, 32
    %v1656 = vpop.permute.xlu0 %1655
    %v1658 = vsel %vm142, %v1644, %v1647
    %v1659 = vsel %vm97, %v1658, %v1650
    %v1660 = vsel %vm366, %v1659, %v1653
    %v1661 = vsel %vm226, %v1660, %v1656
    %v1662 = vmul.f32 %v1624, %v1661
    %vm1663 = vcmp.eq.s32.totalorder %v1621, 0
    %v1664 = vsel %vm1663, 1, 0
    %v1665 = vcvt.s32.f32 %v1664
    %v1666 = vmul.f32 %v1665, %v1662
    %vm1667 = vcmp.eq.s32.totalorder %v1621, 1
    %v1668 = vsel %vm1667, 1, 0
    %v1669 = vcvt.s32.f32 %v1668
    %v1670 = vmul.f32 %v1669, %v1662
    %vm1671 = vcmp.eq.s32.totalorder %v1621, 2
    %v1672 = vsel %vm1671, 1, 0
    %v1673 = vcvt.s32.f32 %v1672
    %v1674 = vmul.f32 %v1673, %v1662
    %vm1675 = vcmp.eq.s32.totalorder %v1621, 3
    %v1676 = vsel %vm1675, 1, 0
    %v1677 = vcvt.s32.f32 %v1676
    %v1678 = vmul.f32 %v1677, %v1662
    %vm1679 = vcmp.eq.s32.totalorder %v1621, 4
    %v1680 = vsel %vm1679, 1, 0
    %v1681 = vcvt.s32.f32 %v1680
    %v1682 = vmul.f32 %v1681, %v1662
    %vm1683 = vcmp.eq.s32.totalorder %v1621, 5
    %v1684 = vsel %vm1683, 1, 0
    %v1685 = vcvt.s32.f32 %v1684
    %v1686 = vmul.f32 %v1685, %v1662
    %vm1687 = vcmp.eq.s32.totalorder %v1621, 6
    %v1688 = vsel %vm1687, 1, 0
    %v1689 = vcvt.s32.f32 %v1688
    %v1690 = vmul.f32 %v1689, %v1662
    %vm1691 = vcmp.eq.s32.totalorder %v1621, 7
    %v1692 = vsel %vm1691, 1, 0
    %v1693 = vcvt.s32.f32 %v1692
    %v1694 = vmul.f32 %v1693, %v1662
    %vm1695 = vcmp.eq.s32.totalorder %v1621, 8
    %v1696 = vsel %vm1695, 1, 0
    %v1697 = vcvt.s32.f32 %v1696
    %v1698 = vmul.f32 %v1697, %v1662
    %vm1699 = vcmp.eq.s32.totalorder %v1621, 9
    %v1700 = vsel %vm1699, 1, 0
    %v1701 = vcvt.s32.f32 %v1700
    %v1702 = vmul.f32 %v1701, %v1662
    %vm1703 = vcmp.eq.s32.totalorder %v1621, 10
    %v1704 = vsel %vm1703, 1, 0
    %v1705 = vcvt.s32.f32 %v1704
    %v1706 = vmul.f32 %v1705, %v1662
    %vm1707 = vcmp.eq.s32.totalorder %v1621, 11
    %v1708 = vsel %vm1707, 1, 0
    %v1709 = vcvt.s32.f32 %v1708
    %v1710 = vmul.f32 %v1709, %v1662
    %s1711 = scalar_lea.vmem %s3, 8
    %v1712 = vld [vmem:[%s1711] sm:$0xff]
    %vm1713 = vcmp.ge.s32.totalorder %v1712, 0
    %v1714 = vsel %vm1713, 1, 0
    %1715 = vrot.lane.b32.xlu0 %v1714, 120
    %v1716 = vpop.permute.xlu0 %1715
    %v1717 = vadd.s32 %v1714, %v1716
    %1718 = vrot.lane.b32.xlu0 %v1714, 112
    %v1719 = vpop.permute.xlu0 %1718
    %v1720 = vadd.s32 %v1717, %v1719
    %1721 = vrot.lane.b32.xlu0 %v1714, 104
    %v1722 = vpop.permute.xlu0 %1721
    %v1723 = vadd.s32 %v1720, %v1722
    %1724 = vrot.lane.b32.xlu0 %v1714, 96
    %v1725 = vpop.permute.xlu0 %1724
    %v1726 = vadd.s32 %v1723, %v1725
    %vm1727 = vcmp.eq.s32.totalorder %v1726, 0
    %v1728 = vsel %vm1727, 1, 0
    %v1729 = vcvt.s32.f32 %v1728
    %vm1730 = vcmp.eq.s32.totalorder %v1726, 1
    %v1731 = vsel %vm1730, 1, 0
    %v1732 = vcvt.s32.f32 %v1731
    %vm1733 = vcmp.eq.s32.totalorder %v1726, 2
    %v1734 = vsel %vm1733, 1, 0
    %v1735 = vcvt.s32.f32 %v1734
    %vm1736 = vcmp.eq.s32.totalorder %v1726, 3
    %v1737 = vsel %vm1736, 1, 0
    %v1738 = vcvt.s32.f32 %v1737
    %vm1739 = vcmp.eq.s32.totalorder %v1726, 4
    %v1740 = vsel %vm1739, 1, 0
    %v1741 = vcvt.s32.f32 %v1740
    %vm1742 = vcmp.eq.s32.totalorder %v1726, 5
    %v1743 = vsel %vm1742, 1, 0
    %v1744 = vcvt.s32.f32 %v1743
    %1746 = vrot.lane.b32.xlu0 %v1670, 40
    %v1747 = vpop.permute.xlu0 %1746
    %1750 = vrot.lane.b32.xlu0 %v1674, 80
    %v1751 = vpop.permute.xlu0 %1750
    %1754 = vrot.lane.b32.xlu0 %v1678, 120
    %v1755 = vpop.permute.xlu0 %1754
    %1758 = vrot.lane.b32.xlu0 %v1682, 32
    %v1759 = vpop.permute.xlu0 %1758
    %1762 = vrot.lane.b32.xlu0 %v1686, 72
    %v1763 = vpop.permute.xlu0 %1762
    %1766 = vrot.lane.b32.xlu0 %v1690, 112
    %v1767 = vpop.permute.xlu0 %1766
    %1770 = vrot.lane.b32.xlu0 %v1694, 24
    %v1771 = vpop.permute.xlu0 %1770
    %1774 = vrot.lane.b32.xlu0 %v1698, 64
    %v1775 = vpop.permute.xlu0 %1774
    %1778 = vrot.lane.b32.xlu0 %v1702, 104
    %v1779 = vpop.permute.xlu0 %1778
    %1782 = vrot.lane.b32.xlu0 %v1706, 16
    %v1783 = vpop.permute.xlu0 %1782
    %1786 = vrot.lane.b32.xlu0 %v1710, 56
    %v1787 = vpop.permute.xlu0 %1786
    %1790 = vrot.lane.b32.xlu0 %v1729, 96
    %v1791 = vpop.permute.xlu0 %1790
    %1794 = vrot.lane.b32.xlu0 %v1732, 104
    %v1795 = vpop.permute.xlu0 %1794
    %1798 = vrot.lane.b32.xlu0 %v1735, 112
    %v1799 = vpop.permute.xlu0 %1798
    %1802 = vrot.lane.b32.xlu0 %v1738, 120
    %v1803 = vpop.permute.xlu0 %1802
    %v1805 = vsel %vm511, %v1666, %v1747
    %v1806 = vsel %vm513, %v1805, %v1751
    %v1807 = vsel %vm515, %v1806, %v1755
    %v1808 = vsel %vm226, %v1755, %v1759
    %v1809 = vsel %vm518, %v1808, %v1763
    %v1810 = vsel %vm520, %v1809, %v1767
    %v1811 = vsel %vm366, %v1767, %v1771
    %v1812 = vsel %vm523, %v1811, %v1775
    %v1813 = vsel %vm525, %v1812, %v1779
    %v1814 = vsel %vm97, %v1779, %v1783
    %v1815 = vsel %vm528, %v1814, %v1787
    %v1816 = vsel %vm530, %v1815, %v1791
    %v1817 = vsel %vm525, %v1816, %v1795
    %v1818 = vsel %vm520, %v1817, %v1799
    %v1819 = vsel %vm515, %v1818, %v1803
    %1821 = vrot.lane.b32.xlu0 %v1744, 8
    %v1822 = vpop.permute.xlu0 %1821
    %v1824 = vsel %vm142, %v1741, %v1822
    %v1825 = vpack.c.bf16 %v1807, %v1807
    %v1826 = vpack.c.bf16 %v1810, %v1810
    %v1827 = vpack.c.bf16 %v1813, %v1813
    %v1828 = vpack.c.bf16 %v1819, %v1819
    %v1829 = vpack.c.bf16 %v1824, %v1824
    %s1830 = scalar_lea.vmem %s4, 264
    %v1831 = vld [vmem:[%s1830] sm:$0xf]
    %v1832 = vld [vmem:[%s1830 + $0x4] sm:$0xf]
    %v1833 = vld [vmem:[%s1830 + $0x8] sm:$0xf]
    %v1834 = vld [vmem:[%s1830 + $0xc] sm:$0xf]
    %v1835 = vld [vmem:[%s1830 + $0x10] sm:$0xf]
    %v1836 = vld [vmem:[%s1830 + $0x14] sm:$0xf]
    %v1837 = vld [vmem:[%s1830 + $0x18] sm:$0xf]
    %v1838 = vld [vmem:[%s1830 + $0x1c] sm:$0xf]
    %v1839 = vld [vmem:[%s1830 + $0x20] sm:$0xf]
    %v1840 = vld [vmem:[%s1830 + $0x24] sm:$0xf]
    %v1841 = vld [vmem:[%s1830 + $0x28] sm:$0xf]
    %v1842 = vld [vmem:[%s1830 + $0x2c] sm:$0xf]
    %v1843 = vld [vmem:[%s1830 + $0x30] sm:$0xf]
    %v1844 = vld [vmem:[%s1830 + $0x34] sm:$0xf]
    %v1845 = vld [vmem:[%s1830 + $0x38] sm:$0xf]
    %v1846 = vld [vmem:[%s1830 + $0x3c] sm:$0xf]
    %v1847 = vld [vmem:[%s1830 + $0x40] sm:$0xf]
    %v1848 = vld [vmem:[%s1830 + $0x44] sm:$0xf]
    %v1849 = vld [vmem:[%s1830 + $0x48] sm:$0xf]
    %v1850 = vld [vmem:[%s1830 + $0x4c] sm:$0xf]
    %v1851 = vld [vmem:[%s1830 + $0x50] sm:$0xf]
    %v1852 = vld [vmem:[%s1830 + $0x54] sm:$0xf]
    %v1853 = vld [vmem:[%s1830 + $0x58] sm:$0xf]
    %v1854 = vld [vmem:[%s1830 + $0x5c] sm:$0xf]
    %v1855 = vld [vmem:[%s1830 + $0x60] sm:$0xf]
    %v1856 = vld [vmem:[%s1830 + $0x64] sm:$0xf]
    %v1857 = vld [vmem:[%s1830 + $0x68] sm:$0xf]
    %v1858 = vld [vmem:[%s1830 + $0x6c] sm:$0xf]
    %v1859 = vld [vmem:[%s1830 + $0x70] sm:$0xf]
    %v1860 = vld [vmem:[%s1830 + $0x74] sm:$0xf]
    %v1861 = vld [vmem:[%s1830 + $0x78] sm:$0xf]
    %v1862 = vld [vmem:[%s1830 + $0x7c] sm:$0xf]
    %v1863 = vld [vmem:[%s1830 + $0x80] sm:$0xf]
    %v1864 = vld [vmem:[%s1830 + $0x84] sm:$0xf]
    %v1865 = vld [vmem:[%s1830 + $0x88] sm:$0xf]
    %v1866 = vld [vmem:[%s1830 + $0x8c] sm:$0xf]
    %v1867 = vld [vmem:[%s1830 + $0x90] sm:$0xf]
    %v1868 = vld [vmem:[%s1830 + $0x94] sm:$0xf]
    %v1869 = vld [vmem:[%s1830 + $0x98] sm:$0xf]
    %v1870 = vld [vmem:[%s1830 + $0x9c] sm:$0xf]
    %v1871 = vld [vmem:[%s1830 + $0xa0] sm:$0xf]
    %v1872 = vld [vmem:[%s1830 + $0xa4] sm:$0xf]
    %v1873 = vld [vmem:[%s1830 + $0xa8] sm:$0xf]
    %v1874 = vld [vmem:[%s1830 + $0xac] sm:$0xf]
    %v1875 = vld [vmem:[%s1830 + $0xb0] sm:$0xf]
    %v1876 = vld [vmem:[%s1830 + $0xb4] sm:$0xf]
    %v1877 = vld [vmem:[%s1830 + $0xb8] sm:$0xf]
    %v1878 = vld [vmem:[%s1830 + $0xbc] sm:$0xf]
    %v1879 = vld [vmem:[%s1830 + $0xc0] sm:$0xf]
    %v1880 = vld [vmem:[%s1830 + $0xc4] sm:$0xf]
    %v1881 = vld [vmem:[%s1830 + $0xc8] sm:$0xf]
    %v1882 = vld [vmem:[%s1830 + $0xcc] sm:$0xf]
    %v1883 = vld [vmem:[%s1830 + $0xd0] sm:$0xf]
    %v1884 = vld [vmem:[%s1830 + $0xd4] sm:$0xf]
    %v1885 = vld [vmem:[%s1830 + $0xd8] sm:$0xf]
    %v1886 = vld [vmem:[%s1830 + $0xdc] sm:$0xf]
    %v1887 = vld [vmem:[%s1830 + $0xe0] sm:$0xf]
    %v1888 = vld [vmem:[%s1830 + $0xe4] sm:$0xf]
    %v1889 = vld [vmem:[%s1830 + $0xe8] sm:$0xf]
    %v1890 = vld [vmem:[%s1830 + $0xec] sm:$0xf]
    %v1891 = vld [vmem:[%s1830 + $0xf0] sm:$0xf]
    %v1892 = vld [vmem:[%s1830 + $0xf4] sm:$0xf]
    %v1893 = vld [vmem:[%s1830 + $0xf8] sm:$0xf]
    %v1894 = vld [vmem:[%s1830 + $0xfc] sm:$0xf]
    %v1895 = vld [vmem:[%s1830 + $0x100] sm:$0xf]
    %v1896 = vld [vmem:[%s1830 + $0x104] sm:$0xf]
    %v1963 = vunpack.c.l.b16 %v1831
    %v1964 = vunpack.c.l.b16 %v1832
    %v1965 = vunpack.c.l.b16 %v1833
    %v1966 = vunpack.c.l.b16 %v1834
    %v1967 = vunpack.c.l.b16 %v1835
    %v1968 = vunpack.c.l.b16 %v1836
    %v1969 = vunpack.c.l.b16 %v1837
    %v1970 = vunpack.c.l.b16 %v1838
    %v1971 = vunpack.c.l.b16 %v1839
    %v1972 = vunpack.c.l.b16 %v1840
    %v1973 = vunpack.c.l.b16 %v1841
    %v1974 = vunpack.c.l.b16 %v1842
    %v1975 = vunpack.c.l.b16 %v1843
    %v1976 = vunpack.c.l.b16 %v1844
    %v1977 = vunpack.c.l.b16 %v1845
    %v1978 = vunpack.c.l.b16 %v1846
    %v1979 = vunpack.c.l.b16 %v1847
    %v1980 = vunpack.c.l.b16 %v1848
    %v1981 = vunpack.c.l.b16 %v1849
    %v1982 = vunpack.c.l.b16 %v1850
    %v1983 = vunpack.c.l.b16 %v1851
    %v1984 = vunpack.c.l.b16 %v1852
    %v1985 = vunpack.c.l.b16 %v1853
    %v1986 = vunpack.c.l.b16 %v1854
    %v1987 = vunpack.c.l.b16 %v1855
    %v1988 = vunpack.c.l.b16 %v1856
    %v1989 = vunpack.c.l.b16 %v1857
    %v1990 = vunpack.c.l.b16 %v1858
    %v1991 = vunpack.c.l.b16 %v1859
    %v1992 = vunpack.c.l.b16 %v1860
    %v1993 = vunpack.c.l.b16 %v1861
    %v1994 = vunpack.c.l.b16 %v1862
    %v1995 = vunpack.c.l.b16 %v1863
    %v1996 = vunpack.c.l.b16 %v1864
    %v1997 = vunpack.c.l.b16 %v1865
    %v1998 = vunpack.c.l.b16 %v1866
    %v1999 = vunpack.c.l.b16 %v1867
    %v2000 = vunpack.c.l.b16 %v1868
    %v2001 = vunpack.c.l.b16 %v1869
    %v2002 = vunpack.c.l.b16 %v1870
    %v2003 = vunpack.c.l.b16 %v1871
    %v2004 = vunpack.c.l.b16 %v1872
    %v2005 = vunpack.c.l.b16 %v1873
    %v2006 = vunpack.c.l.b16 %v1874
    %v2007 = vunpack.c.l.b16 %v1875
    %v2008 = vunpack.c.l.b16 %v1876
    %v2009 = vunpack.c.l.b16 %v1877
    %v2010 = vunpack.c.l.b16 %v1878
    %v2011 = vunpack.c.l.b16 %v1879
    %v2012 = vunpack.c.l.b16 %v1880
    %v2013 = vunpack.c.l.b16 %v1881
    %v2014 = vunpack.c.l.b16 %v1882
    %v2015 = vunpack.c.l.b16 %v1883
    %v2016 = vunpack.c.l.b16 %v1884
    %v2017 = vunpack.c.l.b16 %v1885
    %v2018 = vunpack.c.l.b16 %v1886
    %v2019 = vunpack.c.l.b16 %v1887
    %v2020 = vunpack.c.l.b16 %v1888
    %v2021 = vunpack.c.l.b16 %v1889
    %v2022 = vunpack.c.l.b16 %v1890
    %v2023 = vunpack.c.l.b16 %v1891
    %v2024 = vunpack.c.l.b16 %v1892
    %v2025 = vunpack.c.l.b16 %v1893
    %v2026 = vunpack.c.l.b16 %v1894
    %v2027 = vunpack.c.l.b16 %v1895
    %v2028 = vunpack.c.l.b16 %v1896
    %v2029 = vpack.c.b16 %v1964, %v1963
    %v2030 = vpack.c.b16 %v1966, %v1965
    %v2031 = vpack.c.b16 %v1968, %v1967
    %v2032 = vpack.c.b16 %v1970, %v1969
    %v2033 = vpack.c.b16 %v1972, %v1971
    %v2034 = vpack.c.b16 %v1974, %v1973
    %v2035 = vpack.c.b16 %v1976, %v1975
    %v2036 = vpack.c.b16 %v1978, %v1977
    %v2037 = vpack.c.b16 %v1980, %v1979
    %v2038 = vpack.c.b16 %v1982, %v1981
    %v2039 = vpack.c.b16 %v1984, %v1983
    %v2040 = vpack.c.b16 %v1986, %v1985
    %v2041 = vpack.c.b16 %v1988, %v1987
    %v2042 = vpack.c.b16 %v1990, %v1989
    %v2043 = vpack.c.b16 %v1992, %v1991
    %v2044 = vpack.c.b16 %v1994, %v1993
    %v2045 = vpack.c.b16 %v1996, %v1995
    %v2046 = vpack.c.b16 %v1998, %v1997
    %v2047 = vpack.c.b16 %v2000, %v1999
    %v2048 = vpack.c.b16 %v2002, %v2001
    %v2049 = vpack.c.b16 %v2004, %v2003
    %v2050 = vpack.c.b16 %v2006, %v2005
    %v2051 = vpack.c.b16 %v2008, %v2007
    %v2052 = vpack.c.b16 %v2010, %v2009
    %v2053 = vpack.c.b16 %v2012, %v2011
    %v2054 = vpack.c.b16 %v2014, %v2013
    %v2055 = vpack.c.b16 %v2016, %v2015
    %v2056 = vpack.c.b16 %v2018, %v2017
    %v2057 = vpack.c.b16 %v2020, %v2019
    %v2058 = vpack.c.b16 %v2022, %v2021
    %v2059 = vpack.c.b16 %v2024, %v2023
    %v2060 = vpack.c.b16 %v2026, %v2025
    %v2061 = vpack.c.b16 %v2028, %v2027
    %v2096 = vsel %vm97, %v1829, 0
    %2098 = vmatprep.subr.bf16.mxu0 0
    %2099 = vmatpush1.bf16.msra.mxu0 %v2036
    %2100 = vmatprep.subr.bf16.mxu0 0
    %2101 = vmatpush1.bf16.msra.mxu0 %v2035
    %2102 = vmatprep.subr.bf16.mxu0 0
    %2103 = vmatpush1.bf16.msra.mxu0 %v2034
    %2104 = vmatprep.subr.bf16.mxu0 0
    %2105 = vmatpush1.bf16.msra.mxu0 %v2033
    %2106 = vmatprep.subr.bf16.mxu0 0
    %2107 = vmatpush1.bf16.msra.mxu0 %v2032
    %2108 = vmatprep.subr.bf16.mxu0 0
    %2109 = vmatpush1.bf16.msra.mxu0 %v2031
    %2110 = vmatprep.subr.bf16.mxu0 0
    %2111 = vmatpush1.bf16.msra.mxu0 %v2030
    %2112 = vmatprep.subr.bf16.mxu0 0
    %2113 = vmatpush1.bf16.msra.mxu0 %v2029
    %2114 = vmatprep.subr.bf16.mxu0 0
    %2115 = vmatpush2.bf16.msra.mxu0 %v2044
    %2116 = vmatprep.subr.bf16.mxu0 0
    %2117 = vmatpush2.bf16.msra.mxu0 %v2043
    %2118 = vmatprep.subr.bf16.mxu0 0
    %2119 = vmatpush2.bf16.msra.mxu0 %v2042
    %2120 = vmatprep.subr.bf16.mxu0 0
    %2121 = vmatpush2.bf16.msra.mxu0 %v2041
    %2122 = vmatprep.subr.bf16.mxu0 0
    %2123 = vmatpush2.bf16.msra.mxu0 %v2040
    %2124 = vmatprep.subr.bf16.mxu0 0
    %2125 = vmatpush2.bf16.msra.mxu0 %v2039
    %2126 = vmatprep.subr.bf16.mxu0 0
    %2127 = vmatpush2.bf16.msra.mxu0 %v2038
    %2128 = vmatprep.subr.bf16.mxu0 0
    %2129 = vmatpush2.bf16.msra.mxu0 %v2037
    %2130 = vmatprep.mubr.bf16.mxu0 %v1826
    %2131 = vmatmul.mubr.bf16.gmra.mxu0 %v1825
    %v2132 = vpop.f32.mrf.mxu0
    %v2133 = vadd.f32 0.0, %v2132
    %v2134 = vpop.f32.mrf.mxu0
    %v2135 = vpop.f32.mrf.mxu0
    %v2136 = vpop.f32.mrf.mxu0
    %2137 = vdwg.mxu0
    %2138 = vmatprep.subr.bf16.mxu0 0
    %2139 = vmatpush1.bf16.msra.mxu0 %v2052
    %2140 = vmatprep.subr.bf16.mxu0 0
    %2141 = vmatpush1.bf16.msra.mxu0 %v2051
    %2142 = vmatprep.subr.bf16.mxu0 0
    %2143 = vmatpush1.bf16.msra.mxu0 %v2050
    %2144 = vmatprep.subr.bf16.mxu0 0
    %2145 = vmatpush1.bf16.msra.mxu0 %v2049
    %2146 = vmatprep.subr.bf16.mxu0 0
    %2147 = vmatpush1.bf16.msra.mxu0 %v2048
    %2148 = vmatprep.subr.bf16.mxu0 0
    %2149 = vmatpush1.bf16.msra.mxu0 %v2047
    %2150 = vmatprep.subr.bf16.mxu0 0
    %2151 = vmatpush1.bf16.msra.mxu0 %v2046
    %2152 = vmatprep.subr.bf16.mxu0 0
    %2153 = vmatpush1.bf16.msra.mxu0 %v2045
    %2154 = vmatprep.subr.bf16.mxu0 0
    %2155 = vmatpush2.bf16.msra.mxu0 %v2060
    %2156 = vmatprep.subr.bf16.mxu0 0
    %2157 = vmatpush2.bf16.msra.mxu0 %v2059
    %2158 = vmatprep.subr.bf16.mxu0 0
    %2159 = vmatpush2.bf16.msra.mxu0 %v2058
    %2160 = vmatprep.subr.bf16.mxu0 0
    %2161 = vmatpush2.bf16.msra.mxu0 %v2057
    %2162 = vmatprep.subr.bf16.mxu0 0
    %2163 = vmatpush2.bf16.msra.mxu0 %v2056
    %2164 = vmatprep.subr.bf16.mxu0 0
    %2165 = vmatpush2.bf16.msra.mxu0 %v2055
    %2166 = vmatprep.subr.bf16.mxu0 0
    %2167 = vmatpush2.bf16.msra.mxu0 %v2054
    %2168 = vmatprep.subr.bf16.mxu0 0
    %2169 = vmatpush2.bf16.msra.mxu0 %v2053
    %2170 = vmatprep.mubr.bf16.mxu0 %v1828
    %2171 = vmatmul.mubr.bf16.gmra.mxu0 %v1827
    %v2172 = vpop.f32.mrf.mxu0
    %v2173 = vadd.f32 %v2133, %v2172
    %v2174 = vpop.f32.mrf.mxu0
    %v2175 = vpop.f32.mrf.mxu0
    %v2176 = vpop.f32.mrf.mxu0
    %2177 = vdwg.mxu0
    %2178 = vmatprep.subr.bf16.mxu0 0
    %2179 = vmatpush1.bf16.msra.mxu0 0
    %2180 = vmatprep.subr.bf16.mxu0 0
    %2181 = vmatpush1.bf16.msra.mxu0 0
    %2182 = vmatprep.subr.bf16.mxu0 0
    %2183 = vmatpush1.bf16.msra.mxu0 0
    %2184 = vmatprep.subr.bf16.mxu0 0
    %2185 = vmatpush1.bf16.msra.mxu0 0
    %2186 = vmatprep.subr.bf16.mxu0 0
    %2187 = vmatpush1.bf16.msra.mxu0 0
    %2188 = vmatprep.subr.bf16.mxu0 0
    %2189 = vmatpush1.bf16.msra.mxu0 0
    %2190 = vmatprep.subr.bf16.mxu0 0
    %2191 = vmatpush1.bf16.msra.mxu0 0
    %2192 = vmatprep.subr.bf16.mxu0 0
    %2193 = vmatpush1.bf16.msra.mxu0 %v2061
    %2194 = vmatprep.subr.bf16.mxu0 0
    %2195 = vmatpush2.bf16.msra.mxu0 0
    %2196 = vmatprep.subr.bf16.mxu0 0
    %2197 = vmatpush2.bf16.msra.mxu0 0
    %2198 = vmatprep.subr.bf16.mxu0 0
    %2199 = vmatpush2.bf16.msra.mxu0 0
    %2200 = vmatprep.subr.bf16.mxu0 0
    %2201 = vmatpush2.bf16.msra.mxu0 0
    %2202 = vmatprep.subr.bf16.mxu0 0
    %2203 = vmatpush2.bf16.msra.mxu0 0
    %2204 = vmatprep.subr.bf16.mxu0 0
    %2205 = vmatpush2.bf16.msra.mxu0 0
    %2206 = vmatprep.subr.bf16.mxu0 0
    %2207 = vmatpush2.bf16.msra.mxu0 0
    %2208 = vmatprep.subr.bf16.mxu0 0
    %2209 = vmatpush2.bf16.msra.mxu0 0
    %2210 = vmatprep.mubr.bf16.mxu0 0
    %2211 = vmatmul.mubr.bf16.gmra.mxu0 %v2096
    %v2212 = vpop.f32.mrf.mxu0
    %v2213 = vadd.f32 %v2173, %v2212
    %v2214 = vpop.f32.mrf.mxu0
    %v2215 = vpop.f32.mrf.mxu0
    %v2216 = vpop.f32.mrf.mxu0
    %2217 = vdwg.mxu0
    %2219 = vrot.lane.b32.xlu0 %v324, 96
    %v2220 = vpop.permute.xlu0 %2219
    %v2221 = vsel %vm142, %v324, 0
    %v2223 = vsel %vm142, %v2220, 0
    %2225 = vmatprep.subr.mxu0 0.0
    %2226 = vmatpush1.xpose.msra.mxu0 0.0
    %2227 = vmatprep.subr.mxu0 0.0
    %2228 = vmatpush1.xpose.msra.mxu0 0.0
    %2229 = vmatprep.subr.mxu0 0.0
    %2230 = vmatpush1.xpose.msra.mxu0 0.0
    %2231 = vmatprep.subr.mxu0 0.0
    %2232 = vmatpush1.xpose.msra.mxu0 0.0
    %2233 = vmatprep.subr.mxu0 0.0
    %2234 = vmatpush1.xpose.msra.mxu0 0.0
    %2235 = vmatprep.subr.mxu0 0.0
    %2236 = vmatpush1.xpose.msra.mxu0 0.0
    %2237 = vmatprep.subr.mxu0 0.0
    %2238 = vmatpush1.xpose.msra.mxu0 0.0
    %2239 = vmatprep.subr.mxu0 0.0
    %2240 = vmatpush1.xpose.msra.mxu0 0.0
    %2241 = vmatprep.subr.mxu0 0.0
    %2242 = vmatpush1.xpose.msra.mxu0 0.0
    %2243 = vmatprep.subr.mxu0 0.0
    %2244 = vmatpush1.xpose.msra.mxu0 0.0
    %2245 = vmatprep.subr.mxu0 0.0
    %2246 = vmatpush1.xpose.msra.mxu0 0.0
    %2247 = vmatprep.subr.mxu0 0.0
    %2248 = vmatpush1.xpose.msra.mxu0 0.0
    %2249 = vmatprep.subr.mxu0 0.0
    %2250 = vmatpush1.xpose.msra.mxu0 0.0
    %2251 = vmatprep.subr.mxu0 0.0
    %2252 = vmatpush1.xpose.msra.mxu0 0.0
    %2253 = vmatprep.subr.mxu0 0.0
    %2254 = vmatpush1.xpose.msra.mxu0 0.0
    %2255 = vmatprep.subr.mxu0 0.0
    %2256 = vmatpush1.xpose.msra.mxu0 %v2223
    %2257 = vmatprep.subr.mxu0 0.0
    %2258 = vmatpush2.xpose.msra.mxu0 0.0
    %2259 = vmatprep.subr.mxu0 0.0
    %2260 = vmatpush2.xpose.msra.mxu0 0.0
    %2261 = vmatprep.subr.mxu0 0.0
    %2262 = vmatpush2.xpose.msra.mxu0 0.0
    %2263 = vmatprep.subr.mxu0 0.0
    %2264 = vmatpush2.xpose.msra.mxu0 0.0
    %2265 = vmatprep.subr.mxu0 0.0
    %2266 = vmatpush2.xpose.msra.mxu0 0.0
    %2267 = vmatprep.subr.mxu0 0.0
    %2268 = vmatpush2.xpose.msra.mxu0 0.0
    %2269 = vmatprep.subr.mxu0 0.0
    %2270 = vmatpush2.xpose.msra.mxu0 0.0
    %2271 = vmatprep.subr.mxu0 0.0
    %2272 = vmatpush2.xpose.msra.mxu0 0.0
    %2273 = vmatprep.subr.mxu0 0.0
    %2274 = vmatpush2.xpose.msra.mxu0 0.0
    %2275 = vmatprep.subr.mxu0 0.0
    %2276 = vmatpush2.xpose.msra.mxu0 0.0
    %2277 = vmatprep.subr.mxu0 0.0
    %2278 = vmatpush2.xpose.msra.mxu0 0.0
    %2279 = vmatprep.subr.mxu0 0.0
    %2280 = vmatpush2.xpose.msra.mxu0 0.0
    %2281 = vmatprep.subr.mxu0 0.0
    %2282 = vmatpush2.xpose.msra.mxu0 0.0
    %2283 = vmatprep.subr.mxu0 0.0
    %2284 = vmatpush2.xpose.msra.mxu0 0.0
    %2285 = vmatprep.subr.mxu0 0.0
    %2286 = vmatpush2.xpose.msra.mxu0 0.0
    %2287 = vmatprep.subr.mxu0 0.0
    %2288 = vmatpush2.xpose.msra.mxu0 0.0
    %2289 = vmatprep.mubr.f32.mxu0 0.0
    %2290 = vmatmul.mubr.f32.gmra.mxu0 %v2221
    %v2291 = vpop.f32.mrf.mxu0
    %v2292 = vadd.f32 %v2213, %v2291
    %v2293 = vpop.f32.mrf.mxu0
    %2294 = vdwg.mxu0
    %v2295 = vsel %vm142, %v2292, -inf
    %2296 = vmax.xlane.f32.xlu0 %v2295
    %v2297 = vpop.xlane.xlu0 %2296
    %v2298 = vsub.f32 %v2292, %v2297
    %v2299 = vmul.f32 %v2298, 1.442695
    %v2300 = vpow.pop %v2299
    %v2301 = vsel %vm142, %v2300, 0.0
    %2302 = vadd.xlane.f32.xlu0 %v2301
    %v2303 = vpop.xlane.xlu0 %2302
    %v2304 = vrcp.pop %v2303
    %v2305 = vmul.f32 %v2300, %v2304
    %2306 = vrot.lane.b32.xlu0 %v324, 64
    %v2307 = vpop.permute.xlu0 %2306
    %v2310 = vsel %vm142, %v2305, 0
    %2312 = vmatprep.subr.mxu0 0.0
    %2313 = vmatpush1.msra.mxu0 0.0
    %2314 = vmatprep.subr.mxu0 0.0
    %2315 = vmatpush1.msra.mxu0 0.0
    %2316 = vmatprep.subr.mxu0 0.0
    %2317 = vmatpush1.msra.mxu0 0.0
    %2318 = vmatprep.subr.mxu0 0.0
    %2319 = vmatpush1.msra.mxu0 0.0
    %2320 = vmatprep.subr.mxu0 0.0
    %2321 = vmatpush1.msra.mxu0 0.0
    %2322 = vmatprep.subr.mxu0 0.0
    %2323 = vmatpush1.msra.mxu0 0.0
    %2324 = vmatprep.subr.mxu0 0.0
    %2325 = vmatpush1.msra.mxu0 0.0
    %2326 = vmatprep.subr.mxu0 0.0
    %2327 = vmatpush1.msra.mxu0 0.0
    %2328 = vmatprep.subr.mxu0 0.0
    %2329 = vmatpush1.msra.mxu0 0.0
    %2330 = vmatprep.subr.mxu0 0.0
    %2331 = vmatpush1.msra.mxu0 0.0
    %2332 = vmatprep.subr.mxu0 0.0
    %2333 = vmatpush1.msra.mxu0 0.0
    %2334 = vmatprep.subr.mxu0 0.0
    %2335 = vmatpush1.msra.mxu0 0.0
    %2336 = vmatprep.subr.mxu0 0.0
    %2337 = vmatpush1.msra.mxu0 0.0
    %2338 = vmatprep.subr.mxu0 0.0
    %2339 = vmatpush1.msra.mxu0 0.0
    %2340 = vmatprep.subr.mxu0 0.0
    %2341 = vmatpush1.msra.mxu0 0.0
    %2342 = vmatprep.subr.mxu0 0.0
    %2343 = vmatpush1.msra.mxu0 %v2307
    %2344 = vmatprep.subr.mxu0 0.0
    %2345 = vmatpush2.msra.mxu0 0.0
    %2346 = vmatprep.subr.mxu0 0.0
    %2347 = vmatpush2.msra.mxu0 0.0
    %2348 = vmatprep.subr.mxu0 0.0
    %2349 = vmatpush2.msra.mxu0 0.0
    %2350 = vmatprep.subr.mxu0 0.0
    %2351 = vmatpush2.msra.mxu0 0.0
    %2352 = vmatprep.subr.mxu0 0.0
    %2353 = vmatpush2.msra.mxu0 0.0
    %2354 = vmatprep.subr.mxu0 0.0
    %2355 = vmatpush2.msra.mxu0 0.0
    %2356 = vmatprep.subr.mxu0 0.0
    %2357 = vmatpush2.msra.mxu0 0.0
    %2358 = vmatprep.subr.mxu0 0.0
    %2359 = vmatpush2.msra.mxu0 0.0
    %2360 = vmatprep.subr.mxu0 0.0
    %2361 = vmatpush2.msra.mxu0 0.0
    %2362 = vmatprep.subr.mxu0 0.0
    %2363 = vmatpush2.msra.mxu0 0.0
    %2364 = vmatprep.subr.mxu0 0.0
    %2365 = vmatpush2.msra.mxu0 0.0
    %2366 = vmatprep.subr.mxu0 0.0
    %2367 = vmatpush2.msra.mxu0 0.0
    %2368 = vmatprep.subr.mxu0 0.0
    %2369 = vmatpush2.msra.mxu0 0.0
    %2370 = vmatprep.subr.mxu0 0.0
    %2371 = vmatpush2.msra.mxu0 0.0
    %2372 = vmatprep.subr.mxu0 0.0
    %2373 = vmatpush2.msra.mxu0 0.0
    %2374 = vmatprep.subr.mxu0 0.0
    %2375 = vmatpush2.msra.mxu0 0.0
    %2376 = vmatprep.mubr.f32.mxu0 0.0
    %2377 = vmatmul.mubr.f32.gmra.mxu0 %v2310
    %v2378 = vpop.f32.mrf.mxu0
    %v2379 = vadd.f32 0.0, %v2378
    %v2380 = vpop.f32.mrf.mxu0
    %2381 = vdwg.mxu0
    %2382 = vst.msk [vmem:[#allocation2 + $0x8] sm:$0xff] %vm142, %v2379
    %2383 = vrot.lane.b32.xlu0 %v324, 120
    %v2384 = vpop.permute.xlu0 %2383
    %2385 = vrot.lane.b32.xlu0 %v324, 88
    %v2386 = vpop.permute.xlu0 %2385
    %2388 = vrot.lane.b32.xlu0 %v2213, 120
    %v2389 = vpop.permute.xlu0 %2388
    %v2391 = vsel %vm142, %v2384, 0
    %v2393 = vsel %vm142, %v2386, 0
    %2395 = vmatprep.subr.mxu0 0.0
    %2396 = vmatpush1.xpose.msra.mxu0 0.0
    %2397 = vmatprep.subr.mxu0 0.0
    %2398 = vmatpush1.xpose.msra.mxu0 0.0
    %2399 = vmatprep.subr.mxu0 0.0
    %2400 = vmatpush1.xpose.msra.mxu0 0.0
    %2401 = vmatprep.subr.mxu0 0.0
    %2402 = vmatpush1.xpose.msra.mxu0 0.0
    %2403 = vmatprep.subr.mxu0 0.0
    %2404 = vmatpush1.xpose.msra.mxu0 0.0
    %2405 = vmatprep.subr.mxu0 0.0
    %2406 = vmatpush1.xpose.msra.mxu0 0.0
    %2407 = vmatprep.subr.mxu0 0.0
    %2408 = vmatpush1.xpose.msra.mxu0 0.0
    %2409 = vmatprep.subr.mxu0 0.0
    %2410 = vmatpush1.xpose.msra.mxu0 0.0
    %2411 = vmatprep.subr.mxu0 0.0
    %2412 = vmatpush1.xpose.msra.mxu0 0.0
    %2413 = vmatprep.subr.mxu0 0.0
    %2414 = vmatpush1.xpose.msra.mxu0 0.0
    %2415 = vmatprep.subr.mxu0 0.0
    %2416 = vmatpush1.xpose.msra.mxu0 0.0
    %2417 = vmatprep.subr.mxu0 0.0
    %2418 = vmatpush1.xpose.msra.mxu0 0.0
    %2419 = vmatprep.subr.mxu0 0.0
    %2420 = vmatpush1.xpose.msra.mxu0 0.0
    %2421 = vmatprep.subr.mxu0 0.0
    %2422 = vmatpush1.xpose.msra.mxu0 0.0
    %2423 = vmatprep.subr.mxu0 0.0
    %2424 = vmatpush1.xpose.msra.mxu0 0.0
    %2425 = vmatprep.subr.mxu0 0.0
    %2426 = vmatpush1.xpose.msra.mxu0 %v2393
    %2427 = vmatprep.subr.mxu0 0.0
    %2428 = vmatpush2.xpose.msra.mxu0 0.0
    %2429 = vmatprep.subr.mxu0 0.0
    %2430 = vmatpush2.xpose.msra.mxu0 0.0
    %2431 = vmatprep.subr.mxu0 0.0
    %2432 = vmatpush2.xpose.msra.mxu0 0.0
    %2433 = vmatprep.subr.mxu0 0.0
    %2434 = vmatpush2.xpose.msra.mxu0 0.0
    %2435 = vmatprep.subr.mxu0 0.0
    %2436 = vmatpush2.xpose.msra.mxu0 0.0
    %2437 = vmatprep.subr.mxu0 0.0
    %2438 = vmatpush2.xpose.msra.mxu0 0.0
    %2439 = vmatprep.subr.mxu0 0.0
    %2440 = vmatpush2.xpose.msra.mxu0 0.0
    %2441 = vmatprep.subr.mxu0 0.0
    %2442 = vmatpush2.xpose.msra.mxu0 0.0
    %2443 = vmatprep.subr.mxu0 0.0
    %2444 = vmatpush2.xpose.msra.mxu0 0.0
    %2445 = vmatprep.subr.mxu0 0.0
    %2446 = vmatpush2.xpose.msra.mxu0 0.0
    %2447 = vmatprep.subr.mxu0 0.0
    %2448 = vmatpush2.xpose.msra.mxu0 0.0
    %2449 = vmatprep.subr.mxu0 0.0
    %2450 = vmatpush2.xpose.msra.mxu0 0.0
    %2451 = vmatprep.subr.mxu0 0.0
    %2452 = vmatpush2.xpose.msra.mxu0 0.0
    %2453 = vmatprep.subr.mxu0 0.0
    %2454 = vmatpush2.xpose.msra.mxu0 0.0
    %2455 = vmatprep.subr.mxu0 0.0
    %2456 = vmatpush2.xpose.msra.mxu0 0.0
    %2457 = vmatprep.subr.mxu0 0.0
    %2458 = vmatpush2.xpose.msra.mxu0 0.0
    %2459 = vmatprep.mubr.f32.mxu0 0.0
    %2460 = vmatmul.mubr.f32.gmra.mxu0 %v2391
    %v2461 = vpop.f32.mrf.mxu0
    %v2462 = vadd.f32 %v2389, %v2461
    %v2463 = vpop.f32.mrf.mxu0
    %2464 = vdwg.mxu0
    %v2465 = vsel %vm142, %v2462, -inf
    %2466 = vmax.xlane.f32.xlu0 %v2465
    %v2467 = vpop.xlane.xlu0 %2466
    %v2468 = vsub.f32 %v2462, %v2467
    %v2469 = vmul.f32 %v2468, 1.442695
    %v2470 = vpow.pop %v2469
    %v2471 = vsel %vm142, %v2470, 0.0
    %2472 = vadd.xlane.f32.xlu0 %v2471
    %v2473 = vpop.xlane.xlu0 %2472
    %v2474 = vrcp.pop %v2473
    %v2475 = vmul.f32 %v2470, %v2474
    %2476 = vrot.lane.b32.xlu0 %v324, 56
    %v2477 = vpop.permute.xlu0 %2476
    %v2480 = vsel %vm142, %v2475, 0
    %2482 = vmatprep.subr.mxu0 0.0
    %2483 = vmatpush1.msra.mxu0 0.0
    %2484 = vmatprep.subr.mxu0 0.0
    %2485 = vmatpush1.msra.mxu0 0.0
    %2486 = vmatprep.subr.mxu0 0.0
    %2487 = vmatpush1.msra.mxu0 0.0
    %2488 = vmatprep.subr.mxu0 0.0
    %2489 = vmatpush1.msra.mxu0 0.0
    %2490 = vmatprep.subr.mxu0 0.0
    %2491 = vmatpush1.msra.mxu0 0.0
    %2492 = vmatprep.subr.mxu0 0.0
    %2493 = vmatpush1.msra.mxu0 0.0
    %2494 = vmatprep.subr.mxu0 0.0
    %2495 = vmatpush1.msra.mxu0 0.0
    %2496 = vmatprep.subr.mxu0 0.0
    %2497 = vmatpush1.msra.mxu0 0.0
    %2498 = vmatprep.subr.mxu0 0.0
    %2499 = vmatpush1.msra.mxu0 0.0
    %2500 = vmatprep.subr.mxu0 0.0
    %2501 = vmatpush1.msra.mxu0 0.0
    %2502 = vmatprep.subr.mxu0 0.0
    %2503 = vmatpush1.msra.mxu0 0.0
    %2504 = vmatprep.subr.mxu0 0.0
    %2505 = vmatpush1.msra.mxu0 0.0
    %2506 = vmatprep.subr.mxu0 0.0
    %2507 = vmatpush1.msra.mxu0 0.0
    %2508 = vmatprep.subr.mxu0 0.0
    %2509 = vmatpush1.msra.mxu0 0.0
    %2510 = vmatprep.subr.mxu0 0.0
    %2511 = vmatpush1.msra.mxu0 0.0
    %2512 = vmatprep.subr.mxu0 0.0
    %2513 = vmatpush1.msra.mxu0 %v2477
    %2514 = vmatprep.subr.mxu0 0.0
    %2515 = vmatpush2.msra.mxu0 0.0
    %2516 = vmatprep.subr.mxu0 0.0
    %2517 = vmatpush2.msra.mxu0 0.0
    %2518 = vmatprep.subr.mxu0 0.0
    %2519 = vmatpush2.msra.mxu0 0.0
    %2520 = vmatprep.subr.mxu0 0.0
    %2521 = vmatpush2.msra.mxu0 0.0
    %2522 = vmatprep.subr.mxu0 0.0
    %2523 = vmatpush2.msra.mxu0 0.0
    %2524 = vmatprep.subr.mxu0 0.0
    %2525 = vmatpush2.msra.mxu0 0.0
    %2526 = vmatprep.subr.mxu0 0.0
    %2527 = vmatpush2.msra.mxu0 0.0
    %2528 = vmatprep.subr.mxu0 0.0
    %2529 = vmatpush2.msra.mxu0 0.0
    %2530 = vmatprep.subr.mxu0 0.0
    %2531 = vmatpush2.msra.mxu0 0.0
    %2532 = vmatprep.subr.mxu0 0.0
    %2533 = vmatpush2.msra.mxu0 0.0
    %2534 = vmatprep.subr.mxu0 0.0
    %2535 = vmatpush2.msra.mxu0 0.0
    %2536 = vmatprep.subr.mxu0 0.0
    %2537 = vmatpush2.msra.mxu0 0.0
    %2538 = vmatprep.subr.mxu0 0.0
    %2539 = vmatpush2.msra.mxu0 0.0
    %2540 = vmatprep.subr.mxu0 0.0
    %2541 = vmatpush2.msra.mxu0 0.0
    %2542 = vmatprep.subr.mxu0 0.0
    %2543 = vmatpush2.msra.mxu0 0.0
    %2544 = vmatprep.subr.mxu0 0.0
    %2545 = vmatpush2.msra.mxu0 0.0
    %2546 = vmatprep.mubr.f32.mxu0 0.0
    %2547 = vmatmul.mubr.f32.gmra.mxu0 %v2480
    %v2548 = vpop.f32.mrf.mxu0
    %v2549 = vadd.f32 0.0, %v2548
    %v2550 = vpop.f32.mrf.mxu0
    %2551 = vdwg.mxu0
    %2553 = vrot.lane.b32.xlu0 %v2549, 8
    %v2554 = vpop.permute.xlu0 %2553
    %2556 = vst.msk [vmem:[#allocation2 + $0x8] sm:$0xff] %vm1270, %v2554
    %2557 = vrot.lane.b32.xlu0 %v324, 112
    %v2558 = vpop.permute.xlu0 %2557
    %2559 = vrot.lane.b32.xlu0 %v324, 80
    %v2560 = vpop.permute.xlu0 %2559
    %2561 = vrot.lane.b32.xlu0 %v2213, 112
    %v2562 = vpop.permute.xlu0 %2561
    %v2564 = vsel %vm142, %v2558, 0
    %v2566 = vsel %vm142, %v2560, 0
    %2568 = vmatprep.subr.mxu0 0.0
    %2569 = vmatpush1.xpose.msra.mxu0 0.0
    %2570 = vmatprep.subr.mxu0 0.0
    %2571 = vmatpush1.xpose.msra.mxu0 0.0
    %2572 = vmatprep.subr.mxu0 0.0
    %2573 = vmatpush1.xpose.msra.mxu0 0.0
    %2574 = vmatprep.subr.mxu0 0.0
    %2575 = vmatpush1.xpose.msra.mxu0 0.0
    %2576 = vmatprep.subr.mxu0 0.0
    %2577 = vmatpush1.xpose.msra.mxu0 0.0
    %2578 = vmatprep.subr.mxu0 0.0
    %2579 = vmatpush1.xpose.msra.mxu0 0.0
    %2580 = vmatprep.subr.mxu0 0.0
    %2581 = vmatpush1.xpose.msra.mxu0 0.0
    %2582 = vmatprep.subr.mxu0 0.0
    %2583 = vmatpush1.xpose.msra.mxu0 0.0
    %2584 = vmatprep.subr.mxu0 0.0
    %2585 = vmatpush1.xpose.msra.mxu0 0.0
    %2586 = vmatprep.subr.mxu0 0.0
    %2587 = vmatpush1.xpose.msra.mxu0 0.0
    %2588 = vmatprep.subr.mxu0 0.0
    %2589 = vmatpush1.xpose.msra.mxu0 0.0
    %2590 = vmatprep.subr.mxu0 0.0
    %2591 = vmatpush1.xpose.msra.mxu0 0.0
    %2592 = vmatprep.subr.mxu0 0.0
    %2593 = vmatpush1.xpose.msra.mxu0 0.0
    %2594 = vmatprep.subr.mxu0 0.0
    %2595 = vmatpush1.xpose.msra.mxu0 0.0
    %2596 = vmatprep.subr.mxu0 0.0
    %2597 = vmatpush1.xpose.msra.mxu0 0.0
    %2598 = vmatprep.subr.mxu0 0.0
    %2599 = vmatpush1.xpose.msra.mxu0 %v2566
    %2600 = vmatprep.subr.mxu0 0.0
    %2601 = vmatpush2.xpose.msra.mxu0 0.0
    %2602 = vmatprep.subr.mxu0 0.0
    %2603 = vmatpush2.xpose.msra.mxu0 0.0
    %2604 = vmatprep.subr.mxu0 0.0
    %2605 = vmatpush2.xpose.msra.mxu0 0.0
    %2606 = vmatprep.subr.mxu0 0.0
    %2607 = vmatpush2.xpose.msra.mxu0 0.0
    %2608 = vmatprep.subr.mxu0 0.0
    %2609 = vmatpush2.xpose.msra.mxu0 0.0
    %2610 = vmatprep.subr.mxu0 0.0
    %2611 = vmatpush2.xpose.msra.mxu0 0.0
    %2612 = vmatprep.subr.mxu0 0.0
    %2613 = vmatpush2.xpose.msra.mxu0 0.0
    %2614 = vmatprep.subr.mxu0 0.0
    %2615 = vmatpush2.xpose.msra.mxu0 0.0
    %2616 = vmatprep.subr.mxu0 0.0
    %2617 = vmatpush2.xpose.msra.mxu0 0.0
    %2618 = vmatprep.subr.mxu0 0.0
    %2619 = vmatpush2.xpose.msra.mxu0 0.0
    %2620 = vmatprep.subr.mxu0 0.0
    %2621 = vmatpush2.xpose.msra.mxu0 0.0
    %2622 = vmatprep.subr.mxu0 0.0
    %2623 = vmatpush2.xpose.msra.mxu0 0.0
    %2624 = vmatprep.subr.mxu0 0.0
    %2625 = vmatpush2.xpose.msra.mxu0 0.0
    %2626 = vmatprep.subr.mxu0 0.0
    %2627 = vmatpush2.xpose.msra.mxu0 0.0
    %2628 = vmatprep.subr.mxu0 0.0
    %2629 = vmatpush2.xpose.msra.mxu0 0.0
    %2630 = vmatprep.subr.mxu0 0.0
    %2631 = vmatpush2.xpose.msra.mxu0 0.0
    %2632 = vmatprep.mubr.f32.mxu0 0.0
    %2633 = vmatmul.mubr.f32.gmra.mxu0 %v2564
    %v2634 = vpop.f32.mrf.mxu0
    %v2635 = vadd.f32 %v2562, %v2634
    %v2636 = vpop.f32.mrf.mxu0
    %2637 = vdwg.mxu0
    %v2638 = vsel %vm142, %v2635, -inf
    %2639 = vmax.xlane.f32.xlu0 %v2638
    %v2640 = vpop.xlane.xlu0 %2639
    %v2641 = vsub.f32 %v2635, %v2640
    %v2642 = vmul.f32 %v2641, 1.442695
    %v2643 = vpow.pop %v2642
    %v2644 = vsel %vm142, %v2643, 0.0
    %2645 = vadd.xlane.f32.xlu0 %v2644
    %v2646 = vpop.xlane.xlu0 %2645
    %v2647 = vrcp.pop %v2646
    %v2648 = vmul.f32 %v2643, %v2647
    %2649 = vrot.lane.b32.xlu0 %v324, 48
    %v2650 = vpop.permute.xlu0 %2649
    %v2653 = vsel %vm142, %v2648, 0
    %2655 = vmatprep.subr.mxu0 0.0
    %2656 = vmatpush1.msra.mxu0 0.0
    %2657 = vmatprep.subr.mxu0 0.0
    %2658 = vmatpush1.msra.mxu0 0.0
    %2659 = vmatprep.subr.mxu0 0.0
    %2660 = vmatpush1.msra.mxu0 0.0
    %2661 = vmatprep.subr.mxu0 0.0
    %2662 = vmatpush1.msra.mxu0 0.0
    %2663 = vmatprep.subr.mxu0 0.0
    %2664 = vmatpush1.msra.mxu0 0.0
    %2665 = vmatprep.subr.mxu0 0.0
    %2666 = vmatpush1.msra.mxu0 0.0
    %2667 = vmatprep.subr.mxu0 0.0
    %2668 = vmatpush1.msra.mxu0 0.0
    %2669 = vmatprep.subr.mxu0 0.0
    %2670 = vmatpush1.msra.mxu0 0.0
    %2671 = vmatprep.subr.mxu0 0.0
    %2672 = vmatpush1.msra.mxu0 0.0
    %2673 = vmatprep.subr.mxu0 0.0
    %2674 = vmatpush1.msra.mxu0 0.0
    %2675 = vmatprep.subr.mxu0 0.0
    %2676 = vmatpush1.msra.mxu0 0.0
    %2677 = vmatprep.subr.mxu0 0.0
    %2678 = vmatpush1.msra.mxu0 0.0
    %2679 = vmatprep.subr.mxu0 0.0
    %2680 = vmatpush1.msra.mxu0 0.0
    %2681 = vmatprep.subr.mxu0 0.0
    %2682 = vmatpush1.msra.mxu0 0.0
    %2683 = vmatprep.subr.mxu0 0.0
    %2684 = vmatpush1.msra.mxu0 0.0
    %2685 = vmatprep.subr.mxu0 0.0
    %2686 = vmatpush1.msra.mxu0 %v2650
    %2687 = vmatprep.subr.mxu0 0.0
    %2688 = vmatpush2.msra.mxu0 0.0
    %2689 = vmatprep.subr.mxu0 0.0
    %2690 = vmatpush2.msra.mxu0 0.0
    %2691 = vmatprep.subr.mxu0 0.0
    %2692 = vmatpush2.msra.mxu0 0.0
    %2693 = vmatprep.subr.mxu0 0.0
    %2694 = vmatpush2.msra.mxu0 0.0
    %2695 = vmatprep.subr.mxu0 0.0
    %2696 = vmatpush2.msra.mxu0 0.0
    %2697 = vmatprep.subr.mxu0 0.0
    %2698 = vmatpush2.msra.mxu0 0.0
    %2699 = vmatprep.subr.mxu0 0.0
    %2700 = vmatpush2.msra.mxu0 0.0
    %2701 = vmatprep.subr.mxu0 0.0
    %2702 = vmatpush2.msra.mxu0 0.0
    %2703 = vmatprep.subr.mxu0 0.0
    %2704 = vmatpush2.msra.mxu0 0.0
    %2705 = vmatprep.subr.mxu0 0.0
    %2706 = vmatpush2.msra.mxu0 0.0
    %2707 = vmatprep.subr.mxu0 0.0
    %2708 = vmatpush2.msra.mxu0 0.0
    %2709 = vmatprep.subr.mxu0 0.0
    %2710 = vmatpush2.msra.mxu0 0.0
    %2711 = vmatprep.subr.mxu0 0.0
    %2712 = vmatpush2.msra.mxu0 0.0
    %2713 = vmatprep.subr.mxu0 0.0
    %2714 = vmatpush2.msra.mxu0 0.0
    %2715 = vmatprep.subr.mxu0 0.0
    %2716 = vmatpush2.msra.mxu0 0.0
    %2717 = vmatprep.subr.mxu0 0.0
    %2718 = vmatpush2.msra.mxu0 0.0
    %2719 = vmatprep.mubr.f32.mxu0 0.0
    %2720 = vmatmul.mubr.f32.gmra.mxu0 %v2653
    %v2721 = vpop.f32.mrf.mxu0
    %v2722 = vadd.f32 0.0, %v2721
    %v2723 = vpop.f32.mrf.mxu0
    %2724 = vdwg.mxu0
    %2726 = vrot.lane.b32.xlu0 %v2722, 16
    %v2727 = vpop.permute.xlu0 %2726
    %2729 = vst.msk [vmem:[#allocation2 + $0x8] sm:$0xff] %vm1444, %v2727
    %2730 = vrot.lane.b32.xlu0 %v324, 104
    %v2731 = vpop.permute.xlu0 %2730
    %2732 = vrot.lane.b32.xlu0 %v324, 72
    %v2733 = vpop.permute.xlu0 %2732
    %2734 = vrot.lane.b32.xlu0 %v2213, 104
    %v2735 = vpop.permute.xlu0 %2734
    %v2737 = vsel %vm142, %v2731, 0
    %v2739 = vsel %vm142, %v2733, 0
    %2741 = vmatprep.subr.mxu0 0.0
    %2742 = vmatpush1.xpose.msra.mxu0 0.0
    %2743 = vmatprep.subr.mxu0 0.0
    %2744 = vmatpush1.xpose.msra.mxu0 0.0
    %2745 = vmatprep.subr.mxu0 0.0
    %2746 = vmatpush1.xpose.msra.mxu0 0.0
    %2747 = vmatprep.subr.mxu0 0.0
    %2748 = vmatpush1.xpose.msra.mxu0 0.0
    %2749 = vmatprep.subr.mxu0 0.0
    %2750 = vmatpush1.xpose.msra.mxu0 0.0
    %2751 = vmatprep.subr.mxu0 0.0
    %2752 = vmatpush1.xpose.msra.mxu0 0.0
    %2753 = vmatprep.subr.mxu0 0.0
    %2754 = vmatpush1.xpose.msra.mxu0 0.0
    %2755 = vmatprep.subr.mxu0 0.0
    %2756 = vmatpush1.xpose.msra.mxu0 0.0
    %2757 = vmatprep.subr.mxu0 0.0
    %2758 = vmatpush1.xpose.msra.mxu0 0.0
    %2759 = vmatprep.subr.mxu0 0.0
    %2760 = vmatpush1.xpose.msra.mxu0 0.0
    %2761 = vmatprep.subr.mxu0 0.0
    %2762 = vmatpush1.xpose.msra.mxu0 0.0
    %2763 = vmatprep.subr.mxu0 0.0
    %2764 = vmatpush1.xpose.msra.mxu0 0.0
    %2765 = vmatprep.subr.mxu0 0.0
    %2766 = vmatpush1.xpose.msra.mxu0 0.0
    %2767 = vmatprep.subr.mxu0 0.0
    %2768 = vmatpush1.xpose.msra.mxu0 0.0
    %2769 = vmatprep.subr.mxu0 0.0
    %2770 = vmatpush1.xpose.msra.mxu0 0.0
    %2771 = vmatprep.subr.mxu0 0.0
    %2772 = vmatpush1.xpose.msra.mxu0 %v2739
    %2773 = vmatprep.subr.mxu0 0.0
    %2774 = vmatpush2.xpose.msra.mxu0 0.0
    %2775 = vmatprep.subr.mxu0 0.0
    %2776 = vmatpush2.xpose.msra.mxu0 0.0
    %2777 = vmatprep.subr.mxu0 0.0
    %2778 = vmatpush2.xpose.msra.mxu0 0.0
    %2779 = vmatprep.subr.mxu0 0.0
    %2780 = vmatpush2.xpose.msra.mxu0 0.0
    %2781 = vmatprep.subr.mxu0 0.0
    %2782 = vmatpush2.xpose.msra.mxu0 0.0
    %2783 = vmatprep.subr.mxu0 0.0
    %2784 = vmatpush2.xpose.msra.mxu0 0.0
    %2785 = vmatprep.subr.mxu0 0.0
    %2786 = vmatpush2.xpose.msra.mxu0 0.0
    %2787 = vmatprep.subr.mxu0 0.0
    %2788 = vmatpush2.xpose.msra.mxu0 0.0
    %2789 = vmatprep.subr.mxu0 0.0
    %2790 = vmatpush2.xpose.msra.mxu0 0.0
    %2791 = vmatprep.subr.mxu0 0.0
    %2792 = vmatpush2.xpose.msra.mxu0 0.0
    %2793 = vmatprep.subr.mxu0 0.0
    %2794 = vmatpush2.xpose.msra.mxu0 0.0
    %2795 = vmatprep.subr.mxu0 0.0
    %2796 = vmatpush2.xpose.msra.mxu0 0.0
    %2797 = vmatprep.subr.mxu0 0.0
    %2798 = vmatpush2.xpose.msra.mxu0 0.0
    %2799 = vmatprep.subr.mxu0 0.0
    %2800 = vmatpush2.xpose.msra.mxu0 0.0
    %2801 = vmatprep.subr.mxu0 0.0
    %2802 = vmatpush2.xpose.msra.mxu0 0.0
    %2803 = vmatprep.subr.mxu0 0.0
    %2804 = vmatpush2.xpose.msra.mxu0 0.0
    %2805 = vmatprep.mubr.f32.mxu0 0.0
    %2806 = vmatmul.mubr.f32.gmra.mxu0 %v2737
    %v2807 = vpop.f32.mrf.mxu0
    %v2808 = vadd.f32 %v2735, %v2807
    %v2809 = vpop.f32.mrf.mxu0
    %2810 = vdwg.mxu0
    %v2811 = vsel %vm142, %v2808, -inf
    %2812 = vmax.xlane.f32.xlu0 %v2811
    %v2813 = vpop.xlane.xlu0 %2812
    %v2814 = vsub.f32 %v2808, %v2813
    %v2815 = vmul.f32 %v2814, 1.442695
    %v2816 = vpow.pop %v2815
    %v2817 = vsel %vm142, %v2816, 0.0
    %2818 = vadd.xlane.f32.xlu0 %v2817
    %v2819 = vpop.xlane.xlu0 %2818
    %v2820 = vrcp.pop %v2819
    %v2821 = vmul.f32 %v2816, %v2820
    %2822 = vrot.lane.b32.xlu0 %v324, 40
    %v2823 = vpop.permute.xlu0 %2822
    %v2826 = vsel %vm142, %v2821, 0
    %2828 = vmatprep.subr.mxu0 0.0
    %2829 = vmatpush1.msra.mxu0 0.0
    %2830 = vmatprep.subr.mxu0 0.0
    %2831 = vmatpush1.msra.mxu0 0.0
    %2832 = vmatprep.subr.mxu0 0.0
    %2833 = vmatpush1.msra.mxu0 0.0
    %2834 = vmatprep.subr.mxu0 0.0
    %2835 = vmatpush1.msra.mxu0 0.0
    %2836 = vmatprep.subr.mxu0 0.0
    %2837 = vmatpush1.msra.mxu0 0.0
    %2838 = vmatprep.subr.mxu0 0.0
    %2839 = vmatpush1.msra.mxu0 0.0
    %2840 = vmatprep.subr.mxu0 0.0
    %2841 = vmatpush1.msra.mxu0 0.0
    %2842 = vmatprep.subr.mxu0 0.0
    %2843 = vmatpush1.msra.mxu0 0.0
    %2844 = vmatprep.subr.mxu0 0.0
    %2845 = vmatpush1.msra.mxu0 0.0
    %2846 = vmatprep.subr.mxu0 0.0
    %2847 = vmatpush1.msra.mxu0 0.0
    %2848 = vmatprep.subr.mxu0 0.0
    %2849 = vmatpush1.msra.mxu0 0.0
    %2850 = vmatprep.subr.mxu0 0.0
    %2851 = vmatpush1.msra.mxu0 0.0
    %2852 = vmatprep.subr.mxu0 0.0
    %2853 = vmatpush1.msra.mxu0 0.0
    %2854 = vmatprep.subr.mxu0 0.0
    %2855 = vmatpush1.msra.mxu0 0.0
    %2856 = vmatprep.subr.mxu0 0.0
    %2857 = vmatpush1.msra.mxu0 0.0
    %2858 = vmatprep.subr.mxu0 0.0
    %2859 = vmatpush1.msra.mxu0 %v2823
    %2860 = vmatprep.subr.mxu0 0.0
    %2861 = vmatpush2.msra.mxu0 0.0
    %2862 = vmatprep.subr.mxu0 0.0
    %2863 = vmatpush2.msra.mxu0 0.0
    %2864 = vmatprep.subr.mxu0 0.0
    %2865 = vmatpush2.msra.mxu0 0.0
    %2866 = vmatprep.subr.mxu0 0.0
    %2867 = vmatpush2.msra.mxu0 0.0
    %2868 = vmatprep.subr.mxu0 0.0
    %2869 = vmatpush2.msra.mxu0 0.0
    %2870 = vmatprep.subr.mxu0 0.0
    %2871 = vmatpush2.msra.mxu0 0.0
    %2872 = vmatprep.subr.mxu0 0.0
    %2873 = vmatpush2.msra.mxu0 0.0
    %2874 = vmatprep.subr.mxu0 0.0
    %2875 = vmatpush2.msra.mxu0 0.0
    %2876 = vmatprep.subr.mxu0 0.0
    %2877 = vmatpush2.msra.mxu0 0.0
    %2878 = vmatprep.subr.mxu0 0.0
    %2879 = vmatpush2.msra.mxu0 0.0
    %2880 = vmatprep.subr.mxu0 0.0
    %2881 = vmatpush2.msra.mxu0 0.0
    %2882 = vmatprep.subr.mxu0 0.0
    %2883 = vmatpush2.msra.mxu0 0.0
    %2884 = vmatprep.subr.mxu0 0.0
    %2885 = vmatpush2.msra.mxu0 0.0
    %2886 = vmatprep.subr.mxu0 0.0
    %2887 = vmatpush2.msra.mxu0 0.0
    %2888 = vmatprep.subr.mxu0 0.0
    %2889 = vmatpush2.msra.mxu0 0.0
    %2890 = vmatprep.subr.mxu0 0.0
    %2891 = vmatpush2.msra.mxu0 0.0
    %2892 = vmatprep.mubr.f32.mxu0 0.0
    %2893 = vmatmul.mubr.f32.gmra.mxu0 %v2826
    %v2894 = vpop.f32.mrf.mxu0
    %v2895 = vadd.f32 0.0, %v2894
    %v2896 = vpop.f32.mrf.mxu0
    %2897 = vdwg.mxu0
    %2899 = vrot.lane.b32.xlu0 %v2895, 24
    %v2900 = vpop.permute.xlu0 %2899
    %2902 = vst.msk [vmem:[#allocation2 + $0x8] sm:$0xff] %vm1618, %v2900
    %v2903 = vld [vmem:[#allocation2] sm:$0xff]
    %v2904 = vld [vmem:[#allocation2 + $0x8] sm:$0xff]
    %v2905 = vpack.c.bf16 %v2904, %v2903
    %v2910 = vunpack.c.l.b16 %v38
    %v2911 = vunpack.c.l.b16 %v39
    %v2912 = vunpack.c.l.b16 %v40
    %v2913 = vunpack.c.l.b16 %v41
    %v2914 = vpack.c.b16 %v2911, %v2910
    %v2915 = vpack.c.b16 %v2913, %v2912
    %v2919 = vsel %vm226, %v2905, 0
    %2921 = vmatprep.subr.bf16.mxu0 0
    %2922 = vmatpush1.bf16.msra.mxu0 0
    %2923 = vmatprep.subr.bf16.mxu0 0
    %2924 = vmatpush1.bf16.msra.mxu0 0
    %2925 = vmatprep.subr.bf16.mxu0 0
    %2926 = vmatpush1.bf16.msra.mxu0 0
    %2927 = vmatprep.subr.bf16.mxu0 0
    %2928 = vmatpush1.bf16.msra.mxu0 0
    %2929 = vmatprep.subr.bf16.mxu0 0
    %2930 = vmatpush1.bf16.msra.mxu0 0
    %2931 = vmatprep.subr.bf16.mxu0 0
    %2932 = vmatpush1.bf16.msra.mxu0 0
    %2933 = vmatprep.subr.bf16.mxu0 0
    %2934 = vmatpush1.bf16.msra.mxu0 %v2915
    %2935 = vmatprep.subr.bf16.mxu0 0
    %2936 = vmatpush1.bf16.msra.mxu0 %v2914
    %2937 = vmatprep.subr.bf16.mxu0 0
    %2938 = vmatpush2.bf16.msra.mxu0 0
    %2939 = vmatprep.subr.bf16.mxu0 0
    %2940 = vmatpush2.bf16.msra.mxu0 0
    %2941 = vmatprep.subr.bf16.mxu0 0
    %2942 = vmatpush2.bf16.msra.mxu0 0
    %2943 = vmatprep.subr.bf16.mxu0 0
    %2944 = vmatpush2.bf16.msra.mxu0 0
    %2945 = vmatprep.subr.bf16.mxu0 0
    %2946 = vmatpush2.bf16.msra.mxu0 0
    %2947 = vmatprep.subr.bf16.mxu0 0
    %2948 = vmatpush2.bf16.msra.mxu0 0
    %2949 = vmatprep.subr.bf16.mxu0 0
    %2950 = vmatpush2.bf16.msra.mxu0 0
    %2951 = vmatprep.subr.bf16.mxu0 0
    %2952 = vmatpush2.bf16.msra.mxu0 0
    %2953 = vmatprep.mubr.bf16.mxu0 0
    %2954 = vmatmul.mubr.bf16.gmra.mxu0 %v2919
    %v2955 = vpop.f32.mrf.mxu0
    %v2956 = vadd.f32 0.0, %v2955
    %v2957 = vpop.f32.mrf.mxu0
    %v2958 = vpop.f32.mrf.mxu0
    %v2959 = vadd.f32 0.0, %v2958
    %v2960 = vpop.f32.mrf.mxu0
    %2961 = vdwg.mxu0
    %v2962 = vadd.f32 %v224, %v2956
    %v2963 = vadd.f32 %v225, %v2959
    %v2964 = vlaneseq
    %v2965 = vshrl.u32 %v2964, 7
    %v2966 = vsub.s32 0, %v2965
    %v2967 = vrot.slane %v53, %v2966
    %v2968 = vadd.f32 %v2962, %v2967
    %v2969 = vadd.f32 %v2963, %v2967
    %v2970 = vsel %vm226, %v2968, 0.0
    %2971 = vadd.xlane.f32.xlu0 %v2970
    %v2972 = vpop.xlane.xlu0 %2971
    %v2973 = vsel %vm226, %v2969, 0.0
    %2974 = vadd.xlane.f32.xlu0 %v2973
    %v2975 = vpop.xlane.xlu0 %2974
    %v2976 = vmul.f32 %v2972, %v233
    %v2977 = vmul.f32 %v2975, %v233
    %v2978 = vsub.f32 %v2968, %v2976
    %v2979 = vsub.f32 %v2969, %v2977
    %v2980 = vmul.f32 %v2978, %v2978
    %v2981 = vmul.f32 %v2979, %v2979
    %v2982 = vsel %vm226, %v2980, 0.0
    %2983 = vadd.xlane.f32.xlu0 %v2982
    %v2984 = vpop.xlane.xlu0 %2983
    %v2985 = vsel %vm226, %v2981, 0.0
    %2986 = vadd.xlane.f32.xlu0 %v2985
    %v2987 = vpop.xlane.xlu0 %2986
    %v2988 = vmul.f32 %v2984, %v233
    %v2989 = vmul.f32 %v2987, %v233
    %v2990 = vadd.f32 %v2988, 1e-05
    %v2991 = vadd.f32 %v2989, 1e-05
    %v2992 = vrsqrt.pop %v2990
    %v2993 = vrsqrt.pop %v2991
    %v2994 = vmul.f32 %v2978, %v2992
    %v2995 = vmul.f32 %v2979, %v2993
    %v2996 = vlaneseq
    %v2997 = vshrl.u32 %v2996, 7
    %v2998 = vsub.s32 0, %v2997
    %v2999 = vrot.slane %v57, %v2998
    %v3000 = vmul.f32 %v2994, %v2999
    %v3001 = vmul.f32 %v2995, %v2999
    %v3002 = vlaneseq
    %v3003 = vshrl.u32 %v3002, 7
    %v3004 = vsub.s32 0, %v3003
    %v3005 = vrot.slane %v58, %v3004
    %v3006 = vadd.f32 %v3000, %v3005
    %v3007 = vadd.f32 %v3001, %v3005
    %v3008 = vpack.c.bf16 %v3007, %v3006
    %v3009 = vlaneseq
    %v3010 = vshrl.u32 %v3009, 7
    %v3011 = vsub.s32 0, %v3010
    %v3012 = vrot.slane %v51, %v3011
    %v3017 = vunpack.c.l.b16 %v32
    %v3018 = vunpack.c.l.b16 %v33
    %v3019 = vunpack.c.l.b16 %v34
    %v3020 = vunpack.c.l.b16 %v35
    %v3021 = vpack.c.b16 %v3018, %v3017
    %v3022 = vpack.c.b16 %v3020, %v3019
    %v3026 = vsel %vm226, %v3008, 0
    %3028 = vmatprep.subr.bf16.mxu0 0
    %3029 = vmatpush1.bf16.msra.mxu0 0
    %3030 = vmatprep.subr.bf16.mxu0 0
    %3031 = vmatpush1.bf16.msra.mxu0 0
    %3032 = vmatprep.subr.bf16.mxu0 0
    %3033 = vmatpush1.bf16.msra.mxu0 0
    %3034 = vmatprep.subr.bf16.mxu0 0
    %3035 = vmatpush1.bf16.msra.mxu0 0
    %3036 = vmatprep.subr.bf16.mxu0 0
    %3037 = vmatpush1.bf16.msra.mxu0 0
    %3038 = vmatprep.subr.bf16.mxu0 0
    %3039 = vmatpush1.bf16.msra.mxu0 0
    %3040 = vmatprep.subr.bf16.mxu0 0
    %3041 = vmatpush1.bf16.msra.mxu0 %v3022
    %3042 = vmatprep.subr.bf16.mxu0 0
    %3043 = vmatpush1.bf16.msra.mxu0 %v3021
    %3044 = vmatprep.subr.bf16.mxu0 0
    %3045 = vmatpush2.bf16.msra.mxu0 0
    %3046 = vmatprep.subr.bf16.mxu0 0
    %3047 = vmatpush2.bf16.msra.mxu0 0
    %3048 = vmatprep.subr.bf16.mxu0 0
    %3049 = vmatpush2.bf16.msra.mxu0 0
    %3050 = vmatprep.subr.bf16.mxu0 0
    %3051 = vmatpush2.bf16.msra.mxu0 0
    %3052 = vmatprep.subr.bf16.mxu0 0
    %3053 = vmatpush2.bf16.msra.mxu0 0
    %3054 = vmatprep.subr.bf16.mxu0 0
    %3055 = vmatpush2.bf16.msra.mxu0 0
    %3056 = vmatprep.subr.bf16.mxu0 0
    %3057 = vmatpush2.bf16.msra.mxu0 0
    %3058 = vmatprep.subr.bf16.mxu0 0
    %3059 = vmatpush2.bf16.msra.mxu0 0
    %3060 = vmatprep.mubr.bf16.mxu0 0
    %3061 = vmatmul.mubr.bf16.gmra.mxu0 %v3026
    %v3062 = vpop.f32.mrf.mxu0
    %v3063 = vadd.f32 %v3012, %v3062
    %v3064 = vpop.f32.mrf.mxu0
    %v3065 = vpop.f32.mrf.mxu0
    %v3066 = vadd.f32 %v3012, %v3065
    %v3067 = vpop.f32.mrf.mxu0
    %3068 = vdwg.mxu0
    %v3069 = vmax.f32 %v3063, 0.0
    %v3070 = vmax.f32 %v3066, 0.0
    %v3071 = vpack.c.bf16 %v3070, %v3069
    %v3072 = vlaneseq
    %v3073 = vshrl.u32 %v3072, 7
    %v3074 = vsub.s32 0, %v3073
    %v3075 = vrot.slane %v54, %v3074
    %v3084 = vunpack.c.l.b16 %v42
    %v3085 = vunpack.c.l.b16 %v43
    %v3086 = vunpack.c.l.b16 %v44
    %v3087 = vunpack.c.l.b16 %v45
    %v3088 = vunpack.c.l.b16 %v46
    %v3089 = vunpack.c.l.b16 %v47
    %v3090 = vunpack.c.l.b16 %v48
    %v3091 = vunpack.c.l.b16 %v49
    %v3092 = vpack.c.b16 %v3085, %v3084
    %v3093 = vpack.c.b16 %v3087, %v3086
    %v3094 = vpack.c.b16 %v3089, %v3088
    %v3095 = vpack.c.b16 %v3091, %v3090
    %v3101 = vsel %vm523, %v3071, 0
    %3103 = vmatprep.subr.bf16.mxu0 0
    %3104 = vmatpush1.bf16.msra.mxu0 0
    %3105 = vmatprep.subr.bf16.mxu0 0
    %3106 = vmatpush1.bf16.msra.mxu0 0
    %3107 = vmatprep.subr.bf16.mxu0 0
    %3108 = vmatpush1.bf16.msra.mxu0 0
    %3109 = vmatprep.subr.bf16.mxu0 0
    %3110 = vmatpush1.bf16.msra.mxu0 0
    %3111 = vmatprep.subr.bf16.mxu0 0
    %3112 = vmatpush1.bf16.msra.mxu0 %v3095
    %3113 = vmatprep.subr.bf16.mxu0 0
    %3114 = vmatpush1.bf16.msra.mxu0 %v3094
    %3115 = vmatprep.subr.bf16.mxu0 0
    %3116 = vmatpush1.bf16.msra.mxu0 %v3093
    %3117 = vmatprep.subr.bf16.mxu0 0
    %3118 = vmatpush1.bf16.msra.mxu0 %v3092
    %3119 = vmatprep.subr.bf16.mxu0 0
    %3120 = vmatpush2.bf16.msra.mxu0 0
    %3121 = vmatprep.subr.bf16.mxu0 0
    %3122 = vmatpush2.bf16.msra.mxu0 0
    %3123 = vmatprep.subr.bf16.mxu0 0
    %3124 = vmatpush2.bf16.msra.mxu0 0
    %3125 = vmatprep.subr.bf16.mxu0 0
    %3126 = vmatpush2.bf16.msra.mxu0 0
    %3127 = vmatprep.subr.bf16.mxu0 0
    %3128 = vmatpush2.bf16.msra.mxu0 0
    %3129 = vmatprep.subr.bf16.mxu0 0
    %3130 = vmatpush2.bf16.msra.mxu0 0
    %3131 = vmatprep.subr.bf16.mxu0 0
    %3132 = vmatpush2.bf16.msra.mxu0 0
    %3133 = vmatprep.subr.bf16.mxu0 0
    %3134 = vmatpush2.bf16.msra.mxu0 0
    %3135 = vmatprep.mubr.bf16.mxu0 0
    %3136 = vmatmul.mubr.bf16.gmra.mxu0 %v3101
    %v3137 = vpop.f32.mrf.mxu0
    %v3138 = vadd.f32 %v3075, %v3137
    %v3139 = vpop.f32.mrf.mxu0
    %v3140 = vpop.f32.mrf.mxu0
    %v3141 = vadd.f32 %v3075, %v3140
    %v3142 = vpop.f32.mrf.mxu0
    %3143 = vdwg.mxu0
    %v3144 = vadd.f32 %v2968, %v3138
    %v3145 = vadd.f32 %v2969, %v3141
    %3146 = vst.msk [vmem:[#allocation3] sm:$0xff] %vm226, %v3144
    %3147 = vst.msk [vmem:[#allocation3 + $0x8] sm:$0xff] %vm226, %v3145
    // Predicated region
    $region30: #{graphormer_forward.1} parent=1 // pred_check
      _
    $region31: #{graphormer_forward.1} parent=1 // pred_check_branch
      %3149 = sbr.rel (0) target = $region33
    $region32: #{graphormer_forward.1} parent=1 // pred_region
      %s3151 = ssub.s32 256, 256
      %3152 = vsyncadd [#allocation4], %s3151
      %s3153 = sshll.u32 [#allocation3], 4
      %s3154 = int_to_ptr.vmem [resolvable:$true] %s3153
      %3159 = dma.vmem_to_hbm [thread:$0]  %s3154, 256, %s7, [#allocation4], 128, 128, 8
    $region33: #{graphormer_forward.1} parent=1 // pred_fallthru
      _
    // Predicated region
    $region34: #{graphormer_forward.1} parent=1 // pred_check
      _
    $region35: #{graphormer_forward.1} parent=1 // pred_check_branch
      %3161 = sbr.rel (0) target = $region37
    $region36: #{graphormer_forward.1} parent=1 // pred_region
      %3162 = dma.done [#allocation4], 256
    $region37: #{graphormer_forward.1} parent=1 // pred_fallthru
      _
    %3163 = vsyncpa [#allocation4], 1

</llo_original>
